<compile_context>
chip_gen: v7x
topology: tpu7x:2x2x1
jax: 0.10.0
libtpu: 0.0.40
codegen_flags: <defaults>
</compile_context>

<pallas_src>
import functools

import numpy as np
import jax
import jax.numpy as jnp
from jax import lax
from jax.experimental import pallas as pl
from jax.experimental.pallas import tpu as pltpu

BN_EPS = 1e-5
K = 3
DILATIONS = (1, 2, 3)
PAD = max(DILATIONS) * (K - 1) // 2  # 3 — one halo width covers every stage


def _widescope_kernel(x_ref, mask_ref, w_ref, bn_ref, o_ref, a1_ref, a2_ref,
                      *, N, Cin, C1, H, W, Wp, CB):
    """All VMEM slabs are (channels*CB, Lpad): CB (>=N, multiple of 8) sublane
    rows per channel (rows >= N are zero), flattened padded image on lanes."""
    Lpad = x_ref.shape[1]
    mask = mask_ref[...]                       # (CB, Lpad), 1.0 on real interior
    inv_m = 1.0 / float(N * H * W)

    def stage(src_ref, store, dil, cin, cout, w_off, bn_off):
        # Lane offsets of the 9 dilated taps within the flattened padded image.
        offs = [(kh - 1) * dil * Wp + (kw - 1) * dil
                for kh in range(K) for kw in range(K)]
        accs = [None] * cout
        for ci in range(cin):
            # One aligned, full-width load per input channel.
            chan = src_ref[ci * CB:(ci + 1) * CB, :]        # (CB, Lpad)
            for t, off in enumerate(offs):
                # tap[p] == chan[p + off]; circular wrap only lands in halo
                # positions (PAD == max dilation) which are never read.
                tap = chan if off == 0 else pltpu.roll(chan, shift=(-off) % Lpad, axis=1)
                for co in range(cout):
                    wv = w_ref[w_off + (co * cin + ci) * (K * K) + t]   # SMEM scalar
                    prod = tap * wv
                    accs[co] = prod if accs[co] is None else accs[co] + prod

        for co in range(cout):
            acc = accs[co]
            # Training-mode BN: two-pass mean / centered (biased) variance.
            mean = jnp.sum(acc * mask, keepdims=True) * inv_m
            cen = (acc - mean) * mask
            var = jnp.sum(cen * cen, keepdims=True) * inv_m
            scale = bn_ref[bn_off + co] * lax.rsqrt(var + BN_EPS)       # gamma, EUP rsqrt
            y = jnp.maximum(cen * scale + bn_ref[bn_off + cout + co], 0.0) * mask
            store(co, y)   # *mask re-zeros halo + pad rows -> next stage needs no init

    def store_a1(co, y):
        a1_ref[co * CB:(co + 1) * CB, :] = y

    def store_a2(co, y):
        a2_ref[co * CB:(co + 1) * CB, :] = y

    def store_o(co, y):
        o_ref[co * CB:(co + 1) * CB, :] = y

    w2_off = C1 * Cin * K * K
    w3_off = w2_off + C1 * C1 * K * K
    stage(x_ref,  store_a1, DILATIONS[0], Cin, C1, 0,      0)
    stage(a1_ref, store_a2, DILATIONS[1], C1,  C1, w2_off, 2 * C1)
    stage(a2_ref, store_o,  DILATIONS[2], C1,  C1, w3_off, 4 * C1)


@jax.jit
def widescope_conv2d_block(x_nchw, params):
    """x_nchw: (N, filters, H, W) float32; returns (N, out_channel, H, W)."""
    (w1, _b1, g1, be1,
     w2, _b2, g2, be2,
     w3, _b3, g3, be3) = params   # conv biases cancel exactly under training BN

    f32 = jnp.float32
    N, Cin, H, W = x_nchw.shape
    C1 = w1.shape[0]
    Hp, Wp = H + 2 * PAD, W + 2 * PAD
    Lpix = Hp * Wp
    Lpad = ((Lpix + 127) // 128) * 128          # lane-dense flattened image width
    CB = ((N + 7) // 8) * 8                     # sublane rows per channel (aligned)

    # Lane-dense, pre-padded input: rows = (channel-major, batch), cols = pixels.
    xp = jnp.pad(x_nchw.astype(f32), ((0, 0), (0, 0), (PAD, PAD), (PAD, PAD)))
    xp = jnp.transpose(xp, (1, 0, 2, 3)).reshape(Cin, N, Lpix)
    xp = jnp.pad(xp, ((0, 0), (0, CB - N), (0, Lpad - Lpix))).reshape(Cin * CB, Lpad)

    # Interior mask: 1.0 where (row < N) and the flat index is an interior pixel.
    idx = jnp.arange(Lpad)
    rr, cc = idx // Wp, idx % Wp
    col_ok = (idx < Lpix) & (rr >= PAD) & (rr < PAD + H) & (cc >= PAD) & (cc < PAD + W)
    row_ok = jnp.arange(CB) < N
    mask = (row_ok[:, None] & col_ok[None, :]).astype(f32)          # (CB, Lpad)

    # Packed tiny operands: all conv weights -> f32[144], all BN params -> f32[12].
    w_all = jnp.concatenate([w1.reshape(-1), w2.reshape(-1), w3.reshape(-1)]).astype(f32)
    bn_all = jnp.concatenate([g1, be1, g2, be2, g3, be3]).astype(f32)

    kernel = functools.partial(_widescope_kernel, N=N, Cin=Cin, C1=C1,
                               H=H, W=W, Wp=Wp, CB=CB)
    vmem = pl.BlockSpec(memory_space=pltpu.MemorySpace.VMEM)
    smem = pl.BlockSpec(memory_space=pltpu.MemorySpace.SMEM)

    out_flat = pl.pallas_call(
        kernel,
        out_shape=jax.ShapeDtypeStruct((C1 * CB, Lpad), f32),
        in_specs=[vmem, vmem, smem, smem],
        out_specs=vmem,
        scratch_shapes=[pltpu.VMEM((C1 * CB, Lpad), f32),   # padded act., stage 1
                        pltpu.VMEM((C1 * CB, Lpad), f32)],  # padded act., stage 2
    )(xp, mask, w_all, bn_all)

    # Layout plumbing back to NCHW (outside the kernel).
    out = out_flat.reshape(C1, CB, Lpad)[:, :N, :Lpix].reshape(C1, N, Hp, Wp)
    out = out[:, :, PAD:PAD + H, PAD:PAD + W]
    return jnp.transpose(out, (1, 0, 2, 3))


@jax.jit
def _reference(x, params):
    """Independent pure-JAX reference (lax.conv_general_dilated, NCHW),
    including conv biases and training-mode BN."""
    (w1, b1, g1, be1, w2, b2, g2, be2, w3, b3, g3, be3) = params

    def conv(x, w, b, d):
        dn = lax.conv_dimension_numbers(x.shape, w.shape, ("NCHW", "OIHW", "NCHW"))
        y = lax.conv_general_dilated(
            x, w, window_strides=(1, 1), padding=[(d, d), (d, d)],
            rhs_dilation=(d, d), dimension_numbers=dn)
        return y + b.reshape(1, -1, 1, 1)

    def bn_relu(y, g, be):
        mean = jnp.mean(y, axis=(0, 2, 3), keepdims=True)
        var = jnp.mean((y - mean) ** 2, axis=(0, 2, 3), keepdims=True)
        y = (y - mean) * lax.rsqrt(var + BN_EPS)
        y = y * g.reshape(1, -1, 1, 1) + be.reshape(1, -1, 1, 1)
        return jnp.maximum(y, 0.0)

    y = bn_relu(conv(x, w1, b1, 1), g1, be1)
    y = bn_relu(conv(y, w2, b2, 2), g2, be2)
    y = bn_relu(conv(y, w3, b3, 3), g3, be3)
    return y


if __name__ == "__main__":
    # Module config: filters=4, half_channel=True -> out_channel C1 = 2
    N, FILTERS, H, W = 2, 4, 16, 16
    HALF_CHANNEL = True
    C1 = FILTERS // 2 if HALF_CHANNEL else FILTERS

    key = jax.random.PRNGKey(0)
    ks = jax.random.split(key, 7)
    x = jax.random.normal(ks[0], (N, FILTERS, H, W), jnp.float32)

    def conv_params(k, cin, cout):
        k1, k2 = jax.random.split(k)
        w = 0.2 * jax.random.normal(k1, (cout, cin, K, K), jnp.float32)
        b = 0.1 * jax.random.normal(k2, (cout,), jnp.float32)
        return w, b

    def bn_params(k, c):
        k1, k2 = jax.random.split(k)
        g = 1.0 + 0.1 * jax.random.normal(k1, (c,), jnp.float32)
        be = 0.1 * jax.random.normal(k2, (c,), jnp.float32)
        return g, be

    w1, b1 = conv_params(ks[1], FILTERS, C1)
    g1, be1 = bn_params(ks[2], C1)
    w2, b2 = conv_params(ks[3], C1, C1)
    g2, be2 = bn_params(ks[4], C1)
    w3, b3 = conv_params(ks[5], C1, C1)
    g3, be3 = bn_params(ks[6], C1)

    params = (w1, b1, g1, be1, w2, b2, g2, be2, w3, b3, g3, be3)

    out = jax.block_until_ready(widescope_conv2d_block(x, params))
    ref = jax.block_until_ready(_reference(x, params))

    assert out.shape == (N, C1, H, W), out.shape
    np.testing.assert_allclose(np.asarray(out), np.asarray(ref), rtol=2e-4, atol=2e-4)

    print("KERNEL_OK")
</pallas_src>

<mosaic_0001>
module attributes {stable_mosaic.version = 11 : i64} {
  func.func @_widescope_kernel(%arg0: memref<32x512xf32, #tpu.memory_space<vmem>>, %arg1: memref<8x512xf32, #tpu.memory_space<vmem>>, %arg2: memref<144xf32, #tpu.memory_space<smem>>, %arg3: memref<12xf32, #tpu.memory_space<smem>>, %arg4: memref<16x512xf32, #tpu.memory_space<vmem>>, %arg5: memref<16x512xf32, #tpu.memory_space<vmem>>, %arg6: memref<16x512xf32, #tpu.memory_space<vmem>>) attributes {dimension_semantics = [], scalar_prefetch = 0 : i64, scratch_operands = 2 : i64, tpu.core_type = #tpu.core_type<tc>} {
    %c0 = arith.constant 0 : index
    %c0_0 = arith.constant 0 : index
    %0 = vector.load %arg1[%c0, %c0_0] : memref<8x512xf32, #tpu.memory_space<vmem>>, vector<8x512xf32>
    %c0_1 = arith.constant 0 : index
    %c0_2 = arith.constant 0 : index
    %1 = vector.load %arg0[%c0_1, %c0_2] : memref<32x512xf32, #tpu.memory_space<vmem>>, vector<8x512xf32>
    %c23_i32 = arith.constant 23 : i32
    %2 = tpu.dynamic_rotate %1 by %c23_i32 dim 1 : vector<8x512xf32>, i32 -> vector<8x512xf32>
    %c0_3 = arith.constant 0 : index
    %3 = memref.load %arg2[%c0_3] : memref<144xf32, #tpu.memory_space<smem>>
    %4 = vector.broadcast %3 : f32 to vector<8x512xf32>
    %5 = arith.mulf %2, %4 : vector<8x512xf32>
    %c36 = arith.constant 36 : index
    %6 = memref.load %arg2[%c36] : memref<144xf32, #tpu.memory_space<smem>>
    %7 = vector.broadcast %6 : f32 to vector<8x512xf32>
    %8 = arith.mulf %2, %7 : vector<8x512xf32>
    %c22_i32 = arith.constant 22 : i32
    %9 = tpu.dynamic_rotate %1 by %c22_i32 dim 1 : vector<8x512xf32>, i32 -> vector<8x512xf32>
    %c1 = arith.constant 1 : index
    %10 = memref.load %arg2[%c1] : memref<144xf32, #tpu.memory_space<smem>>
    %11 = vector.broadcast %10 : f32 to vector<8x512xf32>
    %12 = arith.mulf %9, %11 : vector<8x512xf32>
    %13 = arith.addf %5, %12 : vector<8x512xf32>
    %c37 = arith.constant 37 : index
    %14 = memref.load %arg2[%c37] : memref<144xf32, #tpu.memory_space<smem>>
    %15 = vector.broadcast %14 : f32 to vector<8x512xf32>
    %16 = arith.mulf %9, %15 : vector<8x512xf32>
    %17 = arith.addf %8, %16 : vector<8x512xf32>
    %c21_i32 = arith.constant 21 : i32
    %18 = tpu.dynamic_rotate %1 by %c21_i32 dim 1 : vector<8x512xf32>, i32 -> vector<8x512xf32>
    %c2 = arith.constant 2 : index
    %19 = memref.load %arg2[%c2] : memref<144xf32, #tpu.memory_space<smem>>
    %20 = vector.broadcast %19 : f32 to vector<8x512xf32>
    %21 = arith.mulf %18, %20 : vector<8x512xf32>
    %22 = arith.addf %13, %21 : vector<8x512xf32>
    %c38 = arith.constant 38 : index
    %23 = memref.load %arg2[%c38] : memref<144xf32, #tpu.memory_space<smem>>
    %24 = vector.broadcast %23 : f32 to vector<8x512xf32>
    %25 = arith.mulf %18, %24 : vector<8x512xf32>
    %26 = arith.addf %17, %25 : vector<8x512xf32>
    %c1_i32 = arith.constant 1 : i32
    %27 = tpu.dynamic_rotate %1 by %c1_i32 dim 1 : vector<8x512xf32>, i32 -> vector<8x512xf32>
    %c3 = arith.constant 3 : index
    %28 = memref.load %arg2[%c3] : memref<144xf32, #tpu.memory_space<smem>>
    %29 = vector.broadcast %28 : f32 to vector<8x512xf32>
    %30 = arith.mulf %27, %29 : vector<8x512xf32>
    %31 = arith.addf %22, %30 : vector<8x512xf32>
    %c39 = arith.constant 39 : index
    %32 = memref.load %arg2[%c39] : memref<144xf32, #tpu.memory_space<smem>>
    %33 = vector.broadcast %32 : f32 to vector<8x512xf32>
    %34 = arith.mulf %27, %33 : vector<8x512xf32>
    %35 = arith.addf %26, %34 : vector<8x512xf32>
    %c4 = arith.constant 4 : index
    %36 = memref.load %arg2[%c4] : memref<144xf32, #tpu.memory_space<smem>>
    %37 = vector.broadcast %36 : f32 to vector<8x512xf32>
    %38 = arith.mulf %1, %37 : vector<8x512xf32>
    %39 = arith.addf %31, %38 : vector<8x512xf32>
    %c40 = arith.constant 40 : index
    %40 = memref.load %arg2[%c40] : memref<144xf32, #tpu.memory_space<smem>>
    %41 = vector.broadcast %40 : f32 to vector<8x512xf32>
    %42 = arith.mulf %1, %41 : vector<8x512xf32>
    %43 = arith.addf %35, %42 : vector<8x512xf32>
    %c511_i32 = arith.constant 511 : i32
    %44 = tpu.dynamic_rotate %1 by %c511_i32 dim 1 : vector<8x512xf32>, i32 -> vector<8x512xf32>
    %c5 = arith.constant 5 : index
    %45 = memref.load %arg2[%c5] : memref<144xf32, #tpu.memory_space<smem>>
    %46 = vector.broadcast %45 : f32 to vector<8x512xf32>
    %47 = arith.mulf %44, %46 : vector<8x512xf32>
    %48 = arith.addf %39, %47 : vector<8x512xf32>
    %c41 = arith.constant 41 : index
    %49 = memref.load %arg2[%c41] : memref<144xf32, #tpu.memory_space<smem>>
    %50 = vector.broadcast %49 : f32 to vector<8x512xf32>
    %51 = arith.mulf %44, %50 : vector<8x512xf32>
    %52 = arith.addf %43, %51 : vector<8x512xf32>
    %c491_i32 = arith.constant 491 : i32
    %53 = tpu.dynamic_rotate %1 by %c491_i32 dim 1 : vector<8x512xf32>, i32 -> vector<8x512xf32>
    %c6 = arith.constant 6 : index
    %54 = memref.load %arg2[%c6] : memref<144xf32, #tpu.memory_space<smem>>
    %55 = vector.broadcast %54 : f32 to vector<8x512xf32>
    %56 = arith.mulf %53, %55 : vector<8x512xf32>
    %57 = arith.addf %48, %56 : vector<8x512xf32>
    %c42 = arith.constant 42 : index
    %58 = memref.load %arg2[%c42] : memref<144xf32, #tpu.memory_space<smem>>
    %59 = vector.broadcast %58 : f32 to vector<8x512xf32>
    %60 = arith.mulf %53, %59 : vector<8x512xf32>
    %61 = arith.addf %52, %60 : vector<8x512xf32>
    %c490_i32 = arith.constant 490 : i32
    %62 = tpu.dynamic_rotate %1 by %c490_i32 dim 1 : vector<8x512xf32>, i32 -> vector<8x512xf32>
    %c7 = arith.constant 7 : index
    %63 = memref.load %arg2[%c7] : memref<144xf32, #tpu.memory_space<smem>>
    %64 = vector.broadcast %63 : f32 to vector<8x512xf32>
    %65 = arith.mulf %62, %64 : vector<8x512xf32>
    %66 = arith.addf %57, %65 : vector<8x512xf32>
    %c43 = arith.constant 43 : index
    %67 = memref.load %arg2[%c43] : memref<144xf32, #tpu.memory_space<smem>>
    %68 = vector.broadcast %67 : f32 to vector<8x512xf32>
    %69 = arith.mulf %62, %68 : vector<8x512xf32>
    %70 = arith.addf %61, %69 : vector<8x512xf32>
    %c489_i32 = arith.constant 489 : i32
    %71 = tpu.dynamic_rotate %1 by %c489_i32 dim 1 : vector<8x512xf32>, i32 -> vector<8x512xf32>
    %c8 = arith.constant 8 : index
    %72 = memref.load %arg2[%c8] : memref<144xf32, #tpu.memory_space<smem>>
    %73 = vector.broadcast %72 : f32 to vector<8x512xf32>
    %74 = arith.mulf %71, %73 : vector<8x512xf32>
    %75 = arith.addf %66, %74 : vector<8x512xf32>
    %c44 = arith.constant 44 : index
    %76 = memref.load %arg2[%c44] : memref<144xf32, #tpu.memory_space<smem>>
    %77 = vector.broadcast %76 : f32 to vector<8x512xf32>
    %78 = arith.mulf %71, %77 : vector<8x512xf32>
    %79 = arith.addf %70, %78 : vector<8x512xf32>
    %c8_4 = arith.constant 8 : index
    %c0_5 = arith.constant 0 : index
    %80 = vector.load %arg0[%c8_4, %c0_5] : memref<32x512xf32, #tpu.memory_space<vmem>>, vector<8x512xf32>
    %c23_i32_6 = arith.constant 23 : i32
    %81 = tpu.dynamic_rotate %80 by %c23_i32_6 dim 1 : vector<8x512xf32>, i32 -> vector<8x512xf32>
    %c9 = arith.constant 9 : index
    %82 = memref.load %arg2[%c9] : memref<144xf32, #tpu.memory_space<smem>>
    %83 = vector.broadcast %82 : f32 to vector<8x512xf32>
    %84 = arith.mulf %81, %83 : vector<8x512xf32>
    %85 = arith.addf %75, %84 : vector<8x512xf32>
    %c45 = arith.constant 45 : index
    %86 = memref.load %arg2[%c45] : memref<144xf32, #tpu.memory_space<smem>>
    %87 = vector.broadcast %86 : f32 to vector<8x512xf32>
    %88 = arith.mulf %81, %87 : vector<8x512xf32>
    %89 = arith.addf %79, %88 : vector<8x512xf32>
    %c22_i32_7 = arith.constant 22 : i32
    %90 = tpu.dynamic_rotate %80 by %c22_i32_7 dim 1 : vector<8x512xf32>, i32 -> vector<8x512xf32>
    %c10 = arith.constant 10 : index
    %91 = memref.load %arg2[%c10] : memref<144xf32, #tpu.memory_space<smem>>
    %92 = vector.broadcast %91 : f32 to vector<8x512xf32>
    %93 = arith.mulf %90, %92 : vector<8x512xf32>
    %94 = arith.addf %85, %93 : vector<8x512xf32>
    %c46 = arith.constant 46 : index
    %95 = memref.load %arg2[%c46] : memref<144xf32, #tpu.memory_space<smem>>
    %96 = vector.broadcast %95 : f32 to vector<8x512xf32>
    %97 = arith.mulf %90, %96 : vector<8x512xf32>
    %98 = arith.addf %89, %97 : vector<8x512xf32>
    %c21_i32_8 = arith.constant 21 : i32
    %99 = tpu.dynamic_rotate %80 by %c21_i32_8 dim 1 : vector<8x512xf32>, i32 -> vector<8x512xf32>
    %c11 = arith.constant 11 : index
    %100 = memref.load %arg2[%c11] : memref<144xf32, #tpu.memory_space<smem>>
    %101 = vector.broadcast %100 : f32 to vector<8x512xf32>
    %102 = arith.mulf %99, %101 : vector<8x512xf32>
    %103 = arith.addf %94, %102 : vector<8x512xf32>
    %c47 = arith.constant 47 : index
    %104 = memref.load %arg2[%c47] : memref<144xf32, #tpu.memory_space<smem>>
    %105 = vector.broadcast %104 : f32 to vector<8x512xf32>
    %106 = arith.mulf %99, %105 : vector<8x512xf32>
    %107 = arith.addf %98, %106 : vector<8x512xf32>
    %c1_i32_9 = arith.constant 1 : i32
    %108 = tpu.dynamic_rotate %80 by %c1_i32_9 dim 1 : vector<8x512xf32>, i32 -> vector<8x512xf32>
    %c12 = arith.constant 12 : index
    %109 = memref.load %arg2[%c12] : memref<144xf32, #tpu.memory_space<smem>>
    %110 = vector.broadcast %109 : f32 to vector<8x512xf32>
    %111 = arith.mulf %108, %110 : vector<8x512xf32>
    %112 = arith.addf %103, %111 : vector<8x512xf32>
    %c48 = arith.constant 48 : index
    %113 = memref.load %arg2[%c48] : memref<144xf32, #tpu.memory_space<smem>>
    %114 = vector.broadcast %113 : f32 to vector<8x512xf32>
    %115 = arith.mulf %108, %114 : vector<8x512xf32>
    %116 = arith.addf %107, %115 : vector<8x512xf32>
    %c13 = arith.constant 13 : index
    %117 = memref.load %arg2[%c13] : memref<144xf32, #tpu.memory_space<smem>>
    %118 = vector.broadcast %117 : f32 to vector<8x512xf32>
    %119 = arith.mulf %80, %118 : vector<8x512xf32>
    %120 = arith.addf %112, %119 : vector<8x512xf32>
    %c49 = arith.constant 49 : index
    %121 = memref.load %arg2[%c49] : memref<144xf32, #tpu.memory_space<smem>>
    %122 = vector.broadcast %121 : f32 to vector<8x512xf32>
    %123 = arith.mulf %80, %122 : vector<8x512xf32>
    %124 = arith.addf %116, %123 : vector<8x512xf32>
    %c511_i32_10 = arith.constant 511 : i32
    %125 = tpu.dynamic_rotate %80 by %c511_i32_10 dim 1 : vector<8x512xf32>, i32 -> vector<8x512xf32>
    %c14 = arith.constant 14 : index
    %126 = memref.load %arg2[%c14] : memref<144xf32, #tpu.memory_space<smem>>
    %127 = vector.broadcast %126 : f32 to vector<8x512xf32>
    %128 = arith.mulf %125, %127 : vector<8x512xf32>
    %129 = arith.addf %120, %128 : vector<8x512xf32>
    %c50 = arith.constant 50 : index
    %130 = memref.load %arg2[%c50] : memref<144xf32, #tpu.memory_space<smem>>
    %131 = vector.broadcast %130 : f32 to vector<8x512xf32>
    %132 = arith.mulf %125, %131 : vector<8x512xf32>
    %133 = arith.addf %124, %132 : vector<8x512xf32>
    %c491_i32_11 = arith.constant 491 : i32
    %134 = tpu.dynamic_rotate %80 by %c491_i32_11 dim 1 : vector<8x512xf32>, i32 -> vector<8x512xf32>
    %c15 = arith.constant 15 : index
    %135 = memref.load %arg2[%c15] : memref<144xf32, #tpu.memory_space<smem>>
    %136 = vector.broadcast %135 : f32 to vector<8x512xf32>
    %137 = arith.mulf %134, %136 : vector<8x512xf32>
    %138 = arith.addf %129, %137 : vector<8x512xf32>
    %c51 = arith.constant 51 : index
    %139 = memref.load %arg2[%c51] : memref<144xf32, #tpu.memory_space<smem>>
    %140 = vector.broadcast %139 : f32 to vector<8x512xf32>
    %141 = arith.mulf %134, %140 : vector<8x512xf32>
    %142 = arith.addf %133, %141 : vector<8x512xf32>
    %c490_i32_12 = arith.constant 490 : i32
    %143 = tpu.dynamic_rotate %80 by %c490_i32_12 dim 1 : vector<8x512xf32>, i32 -> vector<8x512xf32>
    %c16 = arith.constant 16 : index
    %144 = memref.load %arg2[%c16] : memref<144xf32, #tpu.memory_space<smem>>
    %145 = vector.broadcast %144 : f32 to vector<8x512xf32>
    %146 = arith.mulf %143, %145 : vector<8x512xf32>
    %147 = arith.addf %138, %146 : vector<8x512xf32>
    %c52 = arith.constant 52 : index
    %148 = memref.load %arg2[%c52] : memref<144xf32, #tpu.memory_space<smem>>
    %149 = vector.broadcast %148 : f32 to vector<8x512xf32>
    %150 = arith.mulf %143, %149 : vector<8x512xf32>
    %151 = arith.addf %142, %150 : vector<8x512xf32>
    %c489_i32_13 = arith.constant 489 : i32
    %152 = tpu.dynamic_rotate %80 by %c489_i32_13 dim 1 : vector<8x512xf32>, i32 -> vector<8x512xf32>
    %c17 = arith.constant 17 : index
    %153 = memref.load %arg2[%c17] : memref<144xf32, #tpu.memory_space<smem>>
    %154 = vector.broadcast %153 : f32 to vector<8x512xf32>
    %155 = arith.mulf %152, %154 : vector<8x512xf32>
    %156 = arith.addf %147, %155 : vector<8x512xf32>
    %c53 = arith.constant 53 : index
    %157 = memref.load %arg2[%c53] : memref<144xf32, #tpu.memory_space<smem>>
    %158 = vector.broadcast %157 : f32 to vector<8x512xf32>
    %159 = arith.mulf %152, %158 : vector<8x512xf32>
    %160 = arith.addf %151, %159 : vector<8x512xf32>
    %c16_14 = arith.constant 16 : index
    %c0_15 = arith.constant 0 : index
    %161 = vector.load %arg0[%c16_14, %c0_15] : memref<32x512xf32, #tpu.memory_space<vmem>>, vector<8x512xf32>
    %c23_i32_16 = arith.constant 23 : i32
    %162 = tpu.dynamic_rotate %161 by %c23_i32_16 dim 1 : vector<8x512xf32>, i32 -> vector<8x512xf32>
    %c18 = arith.constant 18 : index
    %163 = memref.load %arg2[%c18] : memref<144xf32, #tpu.memory_space<smem>>
    %164 = vector.broadcast %163 : f32 to vector<8x512xf32>
    %165 = arith.mulf %162, %164 : vector<8x512xf32>
    %166 = arith.addf %156, %165 : vector<8x512xf32>
    %c54 = arith.constant 54 : index
    %167 = memref.load %arg2[%c54] : memref<144xf32, #tpu.memory_space<smem>>
    %168 = vector.broadcast %167 : f32 to vector<8x512xf32>
    %169 = arith.mulf %162, %168 : vector<8x512xf32>
    %170 = arith.addf %160, %169 : vector<8x512xf32>
    %c22_i32_17 = arith.constant 22 : i32
    %171 = tpu.dynamic_rotate %161 by %c22_i32_17 dim 1 : vector<8x512xf32>, i32 -> vector<8x512xf32>
    %c19 = arith.constant 19 : index
    %172 = memref.load %arg2[%c19] : memref<144xf32, #tpu.memory_space<smem>>
    %173 = vector.broadcast %172 : f32 to vector<8x512xf32>
    %174 = arith.mulf %171, %173 : vector<8x512xf32>
    %175 = arith.addf %166, %174 : vector<8x512xf32>
    %c55 = arith.constant 55 : index
    %176 = memref.load %arg2[%c55] : memref<144xf32, #tpu.memory_space<smem>>
    %177 = vector.broadcast %176 : f32 to vector<8x512xf32>
    %178 = arith.mulf %171, %177 : vector<8x512xf32>
    %179 = arith.addf %170, %178 : vector<8x512xf32>
    %c21_i32_18 = arith.constant 21 : i32
    %180 = tpu.dynamic_rotate %161 by %c21_i32_18 dim 1 : vector<8x512xf32>, i32 -> vector<8x512xf32>
    %c20 = arith.constant 20 : index
    %181 = memref.load %arg2[%c20] : memref<144xf32, #tpu.memory_space<smem>>
    %182 = vector.broadcast %181 : f32 to vector<8x512xf32>
    %183 = arith.mulf %180, %182 : vector<8x512xf32>
    %184 = arith.addf %175, %183 : vector<8x512xf32>
    %c56 = arith.constant 56 : index
    %185 = memref.load %arg2[%c56] : memref<144xf32, #tpu.memory_space<smem>>
    %186 = vector.broadcast %185 : f32 to vector<8x512xf32>
    %187 = arith.mulf %180, %186 : vector<8x512xf32>
    %188 = arith.addf %179, %187 : vector<8x512xf32>
    %c1_i32_19 = arith.constant 1 : i32
    %189 = tpu.dynamic_rotate %161 by %c1_i32_19 dim 1 : vector<8x512xf32>, i32 -> vector<8x512xf32>
    %c21 = arith.constant 21 : index
    %190 = memref.load %arg2[%c21] : memref<144xf32, #tpu.memory_space<smem>>
    %191 = vector.broadcast %190 : f32 to vector<8x512xf32>
    %192 = arith.mulf %189, %191 : vector<8x512xf32>
    %193 = arith.addf %184, %192 : vector<8x512xf32>
    %c57 = arith.constant 57 : index
    %194 = memref.load %arg2[%c57] : memref<144xf32, #tpu.memory_space<smem>>
    %195 = vector.broadcast %194 : f32 to vector<8x512xf32>
    %196 = arith.mulf %189, %195 : vector<8x512xf32>
    %197 = arith.addf %188, %196 : vector<8x512xf32>
    %c22 = arith.constant 22 : index
    %198 = memref.load %arg2[%c22] : memref<144xf32, #tpu.memory_space<smem>>
    %199 = vector.broadcast %198 : f32 to vector<8x512xf32>
    %200 = arith.mulf %161, %199 : vector<8x512xf32>
    %201 = arith.addf %193, %200 : vector<8x512xf32>
    %c58 = arith.constant 58 : index
    %202 = memref.load %arg2[%c58] : memref<144xf32, #tpu.memory_space<smem>>
    %203 = vector.broadcast %202 : f32 to vector<8x512xf32>
    %204 = arith.mulf %161, %203 : vector<8x512xf32>
    %205 = arith.addf %197, %204 : vector<8x512xf32>
    %c511_i32_20 = arith.constant 511 : i32
    %206 = tpu.dynamic_rotate %161 by %c511_i32_20 dim 1 : vector<8x512xf32>, i32 -> vector<8x512xf32>
    %c23 = arith.constant 23 : index
    %207 = memref.load %arg2[%c23] : memref<144xf32, #tpu.memory_space<smem>>
    %208 = vector.broadcast %207 : f32 to vector<8x512xf32>
    %209 = arith.mulf %206, %208 : vector<8x512xf32>
    %210 = arith.addf %201, %209 : vector<8x512xf32>
    %c59 = arith.constant 59 : index
    %211 = memref.load %arg2[%c59] : memref<144xf32, #tpu.memory_space<smem>>
    %212 = vector.broadcast %211 : f32 to vector<8x512xf32>
    %213 = arith.mulf %206, %212 : vector<8x512xf32>
    %214 = arith.addf %205, %213 : vector<8x512xf32>
    %c491_i32_21 = arith.constant 491 : i32
    %215 = tpu.dynamic_rotate %161 by %c491_i32_21 dim 1 : vector<8x512xf32>, i32 -> vector<8x512xf32>
    %c24 = arith.constant 24 : index
    %216 = memref.load %arg2[%c24] : memref<144xf32, #tpu.memory_space<smem>>
    %217 = vector.broadcast %216 : f32 to vector<8x512xf32>
    %218 = arith.mulf %215, %217 : vector<8x512xf32>
    %219 = arith.addf %210, %218 : vector<8x512xf32>
    %c60 = arith.constant 60 : index
    %220 = memref.load %arg2[%c60] : memref<144xf32, #tpu.memory_space<smem>>
    %221 = vector.broadcast %220 : f32 to vector<8x512xf32>
    %222 = arith.mulf %215, %221 : vector<8x512xf32>
    %223 = arith.addf %214, %222 : vector<8x512xf32>
    %c490_i32_22 = arith.constant 490 : i32
    %224 = tpu.dynamic_rotate %161 by %c490_i32_22 dim 1 : vector<8x512xf32>, i32 -> vector<8x512xf32>
    %c25 = arith.constant 25 : index
    %225 = memref.load %arg2[%c25] : memref<144xf32, #tpu.memory_space<smem>>
    %226 = vector.broadcast %225 : f32 to vector<8x512xf32>
    %227 = arith.mulf %224, %226 : vector<8x512xf32>
    %228 = arith.addf %219, %227 : vector<8x512xf32>
    %c61 = arith.constant 61 : index
    %229 = memref.load %arg2[%c61] : memref<144xf32, #tpu.memory_space<smem>>
    %230 = vector.broadcast %229 : f32 to vector<8x512xf32>
    %231 = arith.mulf %224, %230 : vector<8x512xf32>
    %232 = arith.addf %223, %231 : vector<8x512xf32>
    %c489_i32_23 = arith.constant 489 : i32
    %233 = tpu.dynamic_rotate %161 by %c489_i32_23 dim 1 : vector<8x512xf32>, i32 -> vector<8x512xf32>
    %c26 = arith.constant 26 : index
    %234 = memref.load %arg2[%c26] : memref<144xf32, #tpu.memory_space<smem>>
    %235 = vector.broadcast %234 : f32 to vector<8x512xf32>
    %236 = arith.mulf %233, %235 : vector<8x512xf32>
    %237 = arith.addf %228, %236 : vector<8x512xf32>
    %c62 = arith.constant 62 : index
    %238 = memref.load %arg2[%c62] : memref<144xf32, #tpu.memory_space<smem>>
    %239 = vector.broadcast %238 : f32 to vector<8x512xf32>
    %240 = arith.mulf %233, %239 : vector<8x512xf32>
    %241 = arith.addf %232, %240 : vector<8x512xf32>
    %c24_24 = arith.constant 24 : index
    %c0_25 = arith.constant 0 : index
    %242 = vector.load %arg0[%c24_24, %c0_25] : memref<32x512xf32, #tpu.memory_space<vmem>>, vector<8x512xf32>
    %c23_i32_26 = arith.constant 23 : i32
    %243 = tpu.dynamic_rotate %242 by %c23_i32_26 dim 1 : vector<8x512xf32>, i32 -> vector<8x512xf32>
    %c27 = arith.constant 27 : index
    %244 = memref.load %arg2[%c27] : memref<144xf32, #tpu.memory_space<smem>>
    %245 = vector.broadcast %244 : f32 to vector<8x512xf32>
    %246 = arith.mulf %243, %245 : vector<8x512xf32>
    %247 = arith.addf %237, %246 : vector<8x512xf32>
    %c63 = arith.constant 63 : index
    %248 = memref.load %arg2[%c63] : memref<144xf32, #tpu.memory_space<smem>>
    %249 = vector.broadcast %248 : f32 to vector<8x512xf32>
    %250 = arith.mulf %243, %249 : vector<8x512xf32>
    %251 = arith.addf %241, %250 : vector<8x512xf32>
    %c22_i32_27 = arith.constant 22 : i32
    %252 = tpu.dynamic_rotate %242 by %c22_i32_27 dim 1 : vector<8x512xf32>, i32 -> vector<8x512xf32>
    %c28 = arith.constant 28 : index
    %253 = memref.load %arg2[%c28] : memref<144xf32, #tpu.memory_space<smem>>
    %254 = vector.broadcast %253 : f32 to vector<8x512xf32>
    %255 = arith.mulf %252, %254 : vector<8x512xf32>
    %256 = arith.addf %247, %255 : vector<8x512xf32>
    %c64 = arith.constant 64 : index
    %257 = memref.load %arg2[%c64] : memref<144xf32, #tpu.memory_space<smem>>
    %258 = vector.broadcast %257 : f32 to vector<8x512xf32>
    %259 = arith.mulf %252, %258 : vector<8x512xf32>
    %260 = arith.addf %251, %259 : vector<8x512xf32>
    %c21_i32_28 = arith.constant 21 : i32
    %261 = tpu.dynamic_rotate %242 by %c21_i32_28 dim 1 : vector<8x512xf32>, i32 -> vector<8x512xf32>
    %c29 = arith.constant 29 : index
    %262 = memref.load %arg2[%c29] : memref<144xf32, #tpu.memory_space<smem>>
    %263 = vector.broadcast %262 : f32 to vector<8x512xf32>
    %264 = arith.mulf %261, %263 : vector<8x512xf32>
    %265 = arith.addf %256, %264 : vector<8x512xf32>
    %c65 = arith.constant 65 : index
    %266 = memref.load %arg2[%c65] : memref<144xf32, #tpu.memory_space<smem>>
    %267 = vector.broadcast %266 : f32 to vector<8x512xf32>
    %268 = arith.mulf %261, %267 : vector<8x512xf32>
    %269 = arith.addf %260, %268 : vector<8x512xf32>
    %c1_i32_29 = arith.constant 1 : i32
    %270 = tpu.dynamic_rotate %242 by %c1_i32_29 dim 1 : vector<8x512xf32>, i32 -> vector<8x512xf32>
    %c30 = arith.constant 30 : index
    %271 = memref.load %arg2[%c30] : memref<144xf32, #tpu.memory_space<smem>>
    %272 = vector.broadcast %271 : f32 to vector<8x512xf32>
    %273 = arith.mulf %270, %272 : vector<8x512xf32>
    %274 = arith.addf %265, %273 : vector<8x512xf32>
    %c66 = arith.constant 66 : index
    %275 = memref.load %arg2[%c66] : memref<144xf32, #tpu.memory_space<smem>>
    %276 = vector.broadcast %275 : f32 to vector<8x512xf32>
    %277 = arith.mulf %270, %276 : vector<8x512xf32>
    %278 = arith.addf %269, %277 : vector<8x512xf32>
    %c31 = arith.constant 31 : index
    %279 = memref.load %arg2[%c31] : memref<144xf32, #tpu.memory_space<smem>>
    %280 = vector.broadcast %279 : f32 to vector<8x512xf32>
    %281 = arith.mulf %242, %280 : vector<8x512xf32>
    %282 = arith.addf %274, %281 : vector<8x512xf32>
    %c67 = arith.constant 67 : index
    %283 = memref.load %arg2[%c67] : memref<144xf32, #tpu.memory_space<smem>>
    %284 = vector.broadcast %283 : f32 to vector<8x512xf32>
    %285 = arith.mulf %242, %284 : vector<8x512xf32>
    %286 = arith.addf %278, %285 : vector<8x512xf32>
    %c511_i32_30 = arith.constant 511 : i32
    %287 = tpu.dynamic_rotate %242 by %c511_i32_30 dim 1 : vector<8x512xf32>, i32 -> vector<8x512xf32>
    %c32 = arith.constant 32 : index
    %288 = memref.load %arg2[%c32] : memref<144xf32, #tpu.memory_space<smem>>
    %289 = vector.broadcast %288 : f32 to vector<8x512xf32>
    %290 = arith.mulf %287, %289 : vector<8x512xf32>
    %291 = arith.addf %282, %290 : vector<8x512xf32>
    %c68 = arith.constant 68 : index
    %292 = memref.load %arg2[%c68] : memref<144xf32, #tpu.memory_space<smem>>
    %293 = vector.broadcast %292 : f32 to vector<8x512xf32>
    %294 = arith.mulf %287, %293 : vector<8x512xf32>
    %295 = arith.addf %286, %294 : vector<8x512xf32>
    %c491_i32_31 = arith.constant 491 : i32
    %296 = tpu.dynamic_rotate %242 by %c491_i32_31 dim 1 : vector<8x512xf32>, i32 -> vector<8x512xf32>
    %c33 = arith.constant 33 : index
    %297 = memref.load %arg2[%c33] : memref<144xf32, #tpu.memory_space<smem>>
    %298 = vector.broadcast %297 : f32 to vector<8x512xf32>
    %299 = arith.mulf %296, %298 : vector<8x512xf32>
    %300 = arith.addf %291, %299 : vector<8x512xf32>
    %c69 = arith.constant 69 : index
    %301 = memref.load %arg2[%c69] : memref<144xf32, #tpu.memory_space<smem>>
    %302 = vector.broadcast %301 : f32 to vector<8x512xf32>
    %303 = arith.mulf %296, %302 : vector<8x512xf32>
    %304 = arith.addf %295, %303 : vector<8x512xf32>
    %c490_i32_32 = arith.constant 490 : i32
    %305 = tpu.dynamic_rotate %242 by %c490_i32_32 dim 1 : vector<8x512xf32>, i32 -> vector<8x512xf32>
    %c34 = arith.constant 34 : index
    %306 = memref.load %arg2[%c34] : memref<144xf32, #tpu.memory_space<smem>>
    %307 = vector.broadcast %306 : f32 to vector<8x512xf32>
    %308 = arith.mulf %305, %307 : vector<8x512xf32>
    %309 = arith.addf %300, %308 : vector<8x512xf32>
    %c70 = arith.constant 70 : index
    %310 = memref.load %arg2[%c70] : memref<144xf32, #tpu.memory_space<smem>>
    %311 = vector.broadcast %310 : f32 to vector<8x512xf32>
    %312 = arith.mulf %305, %311 : vector<8x512xf32>
    %313 = arith.addf %304, %312 : vector<8x512xf32>
    %c489_i32_33 = arith.constant 489 : i32
    %314 = tpu.dynamic_rotate %242 by %c489_i32_33 dim 1 : vector<8x512xf32>, i32 -> vector<8x512xf32>
    %c35 = arith.constant 35 : index
    %315 = memref.load %arg2[%c35] : memref<144xf32, #tpu.memory_space<smem>>
    %316 = vector.broadcast %315 : f32 to vector<8x512xf32>
    %317 = arith.mulf %314, %316 : vector<8x512xf32>
    %318 = arith.addf %309, %317 : vector<8x512xf32>
    %c71 = arith.constant 71 : index
    %319 = memref.load %arg2[%c71] : memref<144xf32, #tpu.memory_space<smem>>
    %320 = vector.broadcast %319 : f32 to vector<8x512xf32>
    %321 = arith.mulf %314, %320 : vector<8x512xf32>
    %322 = arith.addf %313, %321 : vector<8x512xf32>
    %323 = arith.mulf %318, %0 : vector<8x512xf32>
    %324 = vector.shape_cast %323 : vector<8x512xf32> to vector<1x8x512xf32>
    %cst = arith.constant dense<0.000000e+00> : vector<1xf32>
    %325 = vector.multi_reduction <add>, %324, %cst [1, 2] : vector<1x8x512xf32> to vector<1xf32>
    %326 = vector.shape_cast %325 : vector<1xf32> to vector<1x1x1xf32>
    %327 = vector.extract %326[0, 0, 0] : f32 from vector<1x1x1xf32>
    %328 = vector.broadcast %327 : f32 to vector<1x1xf32>
    %cst_34 = arith.constant 0.001953125 : f32
    %329 = vector.broadcast %cst_34 : f32 to vector<1x1xf32>
    %330 = arith.mulf %328, %329 : vector<1x1xf32>
    %331 = vector.broadcast %330 : vector<1x1xf32> to vector<8x512xf32>
    %332 = arith.subf %318, %331 : vector<8x512xf32>
    %333 = arith.mulf %332, %0 : vector<8x512xf32>
    %334 = arith.mulf %333, %333 : vector<8x512xf32>
    %335 = vector.shape_cast %334 : vector<8x512xf32> to vector<1x8x512xf32>
    %cst_35 = arith.constant dense<0.000000e+00> : vector<1xf32>
    %336 = vector.multi_reduction <add>, %335, %cst_35 [1, 2] : vector<1x8x512xf32> to vector<1xf32>
    %337 = vector.shape_cast %336 : vector<1xf32> to vector<1x1x1xf32>
    %338 = vector.extract %337[0, 0, 0] : f32 from vector<1x1x1xf32>
    %339 = vector.broadcast %338 : f32 to vector<1x1xf32>
    %cst_36 = arith.constant 0.001953125 : f32
    %340 = vector.broadcast %cst_36 : f32 to vector<1x1xf32>
    %341 = arith.mulf %339, %340 : vector<1x1xf32>
    %c0_37 = arith.constant 0 : index
    %342 = memref.load %arg3[%c0_37] : memref<12xf32, #tpu.memory_space<smem>>
    %cst_38 = arith.constant 9.99999974E-6 : f32
    %343 = vector.broadcast %cst_38 : f32 to vector<1x1xf32>
    %344 = arith.addf %341, %343 : vector<1x1xf32>
    %345 = math.rsqrt %344 : vector<1x1xf32>
    %346 = vector.broadcast %342 : f32 to vector<1x1xf32>
    %347 = arith.mulf %346, %345 : vector<1x1xf32>
    %348 = vector.broadcast %347 : vector<1x1xf32> to vector<8x512xf32>
    %349 = arith.mulf %333, %348 : vector<8x512xf32>
    %c2_39 = arith.constant 2 : index
    %350 = memref.load %arg3[%c2_39] : memref<12xf32, #tpu.memory_space<smem>>
    %351 = vector.broadcast %350 : f32 to vector<8x512xf32>
    %352 = arith.addf %349, %351 : vector<8x512xf32>
    %cst_40 = arith.constant 0.000000e+00 : f32
    %353 = vector.broadcast %cst_40 : f32 to vector<8x512xf32>
    %354 = arith.maximumf %352, %353 : vector<8x512xf32>
    %355 = arith.mulf %354, %0 : vector<8x512xf32>
    %c0_41 = arith.constant 0 : index
    %c0_42 = arith.constant 0 : index
    %356 = vector.load %arg5[%c0_41, %c0_42] : memref<16x512xf32, #tpu.memory_space<vmem>>, vector<8x512xf32>
    tpu.vector_store %arg5[%c0_41, %c0_42], %355 {strides = array<i32>} : memref<16x512xf32, #tpu.memory_space<vmem>>, vector<8x512xf32>,
    %357 = arith.mulf %322, %0 : vector<8x512xf32>
    %358 = vector.shape_cast %357 : vector<8x512xf32> to vector<1x8x512xf32>
    %cst_43 = arith.constant dense<0.000000e+00> : vector<1xf32>
    %359 = vector.multi_reduction <add>, %358, %cst_43 [1, 2] : vector<1x8x512xf32> to vector<1xf32>
    %360 = vector.shape_cast %359 : vector<1xf32> to vector<1x1x1xf32>
    %361 = vector.extract %360[0, 0, 0] : f32 from vector<1x1x1xf32>
    %362 = vector.broadcast %361 : f32 to vector<1x1xf32>
    %cst_44 = arith.constant 0.001953125 : f32
    %363 = vector.broadcast %cst_44 : f32 to vector<1x1xf32>
    %364 = arith.mulf %362, %363 : vector<1x1xf32>
    %365 = vector.broadcast %364 : vector<1x1xf32> to vector<8x512xf32>
    %366 = arith.subf %322, %365 : vector<8x512xf32>
    %367 = arith.mulf %366, %0 : vector<8x512xf32>
    %368 = arith.mulf %367, %367 : vector<8x512xf32>
    %369 = vector.shape_cast %368 : vector<8x512xf32> to vector<1x8x512xf32>
    %cst_45 = arith.constant dense<0.000000e+00> : vector<1xf32>
    %370 = vector.multi_reduction <add>, %369, %cst_45 [1, 2] : vector<1x8x512xf32> to vector<1xf32>
    %371 = vector.shape_cast %370 : vector<1xf32> to vector<1x1x1xf32>
    %372 = vector.extract %371[0, 0, 0] : f32 from vector<1x1x1xf32>
    %373 = vector.broadcast %372 : f32 to vector<1x1xf32>
    %cst_46 = arith.constant 0.001953125 : f32
    %374 = vector.broadcast %cst_46 : f32 to vector<1x1xf32>
    %375 = arith.mulf %373, %374 : vector<1x1xf32>
    %c1_47 = arith.constant 1 : index
    %376 = memref.load %arg3[%c1_47] : memref<12xf32, #tpu.memory_space<smem>>
    %cst_48 = arith.constant 9.99999974E-6 : f32
    %377 = vector.broadcast %cst_48 : f32 to vector<1x1xf32>
    %378 = arith.addf %375, %377 : vector<1x1xf32>
    %379 = math.rsqrt %378 : vector<1x1xf32>
    %380 = vector.broadcast %376 : f32 to vector<1x1xf32>
    %381 = arith.mulf %380, %379 : vector<1x1xf32>
    %382 = vector.broadcast %381 : vector<1x1xf32> to vector<8x512xf32>
    %383 = arith.mulf %367, %382 : vector<8x512xf32>
    %c3_49 = arith.constant 3 : index
    %384 = memref.load %arg3[%c3_49] : memref<12xf32, #tpu.memory_space<smem>>
    %385 = vector.broadcast %384 : f32 to vector<8x512xf32>
    %386 = arith.addf %383, %385 : vector<8x512xf32>
    %cst_50 = arith.constant 0.000000e+00 : f32
    %387 = vector.broadcast %cst_50 : f32 to vector<8x512xf32>
    %388 = arith.maximumf %386, %387 : vector<8x512xf32>
    %389 = arith.mulf %388, %0 : vector<8x512xf32>
    %c8_51 = arith.constant 8 : index
    %c0_52 = arith.constant 0 : index
    %390 = vector.load %arg5[%c8_51, %c0_52] : memref<16x512xf32, #tpu.memory_space<vmem>>, vector<8x512xf32>
    tpu.vector_store %arg5[%c8_51, %c0_52], %389 {strides = array<i32>} : memref<16x512xf32, #tpu.memory_space<vmem>>, vector<8x512xf32>,
    %c0_53 = arith.constant 0 : index
    %c0_54 = arith.constant 0 : index
    %391 = vector.load %arg5[%c0_53, %c0_54] : memref<16x512xf32, #tpu.memory_space<vmem>>, vector<8x512xf32>
    %c46_i32 = arith.constant 46 : i32
    %392 = tpu.dynamic_rotate %391 by %c46_i32 dim 1 : vector<8x512xf32>, i32 -> vector<8x512xf32>
    %c72 = arith.constant 72 : index
    %393 = memref.load %arg2[%c72] : memref<144xf32, #tpu.memory_space<smem>>
    %394 = vector.broadcast %393 : f32 to vector<8x512xf32>
    %395 = arith.mulf %392, %394 : vector<8x512xf32>
    %c90 = arith.constant 90 : index
    %396 = memref.load %arg2[%c90] : memref<144xf32, #tpu.memory_space<smem>>
    %397 = vector.broadcast %396 : f32 to vector<8x512xf32>
    %398 = arith.mulf %392, %397 : vector<8x512xf32>
    %c44_i32 = arith.constant 44 : i32
    %399 = tpu.dynamic_rotate %391 by %c44_i32 dim 1 : vector<8x512xf32>, i32 -> vector<8x512xf32>
    %c73 = arith.constant 73 : index
    %400 = memref.load %arg2[%c73] : memref<144xf32, #tpu.memory_space<smem>>
    %401 = vector.broadcast %400 : f32 to vector<8x512xf32>
    %402 = arith.mulf %399, %401 : vector<8x512xf32>
    %403 = arith.addf %395, %402 : vector<8x512xf32>
    %c91 = arith.constant 91 : index
    %404 = memref.load %arg2[%c91] : memref<144xf32, #tpu.memory_space<smem>>
    %405 = vector.broadcast %404 : f32 to vector<8x512xf32>
    %406 = arith.mulf %399, %405 : vector<8x512xf32>
    %407 = arith.addf %398, %406 : vector<8x512xf32>
    %c42_i32 = arith.constant 42 : i32
    %408 = tpu.dynamic_rotate %391 by %c42_i32 dim 1 : vector<8x512xf32>, i32 -> vector<8x512xf32>
    %c74 = arith.constant 74 : index
    %409 = memref.load %arg2[%c74] : memref<144xf32, #tpu.memory_space<smem>>
    %410 = vector.broadcast %409 : f32 to vector<8x512xf32>
    %411 = arith.mulf %408, %410 : vector<8x512xf32>
    %412 = arith.addf %403, %411 : vector<8x512xf32>
    %c92 = arith.constant 92 : index
    %413 = memref.load %arg2[%c92] : memref<144xf32, #tpu.memory_space<smem>>
    %414 = vector.broadcast %413 : f32 to vector<8x512xf32>
    %415 = arith.mulf %408, %414 : vector<8x512xf32>
    %416 = arith.addf %407, %415 : vector<8x512xf32>
    %c2_i32 = arith.constant 2 : i32
    %417 = tpu.dynamic_rotate %391 by %c2_i32 dim 1 : vector<8x512xf32>, i32 -> vector<8x512xf32>
    %c75 = arith.constant 75 : index
    %418 = memref.load %arg2[%c75] : memref<144xf32, #tpu.memory_space<smem>>
    %419 = vector.broadcast %418 : f32 to vector<8x512xf32>
    %420 = arith.mulf %417, %419 : vector<8x512xf32>
    %421 = arith.addf %412, %420 : vector<8x512xf32>
    %c93 = arith.constant 93 : index
    %422 = memref.load %arg2[%c93] : memref<144xf32, #tpu.memory_space<smem>>
    %423 = vector.broadcast %422 : f32 to vector<8x512xf32>
    %424 = arith.mulf %417, %423 : vector<8x512xf32>
    %425 = arith.addf %416, %424 : vector<8x512xf32>
    %c76 = arith.constant 76 : index
    %426 = memref.load %arg2[%c76] : memref<144xf32, #tpu.memory_space<smem>>
    %427 = vector.broadcast %426 : f32 to vector<8x512xf32>
    %428 = arith.mulf %391, %427 : vector<8x512xf32>
    %429 = arith.addf %421, %428 : vector<8x512xf32>
    %c94 = arith.constant 94 : index
    %430 = memref.load %arg2[%c94] : memref<144xf32, #tpu.memory_space<smem>>
    %431 = vector.broadcast %430 : f32 to vector<8x512xf32>
    %432 = arith.mulf %391, %431 : vector<8x512xf32>
    %433 = arith.addf %425, %432 : vector<8x512xf32>
    %c510_i32 = arith.constant 510 : i32
    %434 = tpu.dynamic_rotate %391 by %c510_i32 dim 1 : vector<8x512xf32>, i32 -> vector<8x512xf32>
    %c77 = arith.constant 77 : index
    %435 = memref.load %arg2[%c77] : memref<144xf32, #tpu.memory_space<smem>>
    %436 = vector.broadcast %435 : f32 to vector<8x512xf32>
    %437 = arith.mulf %434, %436 : vector<8x512xf32>
    %438 = arith.addf %429, %437 : vector<8x512xf32>
    %c95 = arith.constant 95 : index
    %439 = memref.load %arg2[%c95] : memref<144xf32, #tpu.memory_space<smem>>
    %440 = vector.broadcast %439 : f32 to vector<8x512xf32>
    %441 = arith.mulf %434, %440 : vector<8x512xf32>
    %442 = arith.addf %433, %441 : vector<8x512xf32>
    %c470_i32 = arith.constant 470 : i32
    %443 = tpu.dynamic_rotate %391 by %c470_i32 dim 1 : vector<8x512xf32>, i32 -> vector<8x512xf32>
    %c78 = arith.constant 78 : index
    %444 = memref.load %arg2[%c78] : memref<144xf32, #tpu.memory_space<smem>>
    %445 = vector.broadcast %444 : f32 to vector<8x512xf32>
    %446 = arith.mulf %443, %445 : vector<8x512xf32>
    %447 = arith.addf %438, %446 : vector<8x512xf32>
    %c96 = arith.constant 96 : index
    %448 = memref.load %arg2[%c96] : memref<144xf32, #tpu.memory_space<smem>>
    %449 = vector.broadcast %448 : f32 to vector<8x512xf32>
    %450 = arith.mulf %443, %449 : vector<8x512xf32>
    %451 = arith.addf %442, %450 : vector<8x512xf32>
    %c468_i32 = arith.constant 468 : i32
    %452 = tpu.dynamic_rotate %391 by %c468_i32 dim 1 : vector<8x512xf32>, i32 -> vector<8x512xf32>
    %c79 = arith.constant 79 : index
    %453 = memref.load %arg2[%c79] : memref<144xf32, #tpu.memory_space<smem>>
    %454 = vector.broadcast %453 : f32 to vector<8x512xf32>
    %455 = arith.mulf %452, %454 : vector<8x512xf32>
    %456 = arith.addf %447, %455 : vector<8x512xf32>
    %c97 = arith.constant 97 : index
    %457 = memref.load %arg2[%c97] : memref<144xf32, #tpu.memory_space<smem>>
    %458 = vector.broadcast %457 : f32 to vector<8x512xf32>
    %459 = arith.mulf %452, %458 : vector<8x512xf32>
    %460 = arith.addf %451, %459 : vector<8x512xf32>
    %c466_i32 = arith.constant 466 : i32
    %461 = tpu.dynamic_rotate %391 by %c466_i32 dim 1 : vector<8x512xf32>, i32 -> vector<8x512xf32>
    %c80 = arith.constant 80 : index
    %462 = memref.load %arg2[%c80] : memref<144xf32, #tpu.memory_space<smem>>
    %463 = vector.broadcast %462 : f32 to vector<8x512xf32>
    %464 = arith.mulf %461, %463 : vector<8x512xf32>
    %465 = arith.addf %456, %464 : vector<8x512xf32>
    %c98 = arith.constant 98 : index
    %466 = memref.load %arg2[%c98] : memref<144xf32, #tpu.memory_space<smem>>
    %467 = vector.broadcast %466 : f32 to vector<8x512xf32>
    %468 = arith.mulf %461, %467 : vector<8x512xf32>
    %469 = arith.addf %460, %468 : vector<8x512xf32>
    %c8_55 = arith.constant 8 : index
    %c0_56 = arith.constant 0 : index
    %470 = vector.load %arg5[%c8_55, %c0_56] : memref<16x512xf32, #tpu.memory_space<vmem>>, vector<8x512xf32>
    %c46_i32_57 = arith.constant 46 : i32
    %471 = tpu.dynamic_rotate %470 by %c46_i32_57 dim 1 : vector<8x512xf32>, i32 -> vector<8x512xf32>
    %c81 = arith.constant 81 : index
    %472 = memref.load %arg2[%c81] : memref<144xf32, #tpu.memory_space<smem>>
    %473 = vector.broadcast %472 : f32 to vector<8x512xf32>
    %474 = arith.mulf %471, %473 : vector<8x512xf32>
    %475 = arith.addf %465, %474 : vector<8x512xf32>
    %c99 = arith.constant 99 : index
    %476 = memref.load %arg2[%c99] : memref<144xf32, #tpu.memory_space<smem>>
    %477 = vector.broadcast %476 : f32 to vector<8x512xf32>
    %478 = arith.mulf %471, %477 : vector<8x512xf32>
    %479 = arith.addf %469, %478 : vector<8x512xf32>
    %c44_i32_58 = arith.constant 44 : i32
    %480 = tpu.dynamic_rotate %470 by %c44_i32_58 dim 1 : vector<8x512xf32>, i32 -> vector<8x512xf32>
    %c82 = arith.constant 82 : index
    %481 = memref.load %arg2[%c82] : memref<144xf32, #tpu.memory_space<smem>>
    %482 = vector.broadcast %481 : f32 to vector<8x512xf32>
    %483 = arith.mulf %480, %482 : vector<8x512xf32>
    %484 = arith.addf %475, %483 : vector<8x512xf32>
    %c100 = arith.constant 100 : index
    %485 = memref.load %arg2[%c100] : memref<144xf32, #tpu.memory_space<smem>>
    %486 = vector.broadcast %485 : f32 to vector<8x512xf32>
    %487 = arith.mulf %480, %486 : vector<8x512xf32>
    %488 = arith.addf %479, %487 : vector<8x512xf32>
    %c42_i32_59 = arith.constant 42 : i32
    %489 = tpu.dynamic_rotate %470 by %c42_i32_59 dim 1 : vector<8x512xf32>, i32 -> vector<8x512xf32>
    %c83 = arith.constant 83 : index
    %490 = memref.load %arg2[%c83] : memref<144xf32, #tpu.memory_space<smem>>
    %491 = vector.broadcast %490 : f32 to vector<8x512xf32>
    %492 = arith.mulf %489, %491 : vector<8x512xf32>
    %493 = arith.addf %484, %492 : vector<8x512xf32>
    %c101 = arith.constant 101 : index
    %494 = memref.load %arg2[%c101] : memref<144xf32, #tpu.memory_space<smem>>
    %495 = vector.broadcast %494 : f32 to vector<8x512xf32>
    %496 = arith.mulf %489, %495 : vector<8x512xf32>
    %497 = arith.addf %488, %496 : vector<8x512xf32>
    %c2_i32_60 = arith.constant 2 : i32
    %498 = tpu.dynamic_rotate %470 by %c2_i32_60 dim 1 : vector<8x512xf32>, i32 -> vector<8x512xf32>
    %c84 = arith.constant 84 : index
    %499 = memref.load %arg2[%c84] : memref<144xf32, #tpu.memory_space<smem>>
    %500 = vector.broadcast %499 : f32 to vector<8x512xf32>
    %501 = arith.mulf %498, %500 : vector<8x512xf32>
    %502 = arith.addf %493, %501 : vector<8x512xf32>
    %c102 = arith.constant 102 : index
    %503 = memref.load %arg2[%c102] : memref<144xf32, #tpu.memory_space<smem>>
    %504 = vector.broadcast %503 : f32 to vector<8x512xf32>
    %505 = arith.mulf %498, %504 : vector<8x512xf32>
    %506 = arith.addf %497, %505 : vector<8x512xf32>
    %c85 = arith.constant 85 : index
    %507 = memref.load %arg2[%c85] : memref<144xf32, #tpu.memory_space<smem>>
    %508 = vector.broadcast %507 : f32 to vector<8x512xf32>
    %509 = arith.mulf %470, %508 : vector<8x512xf32>
    %510 = arith.addf %502, %509 : vector<8x512xf32>
    %c103 = arith.constant 103 : index
    %511 = memref.load %arg2[%c103] : memref<144xf32, #tpu.memory_space<smem>>
    %512 = vector.broadcast %511 : f32 to vector<8x512xf32>
    %513 = arith.mulf %470, %512 : vector<8x512xf32>
    %514 = arith.addf %506, %513 : vector<8x512xf32>
    %c510_i32_61 = arith.constant 510 : i32
    %515 = tpu.dynamic_rotate %470 by %c510_i32_61 dim 1 : vector<8x512xf32>, i32 -> vector<8x512xf32>
    %c86 = arith.constant 86 : index
    %516 = memref.load %arg2[%c86] : memref<144xf32, #tpu.memory_space<smem>>
    %517 = vector.broadcast %516 : f32 to vector<8x512xf32>
    %518 = arith.mulf %515, %517 : vector<8x512xf32>
    %519 = arith.addf %510, %518 : vector<8x512xf32>
    %c104 = arith.constant 104 : index
    %520 = memref.load %arg2[%c104] : memref<144xf32, #tpu.memory_space<smem>>
    %521 = vector.broadcast %520 : f32 to vector<8x512xf32>
    %522 = arith.mulf %515, %521 : vector<8x512xf32>
    %523 = arith.addf %514, %522 : vector<8x512xf32>
    %c470_i32_62 = arith.constant 470 : i32
    %524 = tpu.dynamic_rotate %470 by %c470_i32_62 dim 1 : vector<8x512xf32>, i32 -> vector<8x512xf32>
    %c87 = arith.constant 87 : index
    %525 = memref.load %arg2[%c87] : memref<144xf32, #tpu.memory_space<smem>>
    %526 = vector.broadcast %525 : f32 to vector<8x512xf32>
    %527 = arith.mulf %524, %526 : vector<8x512xf32>
    %528 = arith.addf %519, %527 : vector<8x512xf32>
    %c105 = arith.constant 105 : index
    %529 = memref.load %arg2[%c105] : memref<144xf32, #tpu.memory_space<smem>>
    %530 = vector.broadcast %529 : f32 to vector<8x512xf32>
    %531 = arith.mulf %524, %530 : vector<8x512xf32>
    %532 = arith.addf %523, %531 : vector<8x512xf32>
    %c468_i32_63 = arith.constant 468 : i32
    %533 = tpu.dynamic_rotate %470 by %c468_i32_63 dim 1 : vector<8x512xf32>, i32 -> vector<8x512xf32>
    %c88 = arith.constant 88 : index
    %534 = memref.load %arg2[%c88] : memref<144xf32, #tpu.memory_space<smem>>
    %535 = vector.broadcast %534 : f32 to vector<8x512xf32>
    %536 = arith.mulf %533, %535 : vector<8x512xf32>
    %537 = arith.addf %528, %536 : vector<8x512xf32>
    %c106 = arith.constant 106 : index
    %538 = memref.load %arg2[%c106] : memref<144xf32, #tpu.memory_space<smem>>
    %539 = vector.broadcast %538 : f32 to vector<8x512xf32>
    %540 = arith.mulf %533, %539 : vector<8x512xf32>
    %541 = arith.addf %532, %540 : vector<8x512xf32>
    %c466_i32_64 = arith.constant 466 : i32
    %542 = tpu.dynamic_rotate %470 by %c466_i32_64 dim 1 : vector<8x512xf32>, i32 -> vector<8x512xf32>
    %c89 = arith.constant 89 : index
    %543 = memref.load %arg2[%c89] : memref<144xf32, #tpu.memory_space<smem>>
    %544 = vector.broadcast %543 : f32 to vector<8x512xf32>
    %545 = arith.mulf %542, %544 : vector<8x512xf32>
    %546 = arith.addf %537, %545 : vector<8x512xf32>
    %c107 = arith.constant 107 : index
    %547 = memref.load %arg2[%c107] : memref<144xf32, #tpu.memory_space<smem>>
    %548 = vector.broadcast %547 : f32 to vector<8x512xf32>
    %549 = arith.mulf %542, %548 : vector<8x512xf32>
    %550 = arith.addf %541, %549 : vector<8x512xf32>
    %551 = arith.mulf %546, %0 : vector<8x512xf32>
    %552 = vector.shape_cast %551 : vector<8x512xf32> to vector<1x8x512xf32>
    %cst_65 = arith.constant dense<0.000000e+00> : vector<1xf32>
    %553 = vector.multi_reduction <add>, %552, %cst_65 [1, 2] : vector<1x8x512xf32> to vector<1xf32>
    %554 = vector.shape_cast %553 : vector<1xf32> to vector<1x1x1xf32>
    %555 = vector.extract %554[0, 0, 0] : f32 from vector<1x1x1xf32>
    %556 = vector.broadcast %555 : f32 to vector<1x1xf32>
    %cst_66 = arith.constant 0.001953125 : f32
    %557 = vector.broadcast %cst_66 : f32 to vector<1x1xf32>
    %558 = arith.mulf %556, %557 : vector<1x1xf32>
    %559 = vector.broadcast %558 : vector<1x1xf32> to vector<8x512xf32>
    %560 = arith.subf %546, %559 : vector<8x512xf32>
    %561 = arith.mulf %560, %0 : vector<8x512xf32>
    %562 = arith.mulf %561, %561 : vector<8x512xf32>
    %563 = vector.shape_cast %562 : vector<8x512xf32> to vector<1x8x512xf32>
    %cst_67 = arith.constant dense<0.000000e+00> : vector<1xf32>
    %564 = vector.multi_reduction <add>, %563, %cst_67 [1, 2] : vector<1x8x512xf32> to vector<1xf32>
    %565 = vector.shape_cast %564 : vector<1xf32> to vector<1x1x1xf32>
    %566 = vector.extract %565[0, 0, 0] : f32 from vector<1x1x1xf32>
    %567 = vector.broadcast %566 : f32 to vector<1x1xf32>
    %cst_68 = arith.constant 0.001953125 : f32
    %568 = vector.broadcast %cst_68 : f32 to vector<1x1xf32>
    %569 = arith.mulf %567, %568 : vector<1x1xf32>
    %c4_69 = arith.constant 4 : index
    %570 = memref.load %arg3[%c4_69] : memref<12xf32, #tpu.memory_space<smem>>
    %cst_70 = arith.constant 9.99999974E-6 : f32
    %571 = vector.broadcast %cst_70 : f32 to vector<1x1xf32>
    %572 = arith.addf %569, %571 : vector<1x1xf32>
    %573 = math.rsqrt %572 : vector<1x1xf32>
    %574 = vector.broadcast %570 : f32 to vector<1x1xf32>
    %575 = arith.mulf %574, %573 : vector<1x1xf32>
    %576 = vector.broadcast %575 : vector<1x1xf32> to vector<8x512xf32>
    %577 = arith.mulf %561, %576 : vector<8x512xf32>
    %c6_71 = arith.constant 6 : index
    %578 = memref.load %arg3[%c6_71] : memref<12xf32, #tpu.memory_space<smem>>
    %579 = vector.broadcast %578 : f32 to vector<8x512xf32>
    %580 = arith.addf %577, %579 : vector<8x512xf32>
    %cst_72 = arith.constant 0.000000e+00 : f32
    %581 = vector.broadcast %cst_72 : f32 to vector<8x512xf32>
    %582 = arith.maximumf %580, %581 : vector<8x512xf32>
    %583 = arith.mulf %582, %0 : vector<8x512xf32>
    %c0_73 = arith.constant 0 : index
    %c0_74 = arith.constant 0 : index
    %584 = vector.load %arg6[%c0_73, %c0_74] : memref<16x512xf32, #tpu.memory_space<vmem>>, vector<8x512xf32>
    tpu.vector_store %arg6[%c0_73, %c0_74], %583 {strides = array<i32>} : memref<16x512xf32, #tpu.memory_space<vmem>>, vector<8x512xf32>,
    %585 = arith.mulf %550, %0 : vector<8x512xf32>
    %586 = vector.shape_cast %585 : vector<8x512xf32> to vector<1x8x512xf32>
    %cst_75 = arith.constant dense<0.000000e+00> : vector<1xf32>
    %587 = vector.multi_reduction <add>, %586, %cst_75 [1, 2] : vector<1x8x512xf32> to vector<1xf32>
    %588 = vector.shape_cast %587 : vector<1xf32> to vector<1x1x1xf32>
    %589 = vector.extract %588[0, 0, 0] : f32 from vector<1x1x1xf32>
    %590 = vector.broadcast %589 : f32 to vector<1x1xf32>
    %cst_76 = arith.constant 0.001953125 : f32
    %591 = vector.broadcast %cst_76 : f32 to vector<1x1xf32>
    %592 = arith.mulf %590, %591 : vector<1x1xf32>
    %593 = vector.broadcast %592 : vector<1x1xf32> to vector<8x512xf32>
    %594 = arith.subf %550, %593 : vector<8x512xf32>
    %595 = arith.mulf %594, %0 : vector<8x512xf32>
    %596 = arith.mulf %595, %595 : vector<8x512xf32>
    %597 = vector.shape_cast %596 : vector<8x512xf32> to vector<1x8x512xf32>
    %cst_77 = arith.constant dense<0.000000e+00> : vector<1xf32>
    %598 = vector.multi_reduction <add>, %597, %cst_77 [1, 2] : vector<1x8x512xf32> to vector<1xf32>
    %599 = vector.shape_cast %598 : vector<1xf32> to vector<1x1x1xf32>
    %600 = vector.extract %599[0, 0, 0] : f32 from vector<1x1x1xf32>
    %601 = vector.broadcast %600 : f32 to vector<1x1xf32>
    %cst_78 = arith.constant 0.001953125 : f32
    %602 = vector.broadcast %cst_78 : f32 to vector<1x1xf32>
    %603 = arith.mulf %601, %602 : vector<1x1xf32>
    %c5_79 = arith.constant 5 : index
    %604 = memref.load %arg3[%c5_79] : memref<12xf32, #tpu.memory_space<smem>>
    %cst_80 = arith.constant 9.99999974E-6 : f32
    %605 = vector.broadcast %cst_80 : f32 to vector<1x1xf32>
    %606 = arith.addf %603, %605 : vector<1x1xf32>
    %607 = math.rsqrt %606 : vector<1x1xf32>
    %608 = vector.broadcast %604 : f32 to vector<1x1xf32>
    %609 = arith.mulf %608, %607 : vector<1x1xf32>
    %610 = vector.broadcast %609 : vector<1x1xf32> to vector<8x512xf32>
    %611 = arith.mulf %595, %610 : vector<8x512xf32>
    %c7_81 = arith.constant 7 : index
    %612 = memref.load %arg3[%c7_81] : memref<12xf32, #tpu.memory_space<smem>>
    %613 = vector.broadcast %612 : f32 to vector<8x512xf32>
    %614 = arith.addf %611, %613 : vector<8x512xf32>
    %cst_82 = arith.constant 0.000000e+00 : f32
    %615 = vector.broadcast %cst_82 : f32 to vector<8x512xf32>
    %616 = arith.maximumf %614, %615 : vector<8x512xf32>
    %617 = arith.mulf %616, %0 : vector<8x512xf32>
    %c8_83 = arith.constant 8 : index
    %c0_84 = arith.constant 0 : index
    %618 = vector.load %arg6[%c8_83, %c0_84] : memref<16x512xf32, #tpu.memory_space<vmem>>, vector<8x512xf32>
    tpu.vector_store %arg6[%c8_83, %c0_84], %617 {strides = array<i32>} : memref<16x512xf32, #tpu.memory_space<vmem>>, vector<8x512xf32>,
    %c0_85 = arith.constant 0 : index
    %c0_86 = arith.constant 0 : index
    %619 = vector.load %arg6[%c0_85, %c0_86] : memref<16x512xf32, #tpu.memory_space<vmem>>, vector<8x512xf32>
    %c69_i32 = arith.constant 69 : i32
    %620 = tpu.dynamic_rotate %619 by %c69_i32 dim 1 : vector<8x512xf32>, i32 -> vector<8x512xf32>
    %c108 = arith.constant 108 : index
    %621 = memref.load %arg2[%c108] : memref<144xf32, #tpu.memory_space<smem>>
    %622 = vector.broadcast %621 : f32 to vector<8x512xf32>
    %623 = arith.mulf %620, %622 : vector<8x512xf32>
    %c126 = arith.constant 126 : index
    %624 = memref.load %arg2[%c126] : memref<144xf32, #tpu.memory_space<smem>>
    %625 = vector.broadcast %624 : f32 to vector<8x512xf32>
    %626 = arith.mulf %620, %625 : vector<8x512xf32>
    %c66_i32 = arith.constant 66 : i32
    %627 = tpu.dynamic_rotate %619 by %c66_i32 dim 1 : vector<8x512xf32>, i32 -> vector<8x512xf32>
    %c109 = arith.constant 109 : index
    %628 = memref.load %arg2[%c109] : memref<144xf32, #tpu.memory_space<smem>>
    %629 = vector.broadcast %628 : f32 to vector<8x512xf32>
    %630 = arith.mulf %627, %629 : vector<8x512xf32>
    %631 = arith.addf %623, %630 : vector<8x512xf32>
    %c127 = arith.constant 127 : index
    %632 = memref.load %arg2[%c127] : memref<144xf32, #tpu.memory_space<smem>>
    %633 = vector.broadcast %632 : f32 to vector<8x512xf32>
    %634 = arith.mulf %627, %633 : vector<8x512xf32>
    %635 = arith.addf %626, %634 : vector<8x512xf32>
    %c63_i32 = arith.constant 63 : i32
    %636 = tpu.dynamic_rotate %619 by %c63_i32 dim 1 : vector<8x512xf32>, i32 -> vector<8x512xf32>
    %c110 = arith.constant 110 : index
    %637 = memref.load %arg2[%c110] : memref<144xf32, #tpu.memory_space<smem>>
    %638 = vector.broadcast %637 : f32 to vector<8x512xf32>
    %639 = arith.mulf %636, %638 : vector<8x512xf32>
    %640 = arith.addf %631, %639 : vector<8x512xf32>
    %c128 = arith.constant 128 : index
    %641 = memref.load %arg2[%c128] : memref<144xf32, #tpu.memory_space<smem>>
    %642 = vector.broadcast %641 : f32 to vector<8x512xf32>
    %643 = arith.mulf %636, %642 : vector<8x512xf32>
    %644 = arith.addf %635, %643 : vector<8x512xf32>
    %c3_i32 = arith.constant 3 : i32
    %645 = tpu.dynamic_rotate %619 by %c3_i32 dim 1 : vector<8x512xf32>, i32 -> vector<8x512xf32>
    %c111 = arith.constant 111 : index
    %646 = memref.load %arg2[%c111] : memref<144xf32, #tpu.memory_space<smem>>
    %647 = vector.broadcast %646 : f32 to vector<8x512xf32>
    %648 = arith.mulf %645, %647 : vector<8x512xf32>
    %649 = arith.addf %640, %648 : vector<8x512xf32>
    %c129 = arith.constant 129 : index
    %650 = memref.load %arg2[%c129] : memref<144xf32, #tpu.memory_space<smem>>
    %651 = vector.broadcast %650 : f32 to vector<8x512xf32>
    %652 = arith.mulf %645, %651 : vector<8x512xf32>
    %653 = arith.addf %644, %652 : vector<8x512xf32>
    %c112 = arith.constant 112 : index
    %654 = memref.load %arg2[%c112] : memref<144xf32, #tpu.memory_space<smem>>
    %655 = vector.broadcast %654 : f32 to vector<8x512xf32>
    %656 = arith.mulf %619, %655 : vector<8x512xf32>
    %657 = arith.addf %649, %656 : vector<8x512xf32>
    %c130 = arith.constant 130 : index
    %658 = memref.load %arg2[%c130] : memref<144xf32, #tpu.memory_space<smem>>
    %659 = vector.broadcast %658 : f32 to vector<8x512xf32>
    %660 = arith.mulf %619, %659 : vector<8x512xf32>
    %661 = arith.addf %653, %660 : vector<8x512xf32>
    %c509_i32 = arith.constant 509 : i32
    %662 = tpu.dynamic_rotate %619 by %c509_i32 dim 1 : vector<8x512xf32>, i32 -> vector<8x512xf32>
    %c113 = arith.constant 113 : index
    %663 = memref.load %arg2[%c113] : memref<144xf32, #tpu.memory_space<smem>>
    %664 = vector.broadcast %663 : f32 to vector<8x512xf32>
    %665 = arith.mulf %662, %664 : vector<8x512xf32>
    %666 = arith.addf %657, %665 : vector<8x512xf32>
    %c131 = arith.constant 131 : index
    %667 = memref.load %arg2[%c131] : memref<144xf32, #tpu.memory_space<smem>>
    %668 = vector.broadcast %667 : f32 to vector<8x512xf32>
    %669 = arith.mulf %662, %668 : vector<8x512xf32>
    %670 = arith.addf %661, %669 : vector<8x512xf32>
    %c449_i32 = arith.constant 449 : i32
    %671 = tpu.dynamic_rotate %619 by %c449_i32 dim 1 : vector<8x512xf32>, i32 -> vector<8x512xf32>
    %c114 = arith.constant 114 : index
    %672 = memref.load %arg2[%c114] : memref<144xf32, #tpu.memory_space<smem>>
    %673 = vector.broadcast %672 : f32 to vector<8x512xf32>
    %674 = arith.mulf %671, %673 : vector<8x512xf32>
    %675 = arith.addf %666, %674 : vector<8x512xf32>
    %c132 = arith.constant 132 : index
    %676 = memref.load %arg2[%c132] : memref<144xf32, #tpu.memory_space<smem>>
    %677 = vector.broadcast %676 : f32 to vector<8x512xf32>
    %678 = arith.mulf %671, %677 : vector<8x512xf32>
    %679 = arith.addf %670, %678 : vector<8x512xf32>
    %c446_i32 = arith.constant 446 : i32
    %680 = tpu.dynamic_rotate %619 by %c446_i32 dim 1 : vector<8x512xf32>, i32 -> vector<8x512xf32>
    %c115 = arith.constant 115 : index
    %681 = memref.load %arg2[%c115] : memref<144xf32, #tpu.memory_space<smem>>
    %682 = vector.broadcast %681 : f32 to vector<8x512xf32>
    %683 = arith.mulf %680, %682 : vector<8x512xf32>
    %684 = arith.addf %675, %683 : vector<8x512xf32>
    %c133 = arith.constant 133 : index
    %685 = memref.load %arg2[%c133] : memref<144xf32, #tpu.memory_space<smem>>
    %686 = vector.broadcast %685 : f32 to vector<8x512xf32>
    %687 = arith.mulf %680, %686 : vector<8x512xf32>
    %688 = arith.addf %679, %687 : vector<8x512xf32>
    %c443_i32 = arith.constant 443 : i32
    %689 = tpu.dynamic_rotate %619 by %c443_i32 dim 1 : vector<8x512xf32>, i32 -> vector<8x512xf32>
    %c116 = arith.constant 116 : index
    %690 = memref.load %arg2[%c116] : memref<144xf32, #tpu.memory_space<smem>>
    %691 = vector.broadcast %690 : f32 to vector<8x512xf32>
    %692 = arith.mulf %689, %691 : vector<8x512xf32>
    %693 = arith.addf %684, %692 : vector<8x512xf32>
    %c134 = arith.constant 134 : index
    %694 = memref.load %arg2[%c134] : memref<144xf32, #tpu.memory_space<smem>>
    %695 = vector.broadcast %694 : f32 to vector<8x512xf32>
    %696 = arith.mulf %689, %695 : vector<8x512xf32>
    %697 = arith.addf %688, %696 : vector<8x512xf32>
    %c8_87 = arith.constant 8 : index
    %c0_88 = arith.constant 0 : index
    %698 = vector.load %arg6[%c8_87, %c0_88] : memref<16x512xf32, #tpu.memory_space<vmem>>, vector<8x512xf32>
    %c69_i32_89 = arith.constant 69 : i32
    %699 = tpu.dynamic_rotate %698 by %c69_i32_89 dim 1 : vector<8x512xf32>, i32 -> vector<8x512xf32>
    %c117 = arith.constant 117 : index
    %700 = memref.load %arg2[%c117] : memref<144xf32, #tpu.memory_space<smem>>
    %701 = vector.broadcast %700 : f32 to vector<8x512xf32>
    %702 = arith.mulf %699, %701 : vector<8x512xf32>
    %703 = arith.addf %693, %702 : vector<8x512xf32>
    %c135 = arith.constant 135 : index
    %704 = memref.load %arg2[%c135] : memref<144xf32, #tpu.memory_space<smem>>
    %705 = vector.broadcast %704 : f32 to vector<8x512xf32>
    %706 = arith.mulf %699, %705 : vector<8x512xf32>
    %707 = arith.addf %697, %706 : vector<8x512xf32>
    %c66_i32_90 = arith.constant 66 : i32
    %708 = tpu.dynamic_rotate %698 by %c66_i32_90 dim 1 : vector<8x512xf32>, i32 -> vector<8x512xf32>
    %c118 = arith.constant 118 : index
    %709 = memref.load %arg2[%c118] : memref<144xf32, #tpu.memory_space<smem>>
    %710 = vector.broadcast %709 : f32 to vector<8x512xf32>
    %711 = arith.mulf %708, %710 : vector<8x512xf32>
    %712 = arith.addf %703, %711 : vector<8x512xf32>
    %c136 = arith.constant 136 : index
    %713 = memref.load %arg2[%c136] : memref<144xf32, #tpu.memory_space<smem>>
    %714 = vector.broadcast %713 : f32 to vector<8x512xf32>
    %715 = arith.mulf %708, %714 : vector<8x512xf32>
    %716 = arith.addf %707, %715 : vector<8x512xf32>
    %c63_i32_91 = arith.constant 63 : i32
    %717 = tpu.dynamic_rotate %698 by %c63_i32_91 dim 1 : vector<8x512xf32>, i32 -> vector<8x512xf32>
    %c119 = arith.constant 119 : index
    %718 = memref.load %arg2[%c119] : memref<144xf32, #tpu.memory_space<smem>>
    %719 = vector.broadcast %718 : f32 to vector<8x512xf32>
    %720 = arith.mulf %717, %719 : vector<8x512xf32>
    %721 = arith.addf %712, %720 : vector<8x512xf32>
    %c137 = arith.constant 137 : index
    %722 = memref.load %arg2[%c137] : memref<144xf32, #tpu.memory_space<smem>>
    %723 = vector.broadcast %722 : f32 to vector<8x512xf32>
    %724 = arith.mulf %717, %723 : vector<8x512xf32>
    %725 = arith.addf %716, %724 : vector<8x512xf32>
    %c3_i32_92 = arith.constant 3 : i32
    %726 = tpu.dynamic_rotate %698 by %c3_i32_92 dim 1 : vector<8x512xf32>, i32 -> vector<8x512xf32>
    %c120 = arith.constant 120 : index
    %727 = memref.load %arg2[%c120] : memref<144xf32, #tpu.memory_space<smem>>
    %728 = vector.broadcast %727 : f32 to vector<8x512xf32>
    %729 = arith.mulf %726, %728 : vector<8x512xf32>
    %730 = arith.addf %721, %729 : vector<8x512xf32>
    %c138 = arith.constant 138 : index
    %731 = memref.load %arg2[%c138] : memref<144xf32, #tpu.memory_space<smem>>
    %732 = vector.broadcast %731 : f32 to vector<8x512xf32>
    %733 = arith.mulf %726, %732 : vector<8x512xf32>
    %734 = arith.addf %725, %733 : vector<8x512xf32>
    %c121 = arith.constant 121 : index
    %735 = memref.load %arg2[%c121] : memref<144xf32, #tpu.memory_space<smem>>
    %736 = vector.broadcast %735 : f32 to vector<8x512xf32>
    %737 = arith.mulf %698, %736 : vector<8x512xf32>
    %738 = arith.addf %730, %737 : vector<8x512xf32>
    %c139 = arith.constant 139 : index
    %739 = memref.load %arg2[%c139] : memref<144xf32, #tpu.memory_space<smem>>
    %740 = vector.broadcast %739 : f32 to vector<8x512xf32>
    %741 = arith.mulf %698, %740 : vector<8x512xf32>
    %742 = arith.addf %734, %741 : vector<8x512xf32>
    %c509_i32_93 = arith.constant 509 : i32
    %743 = tpu.dynamic_rotate %698 by %c509_i32_93 dim 1 : vector<8x512xf32>, i32 -> vector<8x512xf32>
    %c122 = arith.constant 122 : index
    %744 = memref.load %arg2[%c122] : memref<144xf32, #tpu.memory_space<smem>>
    %745 = vector.broadcast %744 : f32 to vector<8x512xf32>
    %746 = arith.mulf %743, %745 : vector<8x512xf32>
    %747 = arith.addf %738, %746 : vector<8x512xf32>
    %c140 = arith.constant 140 : index
    %748 = memref.load %arg2[%c140] : memref<144xf32, #tpu.memory_space<smem>>
    %749 = vector.broadcast %748 : f32 to vector<8x512xf32>
    %750 = arith.mulf %743, %749 : vector<8x512xf32>
    %751 = arith.addf %742, %750 : vector<8x512xf32>
    %c449_i32_94 = arith.constant 449 : i32
    %752 = tpu.dynamic_rotate %698 by %c449_i32_94 dim 1 : vector<8x512xf32>, i32 -> vector<8x512xf32>
    %c123 = arith.constant 123 : index
    %753 = memref.load %arg2[%c123] : memref<144xf32, #tpu.memory_space<smem>>
    %754 = vector.broadcast %753 : f32 to vector<8x512xf32>
    %755 = arith.mulf %752, %754 : vector<8x512xf32>
    %756 = arith.addf %747, %755 : vector<8x512xf32>
    %c141 = arith.constant 141 : index
    %757 = memref.load %arg2[%c141] : memref<144xf32, #tpu.memory_space<smem>>
    %758 = vector.broadcast %757 : f32 to vector<8x512xf32>
    %759 = arith.mulf %752, %758 : vector<8x512xf32>
    %760 = arith.addf %751, %759 : vector<8x512xf32>
    %c446_i32_95 = arith.constant 446 : i32
    %761 = tpu.dynamic_rotate %698 by %c446_i32_95 dim 1 : vector<8x512xf32>, i32 -> vector<8x512xf32>
    %c124 = arith.constant 124 : index
    %762 = memref.load %arg2[%c124] : memref<144xf32, #tpu.memory_space<smem>>
    %763 = vector.broadcast %762 : f32 to vector<8x512xf32>
    %764 = arith.mulf %761, %763 : vector<8x512xf32>
    %765 = arith.addf %756, %764 : vector<8x512xf32>
    %c142 = arith.constant 142 : index
    %766 = memref.load %arg2[%c142] : memref<144xf32, #tpu.memory_space<smem>>
    %767 = vector.broadcast %766 : f32 to vector<8x512xf32>
    %768 = arith.mulf %761, %767 : vector<8x512xf32>
    %769 = arith.addf %760, %768 : vector<8x512xf32>
    %c443_i32_96 = arith.constant 443 : i32
    %770 = tpu.dynamic_rotate %698 by %c443_i32_96 dim 1 : vector<8x512xf32>, i32 -> vector<8x512xf32>
    %c125 = arith.constant 125 : index
    %771 = memref.load %arg2[%c125] : memref<144xf32, #tpu.memory_space<smem>>
    %772 = vector.broadcast %771 : f32 to vector<8x512xf32>
    %773 = arith.mulf %770, %772 : vector<8x512xf32>
    %774 = arith.addf %765, %773 : vector<8x512xf32>
    %c143 = arith.constant 143 : index
    %775 = memref.load %arg2[%c143] : memref<144xf32, #tpu.memory_space<smem>>
    %776 = vector.broadcast %775 : f32 to vector<8x512xf32>
    %777 = arith.mulf %770, %776 : vector<8x512xf32>
    %778 = arith.addf %769, %777 : vector<8x512xf32>
    %779 = arith.mulf %774, %0 : vector<8x512xf32>
    %780 = vector.shape_cast %779 : vector<8x512xf32> to vector<1x8x512xf32>
    %cst_97 = arith.constant dense<0.000000e+00> : vector<1xf32>
    %781 = vector.multi_reduction <add>, %780, %cst_97 [1, 2] : vector<1x8x512xf32> to vector<1xf32>
    %782 = vector.shape_cast %781 : vector<1xf32> to vector<1x1x1xf32>
    %783 = vector.extract %782[0, 0, 0] : f32 from vector<1x1x1xf32>
    %784 = vector.broadcast %783 : f32 to vector<1x1xf32>
    %cst_98 = arith.constant 0.001953125 : f32
    %785 = vector.broadcast %cst_98 : f32 to vector<1x1xf32>
    %786 = arith.mulf %784, %785 : vector<1x1xf32>
    %787 = vector.broadcast %786 : vector<1x1xf32> to vector<8x512xf32>
    %788 = arith.subf %774, %787 : vector<8x512xf32>
    %789 = arith.mulf %788, %0 : vector<8x512xf32>
    %790 = arith.mulf %789, %789 : vector<8x512xf32>
    %791 = vector.shape_cast %790 : vector<8x512xf32> to vector<1x8x512xf32>
    %cst_99 = arith.constant dense<0.000000e+00> : vector<1xf32>
    %792 = vector.multi_reduction <add>, %791, %cst_99 [1, 2] : vector<1x8x512xf32> to vector<1xf32>
    %793 = vector.shape_cast %792 : vector<1xf32> to vector<1x1x1xf32>
    %794 = vector.extract %793[0, 0, 0] : f32 from vector<1x1x1xf32>
    %795 = vector.broadcast %794 : f32 to vector<1x1xf32>
    %cst_100 = arith.constant 0.001953125 : f32
    %796 = vector.broadcast %cst_100 : f32 to vector<1x1xf32>
    %797 = arith.mulf %795, %796 : vector<1x1xf32>
    %c8_101 = arith.constant 8 : index
    %798 = memref.load %arg3[%c8_101] : memref<12xf32, #tpu.memory_space<smem>>
    %cst_102 = arith.constant 9.99999974E-6 : f32
    %799 = vector.broadcast %cst_102 : f32 to vector<1x1xf32>
    %800 = arith.addf %797, %799 : vector<1x1xf32>
    %801 = math.rsqrt %800 : vector<1x1xf32>
    %802 = vector.broadcast %798 : f32 to vector<1x1xf32>
    %803 = arith.mulf %802, %801 : vector<1x1xf32>
    %804 = vector.broadcast %803 : vector<1x1xf32> to vector<8x512xf32>
    %805 = arith.mulf %789, %804 : vector<8x512xf32>
    %c10_103 = arith.constant 10 : index
    %806 = memref.load %arg3[%c10_103] : memref<12xf32, #tpu.memory_space<smem>>
    %807 = vector.broadcast %806 : f32 to vector<8x512xf32>
    %808 = arith.addf %805, %807 : vector<8x512xf32>
    %cst_104 = arith.constant 0.000000e+00 : f32
    %809 = vector.broadcast %cst_104 : f32 to vector<8x512xf32>
    %810 = arith.maximumf %808, %809 : vector<8x512xf32>
    %811 = arith.mulf %810, %0 : vector<8x512xf32>
    %c0_105 = arith.constant 0 : index
    %c0_106 = arith.constant 0 : index
    %812 = vector.load %arg4[%c0_105, %c0_106] : memref<16x512xf32, #tpu.memory_space<vmem>>, vector<8x512xf32>
    tpu.vector_store %arg4[%c0_105, %c0_106], %811 {strides = array<i32>} : memref<16x512xf32, #tpu.memory_space<vmem>>, vector<8x512xf32>,
    %813 = arith.mulf %778, %0 : vector<8x512xf32>
    %814 = vector.shape_cast %813 : vector<8x512xf32> to vector<1x8x512xf32>
    %cst_107 = arith.constant dense<0.000000e+00> : vector<1xf32>
    %815 = vector.multi_reduction <add>, %814, %cst_107 [1, 2] : vector<1x8x512xf32> to vector<1xf32>
    %816 = vector.shape_cast %815 : vector<1xf32> to vector<1x1x1xf32>
    %817 = vector.extract %816[0, 0, 0] : f32 from vector<1x1x1xf32>
    %818 = vector.broadcast %817 : f32 to vector<1x1xf32>
    %cst_108 = arith.constant 0.001953125 : f32
    %819 = vector.broadcast %cst_108 : f32 to vector<1x1xf32>
    %820 = arith.mulf %818, %819 : vector<1x1xf32>
    %821 = vector.broadcast %820 : vector<1x1xf32> to vector<8x512xf32>
    %822 = arith.subf %778, %821 : vector<8x512xf32>
    %823 = arith.mulf %822, %0 : vector<8x512xf32>
    %824 = arith.mulf %823, %823 : vector<8x512xf32>
    %825 = vector.shape_cast %824 : vector<8x512xf32> to vector<1x8x512xf32>
    %cst_109 = arith.constant dense<0.000000e+00> : vector<1xf32>
    %826 = vector.multi_reduction <add>, %825, %cst_109 [1, 2] : vector<1x8x512xf32> to vector<1xf32>
    %827 = vector.shape_cast %826 : vector<1xf32> to vector<1x1x1xf32>
    %828 = vector.extract %827[0, 0, 0] : f32 from vector<1x1x1xf32>
    %829 = vector.broadcast %828 : f32 to vector<1x1xf32>
    %cst_110 = arith.constant 0.001953125 : f32
    %830 = vector.broadcast %cst_110 : f32 to vector<1x1xf32>
    %831 = arith.mulf %829, %830 : vector<1x1xf32>
    %c9_111 = arith.constant 9 : index
    %832 = memref.load %arg3[%c9_111] : memref<12xf32, #tpu.memory_space<smem>>
    %cst_112 = arith.constant 9.99999974E-6 : f32
    %833 = vector.broadcast %cst_112 : f32 to vector<1x1xf32>
    %834 = arith.addf %831, %833 : vector<1x1xf32>
    %835 = math.rsqrt %834 : vector<1x1xf32>
    %836 = vector.broadcast %832 : f32 to vector<1x1xf32>
    %837 = arith.mulf %836, %835 : vector<1x1xf32>
    %838 = vector.broadcast %837 : vector<1x1xf32> to vector<8x512xf32>
    %839 = arith.mulf %823, %838 : vector<8x512xf32>
    %c11_113 = arith.constant 11 : index
    %840 = memref.load %arg3[%c11_113] : memref<12xf32, #tpu.memory_space<smem>>
    %841 = vector.broadcast %840 : f32 to vector<8x512xf32>
    %842 = arith.addf %839, %841 : vector<8x512xf32>
    %cst_114 = arith.constant 0.000000e+00 : f32
    %843 = vector.broadcast %cst_114 : f32 to vector<8x512xf32>
    %844 = arith.maximumf %842, %843 : vector<8x512xf32>
    %845 = arith.mulf %844, %0 : vector<8x512xf32>
    %c8_115 = arith.constant 8 : index
    %c0_116 = arith.constant 0 : index
    %846 = vector.load %arg4[%c8_115, %c0_116] : memref<16x512xf32, #tpu.memory_space<vmem>>, vector<8x512xf32>
    tpu.vector_store %arg4[%c8_115, %c0_116], %845 {strides = array<i32>} : memref<16x512xf32, #tpu.memory_space<vmem>>, vector<8x512xf32>,
    return
  }
}

</mosaic_0001>

<llo_original>
// kernel: widescope_conv2d_block.1
$region0: #{widescope_conv2d_block.1}
  #allocation0 [shape = 'u32[]', space=smem, size = 0x4, offset = 0x4, fixed_abs, tag = 'smem constant byte address 0x4 - core index']
  #allocation1 [shape = 'u32[144,128]{1,0:T(1,128)}', space=vmem, size = 0x12000, scoped, tag = 'internal scratch']
  #allocation2 [shape = 'f32[16,512]{1,0:T(8,128)}', space=vmem, size = 0x8000, scoped, tag = 'scratch operand']
  #allocation3 [shape = 'f32[16,512]{1,0:T(8,128)}', space=vmem, size = 0x8000, scoped, tag = 'scratch operand']
  %s0 = inlined_call_operand.vmem [shape: f32[32,512], index: 0, kind: input, shape index: {}]
  %s1 = inlined_call_operand.vmem [shape: f32[8,512], index: 1, kind: input, shape index: {}]
  %s2 = inlined_call_operand.vmem [shape: f32[144], index: 2, kind: input, shape index: {}]
  %s3 = inlined_call_operand.vmem [shape: f32[12], index: 3, kind: input, shape index: {}]
  %s4 = inlined_call_operand.vmem [shape: f32[16,512], index: 4, kind: output, shape index: {}]
  %s5 = sld [smem:[#allocation0]]
  $region34: #{widescope_conv2d_block.1} parent=0
    _
  %s7 = ssub.s32 1, %s5
  %s8 = scalar_select 0, %s7, %s5
  $region1: #{widescope_conv2d_block.1} parent=0
    #allocation4 [shape = 'u8[1024]{0}', space=smem, size = 0x400, scoped, tag = 'input window, operand 2, single buffered']
    #allocation5 [shape = 's32[1]{0}', space=sflag, size = 0x4, scoped, tag = 'scoped memory for widescope_conv2d_block.1']
    #allocation6 [shape = 'u8[512]{0}', space=smem, size = 0x200, scoped, tag = 'input window, operand 3, single buffered']
    #allocation7 [shape = 's32[1]{0}', space=sflag, size = 0x4, scoped, tag = 'scoped memory for widescope_conv2d_block.1']
    %9 = vsyncpa [#allocation5], 0
    %10 = vsyncpa [#allocation7], 0
    // Predicated region
    $region2: #{widescope_conv2d_block.1} parent=1 // pred_check
      _
    $region3: #{widescope_conv2d_block.1} parent=1 // pred_check_branch
      %12 = sbr.rel (0) target = $region5
    $region4: #{widescope_conv2d_block.1} parent=1 // pred_region
      _
    $region5: #{widescope_conv2d_block.1} parent=1 // pred_fallthru
      _
    // Predicated region
    $region6: #{widescope_conv2d_block.1} parent=1 // pred_check
      _
    $region7: #{widescope_conv2d_block.1} parent=1 // pred_check_branch
      %14 = sbr.rel (0) target = $region9
    $region8: #{widescope_conv2d_block.1} parent=1 // pred_region
      _
    $region9: #{widescope_conv2d_block.1} parent=1 // pred_fallthru
      _
    // Predicated region
    $region10: #{widescope_conv2d_block.1} parent=1 // pred_check
      _
    $region11: #{widescope_conv2d_block.1} parent=1 // pred_check_branch
      %16 = sbr.rel (0) target = $region13
    $region12: #{widescope_conv2d_block.1} parent=1 // pred_region
      %s18 = ssub.s32 32, 32
      %19 = vsyncadd [#allocation5], %s18
      %s21 = sshll.u32 %s2, 4
      %s22 = int_to_ptr.vmem [resolvable:$true] %s21
      %24 = dma.vmem_to_smem %s22, 32, [#allocation4], [#allocation5]
    $region13: #{widescope_conv2d_block.1} parent=1 // pred_fallthru
      _
    // Predicated region
    $region14: #{widescope_conv2d_block.1} parent=1 // pred_check
      _
    $region15: #{widescope_conv2d_block.1} parent=1 // pred_check_branch
      %26 = sbr.rel (0) target = $region17
    $region16: #{widescope_conv2d_block.1} parent=1 // pred_region
      %s28 = ssub.s32 16, 16
      %29 = vsyncadd [#allocation7], %s28
      %s31 = sshll.u32 %s3, 4
      %s32 = int_to_ptr.vmem [resolvable:$true] %s31
      %34 = dma.vmem_to_smem %s32, 16, [#allocation6], [#allocation7]
    $region17: #{widescope_conv2d_block.1} parent=1 // pred_fallthru
      _
    // Predicated region
    $region18: #{widescope_conv2d_block.1} parent=1 // pred_check
      _
    $region19: #{widescope_conv2d_block.1} parent=1 // pred_check_branch
      %36 = sbr.rel (0) target = $region21
    $region20: #{widescope_conv2d_block.1} parent=1 // pred_region
      %37 = dma.done [#allocation5], 32
    $region21: #{widescope_conv2d_block.1} parent=1 // pred_fallthru
      _
    // Predicated region
    $region22: #{widescope_conv2d_block.1} parent=1 // pred_check
      _
    $region23: #{widescope_conv2d_block.1} parent=1 // pred_check_branch
      %39 = sbr.rel (0) target = $region25
    $region24: #{widescope_conv2d_block.1} parent=1 // pred_region
      %40 = dma.done [#allocation7], 16
    $region25: #{widescope_conv2d_block.1} parent=1 // pred_fallthru
      _
    %41 = sfence
    %v42 = vld [vmem:[%s1] sm:$0xff]
    %v43 = vld [vmem:[%s1 + $0x8] sm:$0xff]
    %v44 = vld [vmem:[%s1 + $0x10] sm:$0xff]
    %v45 = vld [vmem:[%s1 + $0x18] sm:$0xff]
    %v46 = vld [vmem:[%s0] sm:$0xff]
    %v47 = vld [vmem:[%s0 + $0x8] sm:$0xff]
    %v48 = vld [vmem:[%s0 + $0x10] sm:$0xff]
    %v49 = vld [vmem:[%s0 + $0x18] sm:$0xff]
    %50 = vrot.lane.b32.xlu0 %v46, 23
    %v51 = vpop.permute.xlu0 %50
    %52 = vrot.lane.b32.xlu0 %v47, 23
    %v53 = vpop.permute.xlu0 %52
    %54 = vrot.lane.b32.xlu0 %v48, 23
    %v55 = vpop.permute.xlu0 %54
    %56 = vrot.lane.b32.xlu0 %v49, 23
    %v57 = vpop.permute.xlu0 %56
    %v58 = vlaneseq
    %v59 = vand.u32 %v58, 127
    %vm60 = vcmp.lt.s32.totalorder %v59, 23
    %v61 = vsel %vm60, %v55, %v57
    %v62 = vsel %vm60, %v53, %v55
    %v63 = vsel %vm60, %v51, %v53
    %v64 = vsel %vm60, %v57, %v51
    %s65 = sld [smem:[#allocation4]]
    %v66 = vstv %s65
    %v67 = vmul.f32 %v64, %v66
    %v68 = vmul.f32 %v63, %v66
    %v69 = vmul.f32 %v62, %v66
    %v70 = vmul.f32 %v61, %v66
    %s71 = sld [smem:[#allocation4 + $0x24]]
    %v72 = vstv %s71
    %v73 = vmul.f32 %v64, %v72
    %v74 = vmul.f32 %v63, %v72
    %v75 = vmul.f32 %v62, %v72
    %v76 = vmul.f32 %v61, %v72
    %77 = vrot.lane.b32.xlu0 %v46, 22
    %v78 = vpop.permute.xlu0 %77
    %79 = vrot.lane.b32.xlu0 %v47, 22
    %v80 = vpop.permute.xlu0 %79
    %81 = vrot.lane.b32.xlu0 %v48, 22
    %v82 = vpop.permute.xlu0 %81
    %83 = vrot.lane.b32.xlu0 %v49, 22
    %v84 = vpop.permute.xlu0 %83
    %vm85 = vcmp.lt.s32.totalorder %v59, 22
    %v86 = vsel %vm85, %v82, %v84
    %v87 = vsel %vm85, %v80, %v82
    %v88 = vsel %vm85, %v78, %v80
    %v89 = vsel %vm85, %v84, %v78
    %s90 = sld [smem:[#allocation4 + $0x1]]
    %v91 = vstv %s90
    %v92 = vmul.f32 %v89, %v91
    %v93 = vmul.f32 %v88, %v91
    %v94 = vmul.f32 %v87, %v91
    %v95 = vmul.f32 %v86, %v91
    %v96 = vadd.f32 %v67, %v92
    %v97 = vadd.f32 %v68, %v93
    %v98 = vadd.f32 %v69, %v94
    %v99 = vadd.f32 %v70, %v95
    %s100 = sld [smem:[#allocation4 + $0x25]]
    %v101 = vstv %s100
    %v102 = vmul.f32 %v89, %v101
    %v103 = vmul.f32 %v88, %v101
    %v104 = vmul.f32 %v87, %v101
    %v105 = vmul.f32 %v86, %v101
    %v106 = vadd.f32 %v73, %v102
    %v107 = vadd.f32 %v74, %v103
    %v108 = vadd.f32 %v75, %v104
    %v109 = vadd.f32 %v76, %v105
    %110 = vrot.lane.b32.xlu0 %v46, 21
    %v111 = vpop.permute.xlu0 %110
    %112 = vrot.lane.b32.xlu0 %v47, 21
    %v113 = vpop.permute.xlu0 %112
    %114 = vrot.lane.b32.xlu0 %v48, 21
    %v115 = vpop.permute.xlu0 %114
    %116 = vrot.lane.b32.xlu0 %v49, 21
    %v117 = vpop.permute.xlu0 %116
    %vm118 = vcmp.lt.s32.totalorder %v59, 21
    %v119 = vsel %vm118, %v115, %v117
    %v120 = vsel %vm118, %v113, %v115
    %v121 = vsel %vm118, %v111, %v113
    %v122 = vsel %vm118, %v117, %v111
    %s123 = sld [smem:[#allocation4 + $0x2]]
    %v124 = vstv %s123
    %v125 = vmul.f32 %v122, %v124
    %v126 = vmul.f32 %v121, %v124
    %v127 = vmul.f32 %v120, %v124
    %v128 = vmul.f32 %v119, %v124
    %v129 = vadd.f32 %v96, %v125
    %v130 = vadd.f32 %v97, %v126
    %v131 = vadd.f32 %v98, %v127
    %v132 = vadd.f32 %v99, %v128
    %s133 = sld [smem:[#allocation4 + $0x26]]
    %v134 = vstv %s133
    %v135 = vmul.f32 %v122, %v134
    %v136 = vmul.f32 %v121, %v134
    %v137 = vmul.f32 %v120, %v134
    %v138 = vmul.f32 %v119, %v134
    %v139 = vadd.f32 %v106, %v135
    %v140 = vadd.f32 %v107, %v136
    %v141 = vadd.f32 %v108, %v137
    %v142 = vadd.f32 %v109, %v138
    %143 = vrot.lane.b32.xlu0 %v46, 1
    %v144 = vpop.permute.xlu0 %143
    %145 = vrot.lane.b32.xlu0 %v47, 1
    %v146 = vpop.permute.xlu0 %145
    %147 = vrot.lane.b32.xlu0 %v48, 1
    %v148 = vpop.permute.xlu0 %147
    %149 = vrot.lane.b32.xlu0 %v49, 1
    %v150 = vpop.permute.xlu0 %149
    %vm151 = vcmp.lt.s32.totalorder %v59, 1
    %v152 = vsel %vm151, %v148, %v150
    %v153 = vsel %vm151, %v146, %v148
    %v154 = vsel %vm151, %v144, %v146
    %v155 = vsel %vm151, %v150, %v144
    %s156 = sld [smem:[#allocation4 + $0x3]]
    %v157 = vstv %s156
    %v158 = vmul.f32 %v155, %v157
    %v159 = vmul.f32 %v154, %v157
    %v160 = vmul.f32 %v153, %v157
    %v161 = vmul.f32 %v152, %v157
    %v162 = vadd.f32 %v129, %v158
    %v163 = vadd.f32 %v130, %v159
    %v164 = vadd.f32 %v131, %v160
    %v165 = vadd.f32 %v132, %v161
    %s166 = sld [smem:[#allocation4 + $0x27]]
    %v167 = vstv %s166
    %v168 = vmul.f32 %v155, %v167
    %v169 = vmul.f32 %v154, %v167
    %v170 = vmul.f32 %v153, %v167
    %v171 = vmul.f32 %v152, %v167
    %v172 = vadd.f32 %v139, %v168
    %v173 = vadd.f32 %v140, %v169
    %v174 = vadd.f32 %v141, %v170
    %v175 = vadd.f32 %v142, %v171
    %s176 = sld [smem:[#allocation4 + $0x4]]
    %v177 = vstv %s176
    %v178 = vmul.f32 %v46, %v177
    %v179 = vmul.f32 %v47, %v177
    %v180 = vmul.f32 %v48, %v177
    %v181 = vmul.f32 %v49, %v177
    %v182 = vadd.f32 %v162, %v178
    %v183 = vadd.f32 %v163, %v179
    %v184 = vadd.f32 %v164, %v180
    %v185 = vadd.f32 %v165, %v181
    %s186 = sld [smem:[#allocation4 + $0x28]]
    %v187 = vstv %s186
    %v188 = vmul.f32 %v46, %v187
    %v189 = vmul.f32 %v47, %v187
    %v190 = vmul.f32 %v48, %v187
    %v191 = vmul.f32 %v49, %v187
    %v192 = vadd.f32 %v172, %v188
    %v193 = vadd.f32 %v173, %v189
    %v194 = vadd.f32 %v174, %v190
    %v195 = vadd.f32 %v175, %v191
    %196 = vrot.lane.b32.xlu0 %v46, 127
    %v197 = vpop.permute.xlu0 %196
    %198 = vrot.lane.b32.xlu0 %v47, 127
    %v199 = vpop.permute.xlu0 %198
    %200 = vrot.lane.b32.xlu0 %v48, 127
    %v201 = vpop.permute.xlu0 %200
    %202 = vrot.lane.b32.xlu0 %v49, 127
    %v203 = vpop.permute.xlu0 %202
    %vm204 = vcmp.lt.s32.totalorder %v59, 127
    %v205 = vsel %vm204, %v201, %v203
    %v206 = vsel %vm204, %v199, %v201
    %v207 = vsel %vm204, %v197, %v199
    %v208 = vsel %vm204, %v203, %v197
    %s209 = sld [smem:[#allocation4 + $0x5]]
    %v210 = vstv %s209
    %v211 = vmul.f32 %v207, %v210
    %v212 = vmul.f32 %v206, %v210
    %v213 = vmul.f32 %v205, %v210
    %v214 = vmul.f32 %v208, %v210
    %v215 = vadd.f32 %v182, %v211
    %v216 = vadd.f32 %v183, %v212
    %v217 = vadd.f32 %v184, %v213
    %v218 = vadd.f32 %v185, %v214
    %s219 = sld [smem:[#allocation4 + $0x29]]
    %v220 = vstv %s219
    %v221 = vmul.f32 %v207, %v220
    %v222 = vmul.f32 %v206, %v220
    %v223 = vmul.f32 %v205, %v220
    %v224 = vmul.f32 %v208, %v220
    %v225 = vadd.f32 %v192, %v221
    %v226 = vadd.f32 %v193, %v222
    %v227 = vadd.f32 %v194, %v223
    %v228 = vadd.f32 %v195, %v224
    %229 = vrot.lane.b32.xlu0 %v46, 107
    %v230 = vpop.permute.xlu0 %229
    %231 = vrot.lane.b32.xlu0 %v47, 107
    %v232 = vpop.permute.xlu0 %231
    %233 = vrot.lane.b32.xlu0 %v48, 107
    %v234 = vpop.permute.xlu0 %233
    %235 = vrot.lane.b32.xlu0 %v49, 107
    %v236 = vpop.permute.xlu0 %235
    %vm237 = vcmp.lt.s32.totalorder %v59, 107
    %v238 = vsel %vm237, %v234, %v236
    %v239 = vsel %vm237, %v232, %v234
    %v240 = vsel %vm237, %v230, %v232
    %v241 = vsel %vm237, %v236, %v230
    %s242 = sld [smem:[#allocation4 + $0x6]]
    %v243 = vstv %s242
    %v244 = vmul.f32 %v240, %v243
    %v245 = vmul.f32 %v239, %v243
    %v246 = vmul.f32 %v238, %v243
    %v247 = vmul.f32 %v241, %v243
    %v248 = vadd.f32 %v215, %v244
    %v249 = vadd.f32 %v216, %v245
    %v250 = vadd.f32 %v217, %v246
    %v251 = vadd.f32 %v218, %v247
    %s252 = sld [smem:[#allocation4 + $0x2a]]
    %v253 = vstv %s252
    %v254 = vmul.f32 %v240, %v253
    %v255 = vmul.f32 %v239, %v253
    %v256 = vmul.f32 %v238, %v253
    %v257 = vmul.f32 %v241, %v253
    %v258 = vadd.f32 %v225, %v254
    %v259 = vadd.f32 %v226, %v255
    %v260 = vadd.f32 %v227, %v256
    %v261 = vadd.f32 %v228, %v257
    %262 = vrot.lane.b32.xlu0 %v46, 106
    %v263 = vpop.permute.xlu0 %262
    %264 = vrot.lane.b32.xlu0 %v47, 106
    %v265 = vpop.permute.xlu0 %264
    %266 = vrot.lane.b32.xlu0 %v48, 106
    %v267 = vpop.permute.xlu0 %266
    %268 = vrot.lane.b32.xlu0 %v49, 106
    %v269 = vpop.permute.xlu0 %268
    %vm270 = vcmp.lt.s32.totalorder %v59, 106
    %v271 = vsel %vm270, %v267, %v269
    %v272 = vsel %vm270, %v265, %v267
    %v273 = vsel %vm270, %v263, %v265
    %v274 = vsel %vm270, %v269, %v263
    %s275 = sld [smem:[#allocation4 + $0x7]]
    %v276 = vstv %s275
    %v277 = vmul.f32 %v273, %v276
    %v278 = vmul.f32 %v272, %v276
    %v279 = vmul.f32 %v271, %v276
    %v280 = vmul.f32 %v274, %v276
    %v281 = vadd.f32 %v248, %v277
    %v282 = vadd.f32 %v249, %v278
    %v283 = vadd.f32 %v250, %v279
    %v284 = vadd.f32 %v251, %v280
    %s285 = sld [smem:[#allocation4 + $0x2b]]
    %v286 = vstv %s285
    %v287 = vmul.f32 %v273, %v286
    %v288 = vmul.f32 %v272, %v286
    %v289 = vmul.f32 %v271, %v286
    %v290 = vmul.f32 %v274, %v286
    %v291 = vadd.f32 %v258, %v287
    %v292 = vadd.f32 %v259, %v288
    %v293 = vadd.f32 %v260, %v289
    %v294 = vadd.f32 %v261, %v290
    %295 = vrot.lane.b32.xlu0 %v46, 105
    %v296 = vpop.permute.xlu0 %295
    %297 = vrot.lane.b32.xlu0 %v47, 105
    %v298 = vpop.permute.xlu0 %297
    %299 = vrot.lane.b32.xlu0 %v48, 105
    %v300 = vpop.permute.xlu0 %299
    %301 = vrot.lane.b32.xlu0 %v49, 105
    %v302 = vpop.permute.xlu0 %301
    %vm303 = vcmp.lt.s32.totalorder %v59, 105
    %v304 = vsel %vm303, %v300, %v302
    %v305 = vsel %vm303, %v298, %v300
    %v306 = vsel %vm303, %v296, %v298
    %v307 = vsel %vm303, %v302, %v296
    %s308 = sld [smem:[#allocation4 + $0x8]]
    %v309 = vstv %s308
    %v310 = vmul.f32 %v306, %v309
    %v311 = vmul.f32 %v305, %v309
    %v312 = vmul.f32 %v304, %v309
    %v313 = vmul.f32 %v307, %v309
    %v314 = vadd.f32 %v281, %v310
    %v315 = vadd.f32 %v282, %v311
    %v316 = vadd.f32 %v283, %v312
    %v317 = vadd.f32 %v284, %v313
    %s318 = sld [smem:[#allocation4 + $0x2c]]
    %v319 = vstv %s318
    %v320 = vmul.f32 %v306, %v319
    %v321 = vmul.f32 %v305, %v319
    %v322 = vmul.f32 %v304, %v319
    %v323 = vmul.f32 %v307, %v319
    %v324 = vadd.f32 %v291, %v320
    %v325 = vadd.f32 %v292, %v321
    %v326 = vadd.f32 %v293, %v322
    %v327 = vadd.f32 %v294, %v323
    %v328 = vld [vmem:[%s0 + $0x20] sm:$0xff]
    %v329 = vld [vmem:[%s0 + $0x28] sm:$0xff]
    %v330 = vld [vmem:[%s0 + $0x30] sm:$0xff]
    %v331 = vld [vmem:[%s0 + $0x38] sm:$0xff]
    %332 = vrot.lane.b32.xlu0 %v328, 23
    %v333 = vpop.permute.xlu0 %332
    %334 = vrot.lane.b32.xlu0 %v329, 23
    %v335 = vpop.permute.xlu0 %334
    %336 = vrot.lane.b32.xlu0 %v330, 23
    %v337 = vpop.permute.xlu0 %336
    %338 = vrot.lane.b32.xlu0 %v331, 23
    %v339 = vpop.permute.xlu0 %338
    %v340 = vsel %vm60, %v337, %v339
    %v341 = vsel %vm60, %v335, %v337
    %v342 = vsel %vm60, %v333, %v335
    %v343 = vsel %vm60, %v339, %v333
    %s344 = sld [smem:[#allocation4 + $0x9]]
    %v345 = vstv %s344
    %v346 = vmul.f32 %v343, %v345
    %v347 = vmul.f32 %v342, %v345
    %v348 = vmul.f32 %v341, %v345
    %v349 = vmul.f32 %v340, %v345
    %v350 = vadd.f32 %v314, %v346
    %v351 = vadd.f32 %v315, %v347
    %v352 = vadd.f32 %v316, %v348
    %v353 = vadd.f32 %v317, %v349
    %s354 = sld [smem:[#allocation4 + $0x2d]]
    %v355 = vstv %s354
    %v356 = vmul.f32 %v343, %v355
    %v357 = vmul.f32 %v342, %v355
    %v358 = vmul.f32 %v341, %v355
    %v359 = vmul.f32 %v340, %v355
    %v360 = vadd.f32 %v324, %v356
    %v361 = vadd.f32 %v325, %v357
    %v362 = vadd.f32 %v326, %v358
    %v363 = vadd.f32 %v327, %v359
    %364 = vrot.lane.b32.xlu0 %v328, 22
    %v365 = vpop.permute.xlu0 %364
    %366 = vrot.lane.b32.xlu0 %v329, 22
    %v367 = vpop.permute.xlu0 %366
    %368 = vrot.lane.b32.xlu0 %v330, 22
    %v369 = vpop.permute.xlu0 %368
    %370 = vrot.lane.b32.xlu0 %v331, 22
    %v371 = vpop.permute.xlu0 %370
    %v372 = vsel %vm85, %v369, %v371
    %v373 = vsel %vm85, %v367, %v369
    %v374 = vsel %vm85, %v365, %v367
    %v375 = vsel %vm85, %v371, %v365
    %s376 = sld [smem:[#allocation4 + $0xa]]
    %v377 = vstv %s376
    %v378 = vmul.f32 %v375, %v377
    %v379 = vmul.f32 %v374, %v377
    %v380 = vmul.f32 %v373, %v377
    %v381 = vmul.f32 %v372, %v377
    %v382 = vadd.f32 %v350, %v378
    %v383 = vadd.f32 %v351, %v379
    %v384 = vadd.f32 %v352, %v380
    %v385 = vadd.f32 %v353, %v381
    %s386 = sld [smem:[#allocation4 + $0x2e]]
    %v387 = vstv %s386
    %v388 = vmul.f32 %v375, %v387
    %v389 = vmul.f32 %v374, %v387
    %v390 = vmul.f32 %v373, %v387
    %v391 = vmul.f32 %v372, %v387
    %v392 = vadd.f32 %v360, %v388
    %v393 = vadd.f32 %v361, %v389
    %v394 = vadd.f32 %v362, %v390
    %v395 = vadd.f32 %v363, %v391
    %396 = vrot.lane.b32.xlu0 %v328, 21
    %v397 = vpop.permute.xlu0 %396
    %398 = vrot.lane.b32.xlu0 %v329, 21
    %v399 = vpop.permute.xlu0 %398
    %400 = vrot.lane.b32.xlu0 %v330, 21
    %v401 = vpop.permute.xlu0 %400
    %402 = vrot.lane.b32.xlu0 %v331, 21
    %v403 = vpop.permute.xlu0 %402
    %v404 = vsel %vm118, %v401, %v403
    %v405 = vsel %vm118, %v399, %v401
    %v406 = vsel %vm118, %v397, %v399
    %v407 = vsel %vm118, %v403, %v397
    %s408 = sld [smem:[#allocation4 + $0xb]]
    %v409 = vstv %s408
    %v410 = vmul.f32 %v407, %v409
    %v411 = vmul.f32 %v406, %v409
    %v412 = vmul.f32 %v405, %v409
    %v413 = vmul.f32 %v404, %v409
    %v414 = vadd.f32 %v382, %v410
    %v415 = vadd.f32 %v383, %v411
    %v416 = vadd.f32 %v384, %v412
    %v417 = vadd.f32 %v385, %v413
    %s418 = sld [smem:[#allocation4 + $0x2f]]
    %v419 = vstv %s418
    %v420 = vmul.f32 %v407, %v419
    %v421 = vmul.f32 %v406, %v419
    %v422 = vmul.f32 %v405, %v419
    %v423 = vmul.f32 %v404, %v419
    %v424 = vadd.f32 %v392, %v420
    %v425 = vadd.f32 %v393, %v421
    %v426 = vadd.f32 %v394, %v422
    %v427 = vadd.f32 %v395, %v423
    %428 = vrot.lane.b32.xlu0 %v328, 1
    %v429 = vpop.permute.xlu0 %428
    %430 = vrot.lane.b32.xlu0 %v329, 1
    %v431 = vpop.permute.xlu0 %430
    %432 = vrot.lane.b32.xlu0 %v330, 1
    %v433 = vpop.permute.xlu0 %432
    %434 = vrot.lane.b32.xlu0 %v331, 1
    %v435 = vpop.permute.xlu0 %434
    %v436 = vsel %vm151, %v433, %v435
    %v437 = vsel %vm151, %v431, %v433
    %v438 = vsel %vm151, %v429, %v431
    %v439 = vsel %vm151, %v435, %v429
    %s440 = sld [smem:[#allocation4 + $0xc]]
    %v441 = vstv %s440
    %v442 = vmul.f32 %v439, %v441
    %v443 = vmul.f32 %v438, %v441
    %v444 = vmul.f32 %v437, %v441
    %v445 = vmul.f32 %v436, %v441
    %v446 = vadd.f32 %v414, %v442
    %v447 = vadd.f32 %v415, %v443
    %v448 = vadd.f32 %v416, %v444
    %v449 = vadd.f32 %v417, %v445
    %s450 = sld [smem:[#allocation4 + $0x30]]
    %v451 = vstv %s450
    %v452 = vmul.f32 %v439, %v451
    %v453 = vmul.f32 %v438, %v451
    %v454 = vmul.f32 %v437, %v451
    %v455 = vmul.f32 %v436, %v451
    %v456 = vadd.f32 %v424, %v452
    %v457 = vadd.f32 %v425, %v453
    %v458 = vadd.f32 %v426, %v454
    %v459 = vadd.f32 %v427, %v455
    %s460 = sld [smem:[#allocation4 + $0xd]]
    %v461 = vstv %s460
    %v462 = vmul.f32 %v328, %v461
    %v463 = vmul.f32 %v329, %v461
    %v464 = vmul.f32 %v330, %v461
    %v465 = vmul.f32 %v331, %v461
    %v466 = vadd.f32 %v446, %v462
    %v467 = vadd.f32 %v447, %v463
    %v468 = vadd.f32 %v448, %v464
    %v469 = vadd.f32 %v449, %v465
    %s470 = sld [smem:[#allocation4 + $0x31]]
    %v471 = vstv %s470
    %v472 = vmul.f32 %v328, %v471
    %v473 = vmul.f32 %v329, %v471
    %v474 = vmul.f32 %v330, %v471
    %v475 = vmul.f32 %v331, %v471
    %v476 = vadd.f32 %v456, %v472
    %v477 = vadd.f32 %v457, %v473
    %v478 = vadd.f32 %v458, %v474
    %v479 = vadd.f32 %v459, %v475
    %480 = vrot.lane.b32.xlu0 %v328, 127
    %v481 = vpop.permute.xlu0 %480
    %482 = vrot.lane.b32.xlu0 %v329, 127
    %v483 = vpop.permute.xlu0 %482
    %484 = vrot.lane.b32.xlu0 %v330, 127
    %v485 = vpop.permute.xlu0 %484
    %486 = vrot.lane.b32.xlu0 %v331, 127
    %v487 = vpop.permute.xlu0 %486
    %v488 = vsel %vm204, %v485, %v487
    %v489 = vsel %vm204, %v483, %v485
    %v490 = vsel %vm204, %v481, %v483
    %v491 = vsel %vm204, %v487, %v481
    %s492 = sld [smem:[#allocation4 + $0xe]]
    %v493 = vstv %s492
    %v494 = vmul.f32 %v490, %v493
    %v495 = vmul.f32 %v489, %v493
    %v496 = vmul.f32 %v488, %v493
    %v497 = vmul.f32 %v491, %v493
    %v498 = vadd.f32 %v466, %v494
    %v499 = vadd.f32 %v467, %v495
    %v500 = vadd.f32 %v468, %v496
    %v501 = vadd.f32 %v469, %v497
    %s502 = sld [smem:[#allocation4 + $0x32]]
    %v503 = vstv %s502
    %v504 = vmul.f32 %v490, %v503
    %v505 = vmul.f32 %v489, %v503
    %v506 = vmul.f32 %v488, %v503
    %v507 = vmul.f32 %v491, %v503
    %v508 = vadd.f32 %v476, %v504
    %v509 = vadd.f32 %v477, %v505
    %v510 = vadd.f32 %v478, %v506
    %v511 = vadd.f32 %v479, %v507
    %512 = vrot.lane.b32.xlu0 %v328, 107
    %v513 = vpop.permute.xlu0 %512
    %514 = vrot.lane.b32.xlu0 %v329, 107
    %v515 = vpop.permute.xlu0 %514
    %516 = vrot.lane.b32.xlu0 %v330, 107
    %v517 = vpop.permute.xlu0 %516
    %518 = vrot.lane.b32.xlu0 %v331, 107
    %v519 = vpop.permute.xlu0 %518
    %v520 = vsel %vm237, %v517, %v519
    %v521 = vsel %vm237, %v515, %v517
    %v522 = vsel %vm237, %v513, %v515
    %v523 = vsel %vm237, %v519, %v513
    %s524 = sld [smem:[#allocation4 + $0xf]]
    %v525 = vstv %s524
    %v526 = vmul.f32 %v522, %v525
    %v527 = vmul.f32 %v521, %v525
    %v528 = vmul.f32 %v520, %v525
    %v529 = vmul.f32 %v523, %v525
    %v530 = vadd.f32 %v498, %v526
    %v531 = vadd.f32 %v499, %v527
    %v532 = vadd.f32 %v500, %v528
    %v533 = vadd.f32 %v501, %v529
    %s534 = sld [smem:[#allocation4 + $0x33]]
    %v535 = vstv %s534
    %v536 = vmul.f32 %v522, %v535
    %v537 = vmul.f32 %v521, %v535
    %v538 = vmul.f32 %v520, %v535
    %v539 = vmul.f32 %v523, %v535
    %v540 = vadd.f32 %v508, %v536
    %v541 = vadd.f32 %v509, %v537
    %v542 = vadd.f32 %v510, %v538
    %v543 = vadd.f32 %v511, %v539
    %544 = vrot.lane.b32.xlu0 %v328, 106
    %v545 = vpop.permute.xlu0 %544
    %546 = vrot.lane.b32.xlu0 %v329, 106
    %v547 = vpop.permute.xlu0 %546
    %548 = vrot.lane.b32.xlu0 %v330, 106
    %v549 = vpop.permute.xlu0 %548
    %550 = vrot.lane.b32.xlu0 %v331, 106
    %v551 = vpop.permute.xlu0 %550
    %v552 = vsel %vm270, %v549, %v551
    %v553 = vsel %vm270, %v547, %v549
    %v554 = vsel %vm270, %v545, %v547
    %v555 = vsel %vm270, %v551, %v545
    %s556 = sld [smem:[#allocation4 + $0x10]]
    %v557 = vstv %s556
    %v558 = vmul.f32 %v554, %v557
    %v559 = vmul.f32 %v553, %v557
    %v560 = vmul.f32 %v552, %v557
    %v561 = vmul.f32 %v555, %v557
    %v562 = vadd.f32 %v530, %v558
    %v563 = vadd.f32 %v531, %v559
    %v564 = vadd.f32 %v532, %v560
    %v565 = vadd.f32 %v533, %v561
    %s566 = sld [smem:[#allocation4 + $0x34]]
    %v567 = vstv %s566
    %v568 = vmul.f32 %v554, %v567
    %v569 = vmul.f32 %v553, %v567
    %v570 = vmul.f32 %v552, %v567
    %v571 = vmul.f32 %v555, %v567
    %v572 = vadd.f32 %v540, %v568
    %v573 = vadd.f32 %v541, %v569
    %v574 = vadd.f32 %v542, %v570
    %v575 = vadd.f32 %v543, %v571
    %576 = vrot.lane.b32.xlu0 %v328, 105
    %v577 = vpop.permute.xlu0 %576
    %578 = vrot.lane.b32.xlu0 %v329, 105
    %v579 = vpop.permute.xlu0 %578
    %580 = vrot.lane.b32.xlu0 %v330, 105
    %v581 = vpop.permute.xlu0 %580
    %582 = vrot.lane.b32.xlu0 %v331, 105
    %v583 = vpop.permute.xlu0 %582
    %v584 = vsel %vm303, %v581, %v583
    %v585 = vsel %vm303, %v579, %v581
    %v586 = vsel %vm303, %v577, %v579
    %v587 = vsel %vm303, %v583, %v577
    %s588 = sld [smem:[#allocation4 + $0x11]]
    %v589 = vstv %s588
    %v590 = vmul.f32 %v586, %v589
    %v591 = vmul.f32 %v585, %v589
    %v592 = vmul.f32 %v584, %v589
    %v593 = vmul.f32 %v587, %v589
    %v594 = vadd.f32 %v562, %v590
    %v595 = vadd.f32 %v563, %v591
    %v596 = vadd.f32 %v564, %v592
    %v597 = vadd.f32 %v565, %v593
    %s598 = sld [smem:[#allocation4 + $0x35]]
    %v599 = vstv %s598
    %v600 = vmul.f32 %v586, %v599
    %v601 = vmul.f32 %v585, %v599
    %v602 = vmul.f32 %v584, %v599
    %v603 = vmul.f32 %v587, %v599
    %v604 = vadd.f32 %v572, %v600
    %v605 = vadd.f32 %v573, %v601
    %v606 = vadd.f32 %v574, %v602
    %v607 = vadd.f32 %v575, %v603
    %v608 = vld [vmem:[%s0 + $0x40] sm:$0xff]
    %v609 = vld [vmem:[%s0 + $0x48] sm:$0xff]
    %v610 = vld [vmem:[%s0 + $0x50] sm:$0xff]
    %v611 = vld [vmem:[%s0 + $0x58] sm:$0xff]
    %612 = vrot.lane.b32.xlu0 %v608, 23
    %v613 = vpop.permute.xlu0 %612
    %614 = vrot.lane.b32.xlu0 %v609, 23
    %v615 = vpop.permute.xlu0 %614
    %616 = vrot.lane.b32.xlu0 %v610, 23
    %v617 = vpop.permute.xlu0 %616
    %618 = vrot.lane.b32.xlu0 %v611, 23
    %v619 = vpop.permute.xlu0 %618
    %v620 = vsel %vm60, %v617, %v619
    %v621 = vsel %vm60, %v615, %v617
    %v622 = vsel %vm60, %v613, %v615
    %v623 = vsel %vm60, %v619, %v613
    %s624 = sld [smem:[#allocation4 + $0x12]]
    %v625 = vstv %s624
    %v626 = vmul.f32 %v623, %v625
    %v627 = vmul.f32 %v622, %v625
    %v628 = vmul.f32 %v621, %v625
    %v629 = vmul.f32 %v620, %v625
    %v630 = vadd.f32 %v594, %v626
    %v631 = vadd.f32 %v595, %v627
    %v632 = vadd.f32 %v596, %v628
    %v633 = vadd.f32 %v597, %v629
    %s634 = sld [smem:[#allocation4 + $0x36]]
    %v635 = vstv %s634
    %v636 = vmul.f32 %v623, %v635
    %v637 = vmul.f32 %v622, %v635
    %v638 = vmul.f32 %v621, %v635
    %v639 = vmul.f32 %v620, %v635
    %v640 = vadd.f32 %v604, %v636
    %v641 = vadd.f32 %v605, %v637
    %v642 = vadd.f32 %v606, %v638
    %v643 = vadd.f32 %v607, %v639
    %644 = vrot.lane.b32.xlu0 %v608, 22
    %v645 = vpop.permute.xlu0 %644
    %646 = vrot.lane.b32.xlu0 %v609, 22
    %v647 = vpop.permute.xlu0 %646
    %648 = vrot.lane.b32.xlu0 %v610, 22
    %v649 = vpop.permute.xlu0 %648
    %650 = vrot.lane.b32.xlu0 %v611, 22
    %v651 = vpop.permute.xlu0 %650
    %v652 = vsel %vm85, %v649, %v651
    %v653 = vsel %vm85, %v647, %v649
    %v654 = vsel %vm85, %v645, %v647
    %v655 = vsel %vm85, %v651, %v645
    %s656 = sld [smem:[#allocation4 + $0x13]]
    %v657 = vstv %s656
    %v658 = vmul.f32 %v655, %v657
    %v659 = vmul.f32 %v654, %v657
    %v660 = vmul.f32 %v653, %v657
    %v661 = vmul.f32 %v652, %v657
    %v662 = vadd.f32 %v630, %v658
    %v663 = vadd.f32 %v631, %v659
    %v664 = vadd.f32 %v632, %v660
    %v665 = vadd.f32 %v633, %v661
    %s666 = sld [smem:[#allocation4 + $0x37]]
    %v667 = vstv %s666
    %v668 = vmul.f32 %v655, %v667
    %v669 = vmul.f32 %v654, %v667
    %v670 = vmul.f32 %v653, %v667
    %v671 = vmul.f32 %v652, %v667
    %v672 = vadd.f32 %v640, %v668
    %v673 = vadd.f32 %v641, %v669
    %v674 = vadd.f32 %v642, %v670
    %v675 = vadd.f32 %v643, %v671
    %676 = vrot.lane.b32.xlu0 %v608, 21
    %v677 = vpop.permute.xlu0 %676
    %678 = vrot.lane.b32.xlu0 %v609, 21
    %v679 = vpop.permute.xlu0 %678
    %680 = vrot.lane.b32.xlu0 %v610, 21
    %v681 = vpop.permute.xlu0 %680
    %682 = vrot.lane.b32.xlu0 %v611, 21
    %v683 = vpop.permute.xlu0 %682
    %v684 = vsel %vm118, %v681, %v683
    %v685 = vsel %vm118, %v679, %v681
    %v686 = vsel %vm118, %v677, %v679
    %v687 = vsel %vm118, %v683, %v677
    %s688 = sld [smem:[#allocation4 + $0x14]]
    %v689 = vstv %s688
    %v690 = vmul.f32 %v687, %v689
    %v691 = vmul.f32 %v686, %v689
    %v692 = vmul.f32 %v685, %v689
    %v693 = vmul.f32 %v684, %v689
    %v694 = vadd.f32 %v662, %v690
    %v695 = vadd.f32 %v663, %v691
    %v696 = vadd.f32 %v664, %v692
    %v697 = vadd.f32 %v665, %v693
    %s698 = sld [smem:[#allocation4 + $0x38]]
    %v699 = vstv %s698
    %v700 = vmul.f32 %v687, %v699
    %v701 = vmul.f32 %v686, %v699
    %v702 = vmul.f32 %v685, %v699
    %v703 = vmul.f32 %v684, %v699
    %v704 = vadd.f32 %v672, %v700
    %v705 = vadd.f32 %v673, %v701
    %v706 = vadd.f32 %v674, %v702
    %v707 = vadd.f32 %v675, %v703
    %708 = vrot.lane.b32.xlu0 %v608, 1
    %v709 = vpop.permute.xlu0 %708
    %710 = vrot.lane.b32.xlu0 %v609, 1
    %v711 = vpop.permute.xlu0 %710
    %712 = vrot.lane.b32.xlu0 %v610, 1
    %v713 = vpop.permute.xlu0 %712
    %714 = vrot.lane.b32.xlu0 %v611, 1
    %v715 = vpop.permute.xlu0 %714
    %v716 = vsel %vm151, %v713, %v715
    %v717 = vsel %vm151, %v711, %v713
    %v718 = vsel %vm151, %v709, %v711
    %v719 = vsel %vm151, %v715, %v709
    %s720 = sld [smem:[#allocation4 + $0x15]]
    %v721 = vstv %s720
    %v722 = vmul.f32 %v719, %v721
    %v723 = vmul.f32 %v718, %v721
    %v724 = vmul.f32 %v717, %v721
    %v725 = vmul.f32 %v716, %v721
    %v726 = vadd.f32 %v694, %v722
    %v727 = vadd.f32 %v695, %v723
    %v728 = vadd.f32 %v696, %v724
    %v729 = vadd.f32 %v697, %v725
    %s730 = sld [smem:[#allocation4 + $0x39]]
    %v731 = vstv %s730
    %v732 = vmul.f32 %v719, %v731
    %v733 = vmul.f32 %v718, %v731
    %v734 = vmul.f32 %v717, %v731
    %v735 = vmul.f32 %v716, %v731
    %v736 = vadd.f32 %v704, %v732
    %v737 = vadd.f32 %v705, %v733
    %v738 = vadd.f32 %v706, %v734
    %v739 = vadd.f32 %v707, %v735
    %s740 = sld [smem:[#allocation4 + $0x16]]
    %v741 = vstv %s740
    %v742 = vmul.f32 %v608, %v741
    %v743 = vmul.f32 %v609, %v741
    %v744 = vmul.f32 %v610, %v741
    %v745 = vmul.f32 %v611, %v741
    %v746 = vadd.f32 %v726, %v742
    %v747 = vadd.f32 %v727, %v743
    %v748 = vadd.f32 %v728, %v744
    %v749 = vadd.f32 %v729, %v745
    %s750 = sld [smem:[#allocation4 + $0x3a]]
    %v751 = vstv %s750
    %v752 = vmul.f32 %v608, %v751
    %v753 = vmul.f32 %v609, %v751
    %v754 = vmul.f32 %v610, %v751
    %v755 = vmul.f32 %v611, %v751
    %v756 = vadd.f32 %v736, %v752
    %v757 = vadd.f32 %v737, %v753
    %v758 = vadd.f32 %v738, %v754
    %v759 = vadd.f32 %v739, %v755
    %760 = vrot.lane.b32.xlu0 %v608, 127
    %v761 = vpop.permute.xlu0 %760
    %762 = vrot.lane.b32.xlu0 %v609, 127
    %v763 = vpop.permute.xlu0 %762
    %764 = vrot.lane.b32.xlu0 %v610, 127
    %v765 = vpop.permute.xlu0 %764
    %766 = vrot.lane.b32.xlu0 %v611, 127
    %v767 = vpop.permute.xlu0 %766
    %v768 = vsel %vm204, %v765, %v767
    %v769 = vsel %vm204, %v763, %v765
    %v770 = vsel %vm204, %v761, %v763
    %v771 = vsel %vm204, %v767, %v761
    %s772 = sld [smem:[#allocation4 + $0x17]]
    %v773 = vstv %s772
    %v774 = vmul.f32 %v770, %v773
    %v775 = vmul.f32 %v769, %v773
    %v776 = vmul.f32 %v768, %v773
    %v777 = vmul.f32 %v771, %v773
    %v778 = vadd.f32 %v746, %v774
    %v779 = vadd.f32 %v747, %v775
    %v780 = vadd.f32 %v748, %v776
    %v781 = vadd.f32 %v749, %v777
    %s782 = sld [smem:[#allocation4 + $0x3b]]
    %v783 = vstv %s782
    %v784 = vmul.f32 %v770, %v783
    %v785 = vmul.f32 %v769, %v783
    %v786 = vmul.f32 %v768, %v783
    %v787 = vmul.f32 %v771, %v783
    %v788 = vadd.f32 %v756, %v784
    %v789 = vadd.f32 %v757, %v785
    %v790 = vadd.f32 %v758, %v786
    %v791 = vadd.f32 %v759, %v787
    %792 = vrot.lane.b32.xlu0 %v608, 107
    %v793 = vpop.permute.xlu0 %792
    %794 = vrot.lane.b32.xlu0 %v609, 107
    %v795 = vpop.permute.xlu0 %794
    %796 = vrot.lane.b32.xlu0 %v610, 107
    %v797 = vpop.permute.xlu0 %796
    %798 = vrot.lane.b32.xlu0 %v611, 107
    %v799 = vpop.permute.xlu0 %798
    %v800 = vsel %vm237, %v797, %v799
    %v801 = vsel %vm237, %v795, %v797
    %v802 = vsel %vm237, %v793, %v795
    %v803 = vsel %vm237, %v799, %v793
    %s804 = sld [smem:[#allocation4 + $0x18]]
    %v805 = vstv %s804
    %v806 = vmul.f32 %v802, %v805
    %v807 = vmul.f32 %v801, %v805
    %v808 = vmul.f32 %v800, %v805
    %v809 = vmul.f32 %v803, %v805
    %v810 = vadd.f32 %v778, %v806
    %v811 = vadd.f32 %v779, %v807
    %v812 = vadd.f32 %v780, %v808
    %v813 = vadd.f32 %v781, %v809
    %s814 = sld [smem:[#allocation4 + $0x3c]]
    %v815 = vstv %s814
    %v816 = vmul.f32 %v802, %v815
    %v817 = vmul.f32 %v801, %v815
    %v818 = vmul.f32 %v800, %v815
    %v819 = vmul.f32 %v803, %v815
    %v820 = vadd.f32 %v788, %v816
    %v821 = vadd.f32 %v789, %v817
    %v822 = vadd.f32 %v790, %v818
    %v823 = vadd.f32 %v791, %v819
    %824 = vrot.lane.b32.xlu0 %v608, 106
    %v825 = vpop.permute.xlu0 %824
    %826 = vrot.lane.b32.xlu0 %v609, 106
    %v827 = vpop.permute.xlu0 %826
    %828 = vrot.lane.b32.xlu0 %v610, 106
    %v829 = vpop.permute.xlu0 %828
    %830 = vrot.lane.b32.xlu0 %v611, 106
    %v831 = vpop.permute.xlu0 %830
    %v832 = vsel %vm270, %v829, %v831
    %v833 = vsel %vm270, %v827, %v829
    %v834 = vsel %vm270, %v825, %v827
    %v835 = vsel %vm270, %v831, %v825
    %s836 = sld [smem:[#allocation4 + $0x19]]
    %v837 = vstv %s836
    %v838 = vmul.f32 %v834, %v837
    %v839 = vmul.f32 %v833, %v837
    %v840 = vmul.f32 %v832, %v837
    %v841 = vmul.f32 %v835, %v837
    %v842 = vadd.f32 %v810, %v838
    %v843 = vadd.f32 %v811, %v839
    %v844 = vadd.f32 %v812, %v840
    %v845 = vadd.f32 %v813, %v841
    %s846 = sld [smem:[#allocation4 + $0x3d]]
    %v847 = vstv %s846
    %v848 = vmul.f32 %v834, %v847
    %v849 = vmul.f32 %v833, %v847
    %v850 = vmul.f32 %v832, %v847
    %v851 = vmul.f32 %v835, %v847
    %v852 = vadd.f32 %v820, %v848
    %v853 = vadd.f32 %v821, %v849
    %v854 = vadd.f32 %v822, %v850
    %v855 = vadd.f32 %v823, %v851
    %856 = vrot.lane.b32.xlu0 %v608, 105
    %v857 = vpop.permute.xlu0 %856
    %858 = vrot.lane.b32.xlu0 %v609, 105
    %v859 = vpop.permute.xlu0 %858
    %860 = vrot.lane.b32.xlu0 %v610, 105
    %v861 = vpop.permute.xlu0 %860
    %862 = vrot.lane.b32.xlu0 %v611, 105
    %v863 = vpop.permute.xlu0 %862
    %v864 = vsel %vm303, %v861, %v863
    %v865 = vsel %vm303, %v859, %v861
    %v866 = vsel %vm303, %v857, %v859
    %v867 = vsel %vm303, %v863, %v857
    %s868 = sld [smem:[#allocation4 + $0x1a]]
    %v869 = vstv %s868
    %v870 = vmul.f32 %v866, %v869
    %v871 = vmul.f32 %v865, %v869
    %v872 = vmul.f32 %v864, %v869
    %v873 = vmul.f32 %v867, %v869
    %v874 = vadd.f32 %v842, %v870
    %v875 = vadd.f32 %v843, %v871
    %v876 = vadd.f32 %v844, %v872
    %v877 = vadd.f32 %v845, %v873
    %s878 = sld [smem:[#allocation4 + $0x3e]]
    %v879 = vstv %s878
    %v880 = vmul.f32 %v866, %v879
    %v881 = vmul.f32 %v865, %v879
    %v882 = vmul.f32 %v864, %v879
    %v883 = vmul.f32 %v867, %v879
    %v884 = vadd.f32 %v852, %v880
    %v885 = vadd.f32 %v853, %v881
    %v886 = vadd.f32 %v854, %v882
    %v887 = vadd.f32 %v855, %v883
    %v888 = vld [vmem:[%s0 + $0x60] sm:$0xff]
    %v889 = vld [vmem:[%s0 + $0x68] sm:$0xff]
    %v890 = vld [vmem:[%s0 + $0x70] sm:$0xff]
    %v891 = vld [vmem:[%s0 + $0x78] sm:$0xff]
    %892 = vrot.lane.b32.xlu0 %v888, 23
    %v893 = vpop.permute.xlu0 %892
    %894 = vrot.lane.b32.xlu0 %v889, 23
    %v895 = vpop.permute.xlu0 %894
    %896 = vrot.lane.b32.xlu0 %v890, 23
    %v897 = vpop.permute.xlu0 %896
    %898 = vrot.lane.b32.xlu0 %v891, 23
    %v899 = vpop.permute.xlu0 %898
    %v900 = vsel %vm60, %v897, %v899
    %v901 = vsel %vm60, %v895, %v897
    %v902 = vsel %vm60, %v893, %v895
    %v903 = vsel %vm60, %v899, %v893
    %s904 = sld [smem:[#allocation4 + $0x1b]]
    %v905 = vstv %s904
    %v906 = vmul.f32 %v903, %v905
    %v907 = vmul.f32 %v902, %v905
    %v908 = vmul.f32 %v901, %v905
    %v909 = vmul.f32 %v900, %v905
    %v910 = vadd.f32 %v874, %v906
    %v911 = vadd.f32 %v875, %v907
    %v912 = vadd.f32 %v876, %v908
    %v913 = vadd.f32 %v877, %v909
    %s914 = sld [smem:[#allocation4 + $0x3f]]
    %v915 = vstv %s914
    %v916 = vmul.f32 %v903, %v915
    %v917 = vmul.f32 %v902, %v915
    %v918 = vmul.f32 %v901, %v915
    %v919 = vmul.f32 %v900, %v915
    %v920 = vadd.f32 %v884, %v916
    %v921 = vadd.f32 %v885, %v917
    %v922 = vadd.f32 %v886, %v918
    %v923 = vadd.f32 %v887, %v919
    %924 = vrot.lane.b32.xlu0 %v888, 22
    %v925 = vpop.permute.xlu0 %924
    %926 = vrot.lane.b32.xlu0 %v889, 22
    %v927 = vpop.permute.xlu0 %926
    %928 = vrot.lane.b32.xlu0 %v890, 22
    %v929 = vpop.permute.xlu0 %928
    %930 = vrot.lane.b32.xlu0 %v891, 22
    %v931 = vpop.permute.xlu0 %930
    %v932 = vsel %vm85, %v929, %v931
    %v933 = vsel %vm85, %v927, %v929
    %v934 = vsel %vm85, %v925, %v927
    %v935 = vsel %vm85, %v931, %v925
    %s936 = sld [smem:[#allocation4 + $0x1c]]
    %v937 = vstv %s936
    %v938 = vmul.f32 %v935, %v937
    %v939 = vmul.f32 %v934, %v937
    %v940 = vmul.f32 %v933, %v937
    %v941 = vmul.f32 %v932, %v937
    %v942 = vadd.f32 %v910, %v938
    %v943 = vadd.f32 %v911, %v939
    %v944 = vadd.f32 %v912, %v940
    %v945 = vadd.f32 %v913, %v941
    %s946 = sld [smem:[#allocation4 + $0x40]]
    %v947 = vstv %s946
    %v948 = vmul.f32 %v935, %v947
    %v949 = vmul.f32 %v934, %v947
    %v950 = vmul.f32 %v933, %v947
    %v951 = vmul.f32 %v932, %v947
    %v952 = vadd.f32 %v920, %v948
    %v953 = vadd.f32 %v921, %v949
    %v954 = vadd.f32 %v922, %v950
    %v955 = vadd.f32 %v923, %v951
    %956 = vrot.lane.b32.xlu0 %v888, 21
    %v957 = vpop.permute.xlu0 %956
    %958 = vrot.lane.b32.xlu0 %v889, 21
    %v959 = vpop.permute.xlu0 %958
    %960 = vrot.lane.b32.xlu0 %v890, 21
    %v961 = vpop.permute.xlu0 %960
    %962 = vrot.lane.b32.xlu0 %v891, 21
    %v963 = vpop.permute.xlu0 %962
    %v964 = vsel %vm118, %v961, %v963
    %v965 = vsel %vm118, %v959, %v961
    %v966 = vsel %vm118, %v957, %v959
    %v967 = vsel %vm118, %v963, %v957
    %s968 = sld [smem:[#allocation4 + $0x1d]]
    %v969 = vstv %s968
    %v970 = vmul.f32 %v967, %v969
    %v971 = vmul.f32 %v966, %v969
    %v972 = vmul.f32 %v965, %v969
    %v973 = vmul.f32 %v964, %v969
    %v974 = vadd.f32 %v942, %v970
    %v975 = vadd.f32 %v943, %v971
    %v976 = vadd.f32 %v944, %v972
    %v977 = vadd.f32 %v945, %v973
    %s978 = sld [smem:[#allocation4 + $0x41]]
    %v979 = vstv %s978
    %v980 = vmul.f32 %v967, %v979
    %v981 = vmul.f32 %v966, %v979
    %v982 = vmul.f32 %v965, %v979
    %v983 = vmul.f32 %v964, %v979
    %v984 = vadd.f32 %v952, %v980
    %v985 = vadd.f32 %v953, %v981
    %v986 = vadd.f32 %v954, %v982
    %v987 = vadd.f32 %v955, %v983
    %988 = vrot.lane.b32.xlu0 %v888, 1
    %v989 = vpop.permute.xlu0 %988
    %990 = vrot.lane.b32.xlu0 %v889, 1
    %v991 = vpop.permute.xlu0 %990
    %992 = vrot.lane.b32.xlu0 %v890, 1
    %v993 = vpop.permute.xlu0 %992
    %994 = vrot.lane.b32.xlu0 %v891, 1
    %v995 = vpop.permute.xlu0 %994
    %v996 = vsel %vm151, %v993, %v995
    %v997 = vsel %vm151, %v991, %v993
    %v998 = vsel %vm151, %v989, %v991
    %v999 = vsel %vm151, %v995, %v989
    %s1000 = sld [smem:[#allocation4 + $0x1e]]
    %v1001 = vstv %s1000
    %v1002 = vmul.f32 %v999, %v1001
    %v1003 = vmul.f32 %v998, %v1001
    %v1004 = vmul.f32 %v997, %v1001
    %v1005 = vmul.f32 %v996, %v1001
    %v1006 = vadd.f32 %v974, %v1002
    %v1007 = vadd.f32 %v975, %v1003
    %v1008 = vadd.f32 %v976, %v1004
    %v1009 = vadd.f32 %v977, %v1005
    %s1010 = sld [smem:[#allocation4 + $0x42]]
    %v1011 = vstv %s1010
    %v1012 = vmul.f32 %v999, %v1011
    %v1013 = vmul.f32 %v998, %v1011
    %v1014 = vmul.f32 %v997, %v1011
    %v1015 = vmul.f32 %v996, %v1011
    %v1016 = vadd.f32 %v984, %v1012
    %v1017 = vadd.f32 %v985, %v1013
    %v1018 = vadd.f32 %v986, %v1014
    %v1019 = vadd.f32 %v987, %v1015
    %s1020 = sld [smem:[#allocation4 + $0x1f]]
    %v1021 = vstv %s1020
    %v1022 = vmul.f32 %v888, %v1021
    %v1023 = vmul.f32 %v889, %v1021
    %v1024 = vmul.f32 %v890, %v1021
    %v1025 = vmul.f32 %v891, %v1021
    %v1026 = vadd.f32 %v1006, %v1022
    %v1027 = vadd.f32 %v1007, %v1023
    %v1028 = vadd.f32 %v1008, %v1024
    %v1029 = vadd.f32 %v1009, %v1025
    %s1030 = sld [smem:[#allocation4 + $0x43]]
    %v1031 = vstv %s1030
    %v1032 = vmul.f32 %v888, %v1031
    %v1033 = vmul.f32 %v889, %v1031
    %v1034 = vmul.f32 %v890, %v1031
    %v1035 = vmul.f32 %v891, %v1031
    %v1036 = vadd.f32 %v1016, %v1032
    %v1037 = vadd.f32 %v1017, %v1033
    %v1038 = vadd.f32 %v1018, %v1034
    %v1039 = vadd.f32 %v1019, %v1035
    %1040 = vrot.lane.b32.xlu0 %v888, 127
    %v1041 = vpop.permute.xlu0 %1040
    %1042 = vrot.lane.b32.xlu0 %v889, 127
    %v1043 = vpop.permute.xlu0 %1042
    %1044 = vrot.lane.b32.xlu0 %v890, 127
    %v1045 = vpop.permute.xlu0 %1044
    %1046 = vrot.lane.b32.xlu0 %v891, 127
    %v1047 = vpop.permute.xlu0 %1046
    %v1048 = vsel %vm204, %v1045, %v1047
    %v1049 = vsel %vm204, %v1043, %v1045
    %v1050 = vsel %vm204, %v1041, %v1043
    %v1051 = vsel %vm204, %v1047, %v1041
    %s1052 = sld [smem:[#allocation4 + $0x20]]
    %v1053 = vstv %s1052
    %v1054 = vmul.f32 %v1050, %v1053
    %v1055 = vmul.f32 %v1049, %v1053
    %v1056 = vmul.f32 %v1048, %v1053
    %v1057 = vmul.f32 %v1051, %v1053
    %v1058 = vadd.f32 %v1026, %v1054
    %v1059 = vadd.f32 %v1027, %v1055
    %v1060 = vadd.f32 %v1028, %v1056
    %v1061 = vadd.f32 %v1029, %v1057
    %s1062 = sld [smem:[#allocation4 + $0x44]]
    %v1063 = vstv %s1062
    %v1064 = vmul.f32 %v1050, %v1063
    %v1065 = vmul.f32 %v1049, %v1063
    %v1066 = vmul.f32 %v1048, %v1063
    %v1067 = vmul.f32 %v1051, %v1063
    %v1068 = vadd.f32 %v1036, %v1064
    %v1069 = vadd.f32 %v1037, %v1065
    %v1070 = vadd.f32 %v1038, %v1066
    %v1071 = vadd.f32 %v1039, %v1067
    %1072 = vrot.lane.b32.xlu0 %v888, 107
    %v1073 = vpop.permute.xlu0 %1072
    %1074 = vrot.lane.b32.xlu0 %v889, 107
    %v1075 = vpop.permute.xlu0 %1074
    %1076 = vrot.lane.b32.xlu0 %v890, 107
    %v1077 = vpop.permute.xlu0 %1076
    %1078 = vrot.lane.b32.xlu0 %v891, 107
    %v1079 = vpop.permute.xlu0 %1078
    %v1080 = vsel %vm237, %v1077, %v1079
    %v1081 = vsel %vm237, %v1075, %v1077
    %v1082 = vsel %vm237, %v1073, %v1075
    %v1083 = vsel %vm237, %v1079, %v1073
    %s1084 = sld [smem:[#allocation4 + $0x21]]
    %v1085 = vstv %s1084
    %v1086 = vmul.f32 %v1082, %v1085
    %v1087 = vmul.f32 %v1081, %v1085
    %v1088 = vmul.f32 %v1080, %v1085
    %v1089 = vmul.f32 %v1083, %v1085
    %v1090 = vadd.f32 %v1058, %v1086
    %v1091 = vadd.f32 %v1059, %v1087
    %v1092 = vadd.f32 %v1060, %v1088
    %v1093 = vadd.f32 %v1061, %v1089
    %s1094 = sld [smem:[#allocation4 + $0x45]]
    %v1095 = vstv %s1094
    %v1096 = vmul.f32 %v1082, %v1095
    %v1097 = vmul.f32 %v1081, %v1095
    %v1098 = vmul.f32 %v1080, %v1095
    %v1099 = vmul.f32 %v1083, %v1095
    %v1100 = vadd.f32 %v1068, %v1096
    %v1101 = vadd.f32 %v1069, %v1097
    %v1102 = vadd.f32 %v1070, %v1098
    %v1103 = vadd.f32 %v1071, %v1099
    %1104 = vrot.lane.b32.xlu0 %v888, 106
    %v1105 = vpop.permute.xlu0 %1104
    %1106 = vrot.lane.b32.xlu0 %v889, 106
    %v1107 = vpop.permute.xlu0 %1106
    %1108 = vrot.lane.b32.xlu0 %v890, 106
    %v1109 = vpop.permute.xlu0 %1108
    %1110 = vrot.lane.b32.xlu0 %v891, 106
    %v1111 = vpop.permute.xlu0 %1110
    %v1112 = vsel %vm270, %v1109, %v1111
    %v1113 = vsel %vm270, %v1107, %v1109
    %v1114 = vsel %vm270, %v1105, %v1107
    %v1115 = vsel %vm270, %v1111, %v1105
    %s1116 = sld [smem:[#allocation4 + $0x22]]
    %v1117 = vstv %s1116
    %v1118 = vmul.f32 %v1114, %v1117
    %v1119 = vmul.f32 %v1113, %v1117
    %v1120 = vmul.f32 %v1112, %v1117
    %v1121 = vmul.f32 %v1115, %v1117
    %v1122 = vadd.f32 %v1090, %v1118
    %v1123 = vadd.f32 %v1091, %v1119
    %v1124 = vadd.f32 %v1092, %v1120
    %v1125 = vadd.f32 %v1093, %v1121
    %s1126 = sld [smem:[#allocation4 + $0x46]]
    %v1127 = vstv %s1126
    %v1128 = vmul.f32 %v1114, %v1127
    %v1129 = vmul.f32 %v1113, %v1127
    %v1130 = vmul.f32 %v1112, %v1127
    %v1131 = vmul.f32 %v1115, %v1127
    %v1132 = vadd.f32 %v1100, %v1128
    %v1133 = vadd.f32 %v1101, %v1129
    %v1134 = vadd.f32 %v1102, %v1130
    %v1135 = vadd.f32 %v1103, %v1131
    %1136 = vrot.lane.b32.xlu0 %v888, 105
    %v1137 = vpop.permute.xlu0 %1136
    %1138 = vrot.lane.b32.xlu0 %v889, 105
    %v1139 = vpop.permute.xlu0 %1138
    %1140 = vrot.lane.b32.xlu0 %v890, 105
    %v1141 = vpop.permute.xlu0 %1140
    %1142 = vrot.lane.b32.xlu0 %v891, 105
    %v1143 = vpop.permute.xlu0 %1142
    %v1144 = vsel %vm303, %v1141, %v1143
    %v1145 = vsel %vm303, %v1139, %v1141
    %v1146 = vsel %vm303, %v1137, %v1139
    %v1147 = vsel %vm303, %v1143, %v1137
    %s1148 = sld [smem:[#allocation4 + $0x23]]
    %v1149 = vstv %s1148
    %v1150 = vmul.f32 %v1146, %v1149
    %v1151 = vmul.f32 %v1145, %v1149
    %v1152 = vmul.f32 %v1144, %v1149
    %v1153 = vmul.f32 %v1147, %v1149
    %v1154 = vadd.f32 %v1122, %v1150
    %v1155 = vadd.f32 %v1123, %v1151
    %v1156 = vadd.f32 %v1124, %v1152
    %v1157 = vadd.f32 %v1125, %v1153
    %s1158 = sld [smem:[#allocation4 + $0x47]]
    %v1159 = vstv %s1158
    %v1160 = vmul.f32 %v1146, %v1159
    %v1161 = vmul.f32 %v1145, %v1159
    %v1162 = vmul.f32 %v1144, %v1159
    %v1163 = vmul.f32 %v1147, %v1159
    %v1164 = vadd.f32 %v1132, %v1160
    %v1165 = vadd.f32 %v1133, %v1161
    %v1166 = vadd.f32 %v1134, %v1162
    %v1167 = vadd.f32 %v1135, %v1163
    %v1168 = vmul.f32 %v1154, %v42
    %v1169 = vmul.f32 %v1155, %v43
    %v1170 = vmul.f32 %v1156, %v44
    %v1171 = vmul.f32 %v1157, %v45
    %v1172 = vadd.f32 %v1168, %v1169
    %v1173 = vadd.f32 %v1172, %v1170
    %v1174 = vadd.f32 %v1173, %v1171
    %1175 = vadd.xlane.f32.xlu0 %v1174
    %v1176 = vpop.xlane.xlu0 %1175
    %v1177 = vrot.slane %v1176, 4
    %v1178 = vadd.f32 %v1176, %v1177
    %v1179 = vrot.slane %v1178, 2
    %v1180 = vadd.f32 %v1178, %v1179
    %v1181 = vrot.slane %v1180, 1
    %v1182 = vadd.f32 %v1180, %v1181
    %s1183 = vtos %v1182
    %v1184 = vstv %s1183
    %v1185 = vmul.f32 %v1184, 0.001953125
    %v1186 = vsub.f32 %v1154, %v1185
    %v1187 = vsub.f32 %v1155, %v1185
    %v1188 = vsub.f32 %v1156, %v1185
    %v1189 = vsub.f32 %v1157, %v1185
    %v1190 = vmul.f32 %v1186, %v42
    %v1191 = vmul.f32 %v1187, %v43
    %v1192 = vmul.f32 %v1188, %v44
    %v1193 = vmul.f32 %v1189, %v45
    %v1194 = vmul.f32 %v1190, %v1190
    %v1195 = vmul.f32 %v1191, %v1191
    %v1196 = vmul.f32 %v1192, %v1192
    %v1197 = vmul.f32 %v1193, %v1193
    %v1198 = vadd.f32 %v1194, %v1195
    %v1199 = vadd.f32 %v1198, %v1196
    %v1200 = vadd.f32 %v1199, %v1197
    %1201 = vadd.xlane.f32.xlu0 %v1200
    %v1202 = vpop.xlane.xlu0 %1201
    %v1203 = vrot.slane %v1202, 4
    %v1204 = vadd.f32 %v1202, %v1203
    %v1205 = vrot.slane %v1204, 2
    %v1206 = vadd.f32 %v1204, %v1205
    %v1207 = vrot.slane %v1206, 1
    %v1208 = vadd.f32 %v1206, %v1207
    %s1209 = vtos %v1208
    %v1210 = vstv %s1209
    %v1211 = vmul.f32 %v1210, 0.001953125
    %s1212 = sld [smem:[#allocation6]]
    %v1213 = vadd.f32 %v1211, 1e-05
    %v1214 = vrsqrt.pop %v1213
    %v1215 = vstv %s1212
    %v1216 = vmul.f32 %v1215, %v1214
    %v1217 = vmul.f32 %v1190, %v1216
    %v1218 = vmul.f32 %v1191, %v1216
    %v1219 = vmul.f32 %v1192, %v1216
    %v1220 = vmul.f32 %v1193, %v1216
    %s1221 = sld [smem:[#allocation6 + $0x2]]
    %v1222 = vstv %s1221
    %v1223 = vadd.f32 %v1217, %v1222
    %v1224 = vadd.f32 %v1218, %v1222
    %v1225 = vadd.f32 %v1219, %v1222
    %v1226 = vadd.f32 %v1220, %v1222
    %v1227 = vmax.f32 %v1223, 0.0
    %v1228 = vmax.f32 %v1224, 0.0
    %v1229 = vmax.f32 %v1225, 0.0
    %v1230 = vmax.f32 %v1226, 0.0
    %v1231 = vmul.f32 %v1227, %v42
    %v1232 = vmul.f32 %v1228, %v43
    %v1233 = vmul.f32 %v1229, %v44
    %v1234 = vmul.f32 %v1230, %v45
    %1235 = vst [vmem:[#allocation2] sm:$0xff] %v1231
    %1236 = vst [vmem:[#allocation2 + $0x8] sm:$0xff] %v1232
    %1237 = vst [vmem:[#allocation2 + $0x10] sm:$0xff] %v1233
    %1238 = vst [vmem:[#allocation2 + $0x18] sm:$0xff] %v1234
    %v1239 = vmul.f32 %v1164, %v42
    %v1240 = vmul.f32 %v1165, %v43
    %v1241 = vmul.f32 %v1166, %v44
    %v1242 = vmul.f32 %v1167, %v45
    %v1243 = vadd.f32 %v1239, %v1240
    %v1244 = vadd.f32 %v1243, %v1241
    %v1245 = vadd.f32 %v1244, %v1242
    %1246 = vadd.xlane.f32.xlu0 %v1245
    %v1247 = vpop.xlane.xlu0 %1246
    %v1248 = vrot.slane %v1247, 4
    %v1249 = vadd.f32 %v1247, %v1248
    %v1250 = vrot.slane %v1249, 2
    %v1251 = vadd.f32 %v1249, %v1250
    %v1252 = vrot.slane %v1251, 1
    %v1253 = vadd.f32 %v1251, %v1252
    %s1254 = vtos %v1253
    %v1255 = vstv %s1254
    %v1256 = vmul.f32 %v1255, 0.001953125
    %v1257 = vsub.f32 %v1164, %v1256
    %v1258 = vsub.f32 %v1165, %v1256
    %v1259 = vsub.f32 %v1166, %v1256
    %v1260 = vsub.f32 %v1167, %v1256
    %v1261 = vmul.f32 %v1257, %v42
    %v1262 = vmul.f32 %v1258, %v43
    %v1263 = vmul.f32 %v1259, %v44
    %v1264 = vmul.f32 %v1260, %v45
    %v1265 = vmul.f32 %v1261, %v1261
    %v1266 = vmul.f32 %v1262, %v1262
    %v1267 = vmul.f32 %v1263, %v1263
    %v1268 = vmul.f32 %v1264, %v1264
    %v1269 = vadd.f32 %v1265, %v1266
    %v1270 = vadd.f32 %v1269, %v1267
    %v1271 = vadd.f32 %v1270, %v1268
    %1272 = vadd.xlane.f32.xlu0 %v1271
    %v1273 = vpop.xlane.xlu0 %1272
    %v1274 = vrot.slane %v1273, 4
    %v1275 = vadd.f32 %v1273, %v1274
    %v1276 = vrot.slane %v1275, 2
    %v1277 = vadd.f32 %v1275, %v1276
    %v1278 = vrot.slane %v1277, 1
    %v1279 = vadd.f32 %v1277, %v1278
    %s1280 = vtos %v1279
    %v1281 = vstv %s1280
    %v1282 = vmul.f32 %v1281, 0.001953125
    %s1283 = sld [smem:[#allocation6 + $0x1]]
    %v1284 = vadd.f32 %v1282, 1e-05
    %v1285 = vrsqrt.pop %v1284
    %v1286 = vstv %s1283
    %v1287 = vmul.f32 %v1286, %v1285
    %v1288 = vmul.f32 %v1261, %v1287
    %v1289 = vmul.f32 %v1262, %v1287
    %v1290 = vmul.f32 %v1263, %v1287
    %v1291 = vmul.f32 %v1264, %v1287
    %s1292 = sld [smem:[#allocation6 + $0x3]]
    %v1293 = vstv %s1292
    %v1294 = vadd.f32 %v1288, %v1293
    %v1295 = vadd.f32 %v1289, %v1293
    %v1296 = vadd.f32 %v1290, %v1293
    %v1297 = vadd.f32 %v1291, %v1293
    %v1298 = vmax.f32 %v1294, 0.0
    %v1299 = vmax.f32 %v1295, 0.0
    %v1300 = vmax.f32 %v1296, 0.0
    %v1301 = vmax.f32 %v1297, 0.0
    %v1302 = vmul.f32 %v1298, %v42
    %v1303 = vmul.f32 %v1299, %v43
    %v1304 = vmul.f32 %v1300, %v44
    %v1305 = vmul.f32 %v1301, %v45
    %1306 = vst [vmem:[#allocation2 + $0x20] sm:$0xff] %v1302
    %1307 = vst [vmem:[#allocation2 + $0x28] sm:$0xff] %v1303
    %1308 = vst [vmem:[#allocation2 + $0x30] sm:$0xff] %v1304
    %1309 = vst [vmem:[#allocation2 + $0x38] sm:$0xff] %v1305
    %v1310 = vld [vmem:[#allocation2] sm:$0xff]
    %v1311 = vld [vmem:[#allocation2 + $0x8] sm:$0xff]
    %v1312 = vld [vmem:[#allocation2 + $0x10] sm:$0xff]
    %v1313 = vld [vmem:[#allocation2 + $0x18] sm:$0xff]
    %1314 = vrot.lane.b32.xlu0 %v1310, 46
    %v1315 = vpop.permute.xlu0 %1314
    %1316 = vrot.lane.b32.xlu0 %v1311, 46
    %v1317 = vpop.permute.xlu0 %1316
    %1318 = vrot.lane.b32.xlu0 %v1312, 46
    %v1319 = vpop.permute.xlu0 %1318
    %1320 = vrot.lane.b32.xlu0 %v1313, 46
    %v1321 = vpop.permute.xlu0 %1320
    %vm1322 = vcmp.lt.s32.totalorder %v59, 46
    %v1323 = vsel %vm1322, %v1319, %v1321
    %v1324 = vsel %vm1322, %v1317, %v1319
    %v1325 = vsel %vm1322, %v1315, %v1317
    %v1326 = vsel %vm1322, %v1321, %v1315
    %s1327 = sld [smem:[#allocation4 + $0x48]]
    %v1328 = vstv %s1327
    %v1329 = vmul.f32 %v1326, %v1328
    %v1330 = vmul.f32 %v1325, %v1328
    %v1331 = vmul.f32 %v1324, %v1328
    %v1332 = vmul.f32 %v1323, %v1328
    %s1333 = sld [smem:[#allocation4 + $0x5a]]
    %v1334 = vstv %s1333
    %v1335 = vmul.f32 %v1326, %v1334
    %v1336 = vmul.f32 %v1325, %v1334
    %v1337 = vmul.f32 %v1324, %v1334
    %v1338 = vmul.f32 %v1323, %v1334
    %1339 = vrot.lane.b32.xlu0 %v1310, 44
    %v1340 = vpop.permute.xlu0 %1339
    %1341 = vrot.lane.b32.xlu0 %v1311, 44
    %v1342 = vpop.permute.xlu0 %1341
    %1343 = vrot.lane.b32.xlu0 %v1312, 44
    %v1344 = vpop.permute.xlu0 %1343
    %1345 = vrot.lane.b32.xlu0 %v1313, 44
    %v1346 = vpop.permute.xlu0 %1345
    %vm1347 = vcmp.lt.s32.totalorder %v59, 44
    %v1348 = vsel %vm1347, %v1344, %v1346
    %v1349 = vsel %vm1347, %v1342, %v1344
    %v1350 = vsel %vm1347, %v1340, %v1342
    %v1351 = vsel %vm1347, %v1346, %v1340
    %s1352 = sld [smem:[#allocation4 + $0x49]]
    %v1353 = vstv %s1352
    %v1354 = vmul.f32 %v1351, %v1353
    %v1355 = vmul.f32 %v1350, %v1353
    %v1356 = vmul.f32 %v1349, %v1353
    %v1357 = vmul.f32 %v1348, %v1353
    %v1358 = vadd.f32 %v1329, %v1354
    %v1359 = vadd.f32 %v1330, %v1355
    %v1360 = vadd.f32 %v1331, %v1356
    %v1361 = vadd.f32 %v1332, %v1357
    %s1362 = sld [smem:[#allocation4 + $0x5b]]
    %v1363 = vstv %s1362
    %v1364 = vmul.f32 %v1351, %v1363
    %v1365 = vmul.f32 %v1350, %v1363
    %v1366 = vmul.f32 %v1349, %v1363
    %v1367 = vmul.f32 %v1348, %v1363
    %v1368 = vadd.f32 %v1335, %v1364
    %v1369 = vadd.f32 %v1336, %v1365
    %v1370 = vadd.f32 %v1337, %v1366
    %v1371 = vadd.f32 %v1338, %v1367
    %1372 = vrot.lane.b32.xlu0 %v1310, 42
    %v1373 = vpop.permute.xlu0 %1372
    %1374 = vrot.lane.b32.xlu0 %v1311, 42
    %v1375 = vpop.permute.xlu0 %1374
    %1376 = vrot.lane.b32.xlu0 %v1312, 42
    %v1377 = vpop.permute.xlu0 %1376
    %1378 = vrot.lane.b32.xlu0 %v1313, 42
    %v1379 = vpop.permute.xlu0 %1378
    %vm1380 = vcmp.lt.s32.totalorder %v59, 42
    %v1381 = vsel %vm1380, %v1377, %v1379
    %v1382 = vsel %vm1380, %v1375, %v1377
    %v1383 = vsel %vm1380, %v1373, %v1375
    %v1384 = vsel %vm1380, %v1379, %v1373
    %s1385 = sld [smem:[#allocation4 + $0x4a]]
    %v1386 = vstv %s1385
    %v1387 = vmul.f32 %v1384, %v1386
    %v1388 = vmul.f32 %v1383, %v1386
    %v1389 = vmul.f32 %v1382, %v1386
    %v1390 = vmul.f32 %v1381, %v1386
    %v1391 = vadd.f32 %v1358, %v1387
    %v1392 = vadd.f32 %v1359, %v1388
    %v1393 = vadd.f32 %v1360, %v1389
    %v1394 = vadd.f32 %v1361, %v1390
    %s1395 = sld [smem:[#allocation4 + $0x5c]]
    %v1396 = vstv %s1395
    %v1397 = vmul.f32 %v1384, %v1396
    %v1398 = vmul.f32 %v1383, %v1396
    %v1399 = vmul.f32 %v1382, %v1396
    %v1400 = vmul.f32 %v1381, %v1396
    %v1401 = vadd.f32 %v1368, %v1397
    %v1402 = vadd.f32 %v1369, %v1398
    %v1403 = vadd.f32 %v1370, %v1399
    %v1404 = vadd.f32 %v1371, %v1400
    %1405 = vrot.lane.b32.xlu0 %v1310, 2
    %v1406 = vpop.permute.xlu0 %1405
    %1407 = vrot.lane.b32.xlu0 %v1311, 2
    %v1408 = vpop.permute.xlu0 %1407
    %1409 = vrot.lane.b32.xlu0 %v1312, 2
    %v1410 = vpop.permute.xlu0 %1409
    %1411 = vrot.lane.b32.xlu0 %v1313, 2
    %v1412 = vpop.permute.xlu0 %1411
    %vm1413 = vcmp.lt.s32.totalorder %v59, 2
    %v1414 = vsel %vm1413, %v1410, %v1412
    %v1415 = vsel %vm1413, %v1408, %v1410
    %v1416 = vsel %vm1413, %v1406, %v1408
    %v1417 = vsel %vm1413, %v1412, %v1406
    %s1418 = sld [smem:[#allocation4 + $0x4b]]
    %v1419 = vstv %s1418
    %v1420 = vmul.f32 %v1417, %v1419
    %v1421 = vmul.f32 %v1416, %v1419
    %v1422 = vmul.f32 %v1415, %v1419
    %v1423 = vmul.f32 %v1414, %v1419
    %v1424 = vadd.f32 %v1391, %v1420
    %v1425 = vadd.f32 %v1392, %v1421
    %v1426 = vadd.f32 %v1393, %v1422
    %v1427 = vadd.f32 %v1394, %v1423
    %s1428 = sld [smem:[#allocation4 + $0x5d]]
    %v1429 = vstv %s1428
    %v1430 = vmul.f32 %v1417, %v1429
    %v1431 = vmul.f32 %v1416, %v1429
    %v1432 = vmul.f32 %v1415, %v1429
    %v1433 = vmul.f32 %v1414, %v1429
    %v1434 = vadd.f32 %v1401, %v1430
    %v1435 = vadd.f32 %v1402, %v1431
    %v1436 = vadd.f32 %v1403, %v1432
    %v1437 = vadd.f32 %v1404, %v1433
    %s1438 = sld [smem:[#allocation4 + $0x4c]]
    %v1439 = vstv %s1438
    %v1440 = vmul.f32 %v1310, %v1439
    %v1441 = vmul.f32 %v1311, %v1439
    %v1442 = vmul.f32 %v1312, %v1439
    %v1443 = vmul.f32 %v1313, %v1439
    %v1444 = vadd.f32 %v1424, %v1440
    %v1445 = vadd.f32 %v1425, %v1441
    %v1446 = vadd.f32 %v1426, %v1442
    %v1447 = vadd.f32 %v1427, %v1443
    %s1448 = sld [smem:[#allocation4 + $0x5e]]
    %v1449 = vstv %s1448
    %v1450 = vmul.f32 %v1310, %v1449
    %v1451 = vmul.f32 %v1311, %v1449
    %v1452 = vmul.f32 %v1312, %v1449
    %v1453 = vmul.f32 %v1313, %v1449
    %v1454 = vadd.f32 %v1434, %v1450
    %v1455 = vadd.f32 %v1435, %v1451
    %v1456 = vadd.f32 %v1436, %v1452
    %v1457 = vadd.f32 %v1437, %v1453
    %1458 = vrot.lane.b32.xlu0 %v1310, 126
    %v1459 = vpop.permute.xlu0 %1458
    %1460 = vrot.lane.b32.xlu0 %v1311, 126
    %v1461 = vpop.permute.xlu0 %1460
    %1462 = vrot.lane.b32.xlu0 %v1312, 126
    %v1463 = vpop.permute.xlu0 %1462
    %1464 = vrot.lane.b32.xlu0 %v1313, 126
    %v1465 = vpop.permute.xlu0 %1464
    %vm1466 = vcmp.lt.s32.totalorder %v59, 126
    %v1467 = vsel %vm1466, %v1463, %v1465
    %v1468 = vsel %vm1466, %v1461, %v1463
    %v1469 = vsel %vm1466, %v1459, %v1461
    %v1470 = vsel %vm1466, %v1465, %v1459
    %s1471 = sld [smem:[#allocation4 + $0x4d]]
    %v1472 = vstv %s1471
    %v1473 = vmul.f32 %v1469, %v1472
    %v1474 = vmul.f32 %v1468, %v1472
    %v1475 = vmul.f32 %v1467, %v1472
    %v1476 = vmul.f32 %v1470, %v1472
    %v1477 = vadd.f32 %v1444, %v1473
    %v1478 = vadd.f32 %v1445, %v1474
    %v1479 = vadd.f32 %v1446, %v1475
    %v1480 = vadd.f32 %v1447, %v1476
    %s1481 = sld [smem:[#allocation4 + $0x5f]]
    %v1482 = vstv %s1481
    %v1483 = vmul.f32 %v1469, %v1482
    %v1484 = vmul.f32 %v1468, %v1482
    %v1485 = vmul.f32 %v1467, %v1482
    %v1486 = vmul.f32 %v1470, %v1482
    %v1487 = vadd.f32 %v1454, %v1483
    %v1488 = vadd.f32 %v1455, %v1484
    %v1489 = vadd.f32 %v1456, %v1485
    %v1490 = vadd.f32 %v1457, %v1486
    %1491 = vrot.lane.b32.xlu0 %v1310, 86
    %v1492 = vpop.permute.xlu0 %1491
    %1493 = vrot.lane.b32.xlu0 %v1311, 86
    %v1494 = vpop.permute.xlu0 %1493
    %1495 = vrot.lane.b32.xlu0 %v1312, 86
    %v1496 = vpop.permute.xlu0 %1495
    %1497 = vrot.lane.b32.xlu0 %v1313, 86
    %v1498 = vpop.permute.xlu0 %1497
    %vm1499 = vcmp.lt.s32.totalorder %v59, 86
    %v1500 = vsel %vm1499, %v1496, %v1498
    %v1501 = vsel %vm1499, %v1494, %v1496
    %v1502 = vsel %vm1499, %v1492, %v1494
    %v1503 = vsel %vm1499, %v1498, %v1492
    %s1504 = sld [smem:[#allocation4 + $0x4e]]
    %v1505 = vstv %s1504
    %v1506 = vmul.f32 %v1502, %v1505
    %v1507 = vmul.f32 %v1501, %v1505
    %v1508 = vmul.f32 %v1500, %v1505
    %v1509 = vmul.f32 %v1503, %v1505
    %v1510 = vadd.f32 %v1477, %v1506
    %v1511 = vadd.f32 %v1478, %v1507
    %v1512 = vadd.f32 %v1479, %v1508
    %v1513 = vadd.f32 %v1480, %v1509
    %s1514 = sld [smem:[#allocation4 + $0x60]]
    %v1515 = vstv %s1514
    %v1516 = vmul.f32 %v1502, %v1515
    %v1517 = vmul.f32 %v1501, %v1515
    %v1518 = vmul.f32 %v1500, %v1515
    %v1519 = vmul.f32 %v1503, %v1515
    %v1520 = vadd.f32 %v1487, %v1516
    %v1521 = vadd.f32 %v1488, %v1517
    %v1522 = vadd.f32 %v1489, %v1518
    %v1523 = vadd.f32 %v1490, %v1519
    %1524 = vrot.lane.b32.xlu0 %v1310, 84
    %v1525 = vpop.permute.xlu0 %1524
    %1526 = vrot.lane.b32.xlu0 %v1311, 84
    %v1527 = vpop.permute.xlu0 %1526
    %1528 = vrot.lane.b32.xlu0 %v1312, 84
    %v1529 = vpop.permute.xlu0 %1528
    %1530 = vrot.lane.b32.xlu0 %v1313, 84
    %v1531 = vpop.permute.xlu0 %1530
    %vm1532 = vcmp.lt.s32.totalorder %v59, 84
    %v1533 = vsel %vm1532, %v1529, %v1531
    %v1534 = vsel %vm1532, %v1527, %v1529
    %v1535 = vsel %vm1532, %v1525, %v1527
    %v1536 = vsel %vm1532, %v1531, %v1525
    %s1537 = sld [smem:[#allocation4 + $0x4f]]
    %v1538 = vstv %s1537
    %v1539 = vmul.f32 %v1535, %v1538
    %v1540 = vmul.f32 %v1534, %v1538
    %v1541 = vmul.f32 %v1533, %v1538
    %v1542 = vmul.f32 %v1536, %v1538
    %v1543 = vadd.f32 %v1510, %v1539
    %v1544 = vadd.f32 %v1511, %v1540
    %v1545 = vadd.f32 %v1512, %v1541
    %v1546 = vadd.f32 %v1513, %v1542
    %s1547 = sld [smem:[#allocation4 + $0x61]]
    %v1548 = vstv %s1547
    %v1549 = vmul.f32 %v1535, %v1548
    %v1550 = vmul.f32 %v1534, %v1548
    %v1551 = vmul.f32 %v1533, %v1548
    %v1552 = vmul.f32 %v1536, %v1548
    %v1553 = vadd.f32 %v1520, %v1549
    %v1554 = vadd.f32 %v1521, %v1550
    %v1555 = vadd.f32 %v1522, %v1551
    %v1556 = vadd.f32 %v1523, %v1552
    %1557 = vrot.lane.b32.xlu0 %v1310, 82
    %v1558 = vpop.permute.xlu0 %1557
    %1559 = vrot.lane.b32.xlu0 %v1311, 82
    %v1560 = vpop.permute.xlu0 %1559
    %1561 = vrot.lane.b32.xlu0 %v1312, 82
    %v1562 = vpop.permute.xlu0 %1561
    %1563 = vrot.lane.b32.xlu0 %v1313, 82
    %v1564 = vpop.permute.xlu0 %1563
    %vm1565 = vcmp.lt.s32.totalorder %v59, 82
    %v1566 = vsel %vm1565, %v1562, %v1564
    %v1567 = vsel %vm1565, %v1560, %v1562
    %v1568 = vsel %vm1565, %v1558, %v1560
    %v1569 = vsel %vm1565, %v1564, %v1558
    %s1570 = sld [smem:[#allocation4 + $0x50]]
    %v1571 = vstv %s1570
    %v1572 = vmul.f32 %v1568, %v1571
    %v1573 = vmul.f32 %v1567, %v1571
    %v1574 = vmul.f32 %v1566, %v1571
    %v1575 = vmul.f32 %v1569, %v1571
    %v1576 = vadd.f32 %v1543, %v1572
    %v1577 = vadd.f32 %v1544, %v1573
    %v1578 = vadd.f32 %v1545, %v1574
    %v1579 = vadd.f32 %v1546, %v1575
    %s1580 = sld [smem:[#allocation4 + $0x62]]
    %v1581 = vstv %s1580
    %v1582 = vmul.f32 %v1568, %v1581
    %v1583 = vmul.f32 %v1567, %v1581
    %v1584 = vmul.f32 %v1566, %v1581
    %v1585 = vmul.f32 %v1569, %v1581
    %v1586 = vadd.f32 %v1553, %v1582
    %v1587 = vadd.f32 %v1554, %v1583
    %v1588 = vadd.f32 %v1555, %v1584
    %v1589 = vadd.f32 %v1556, %v1585
    %v1590 = vld [vmem:[#allocation2 + $0x20] sm:$0xff]
    %v1591 = vld [vmem:[#allocation2 + $0x28] sm:$0xff]
    %v1592 = vld [vmem:[#allocation2 + $0x30] sm:$0xff]
    %v1593 = vld [vmem:[#allocation2 + $0x38] sm:$0xff]
    %1594 = vrot.lane.b32.xlu0 %v1590, 46
    %v1595 = vpop.permute.xlu0 %1594
    %1596 = vrot.lane.b32.xlu0 %v1591, 46
    %v1597 = vpop.permute.xlu0 %1596
    %1598 = vrot.lane.b32.xlu0 %v1592, 46
    %v1599 = vpop.permute.xlu0 %1598
    %1600 = vrot.lane.b32.xlu0 %v1593, 46
    %v1601 = vpop.permute.xlu0 %1600
    %v1602 = vsel %vm1322, %v1599, %v1601
    %v1603 = vsel %vm1322, %v1597, %v1599
    %v1604 = vsel %vm1322, %v1595, %v1597
    %v1605 = vsel %vm1322, %v1601, %v1595
    %s1606 = sld [smem:[#allocation4 + $0x51]]
    %v1607 = vstv %s1606
    %v1608 = vmul.f32 %v1605, %v1607
    %v1609 = vmul.f32 %v1604, %v1607
    %v1610 = vmul.f32 %v1603, %v1607
    %v1611 = vmul.f32 %v1602, %v1607
    %v1612 = vadd.f32 %v1576, %v1608
    %v1613 = vadd.f32 %v1577, %v1609
    %v1614 = vadd.f32 %v1578, %v1610
    %v1615 = vadd.f32 %v1579, %v1611
    %s1616 = sld [smem:[#allocation4 + $0x63]]
    %v1617 = vstv %s1616
    %v1618 = vmul.f32 %v1605, %v1617
    %v1619 = vmul.f32 %v1604, %v1617
    %v1620 = vmul.f32 %v1603, %v1617
    %v1621 = vmul.f32 %v1602, %v1617
    %v1622 = vadd.f32 %v1586, %v1618
    %v1623 = vadd.f32 %v1587, %v1619
    %v1624 = vadd.f32 %v1588, %v1620
    %v1625 = vadd.f32 %v1589, %v1621
    %1626 = vrot.lane.b32.xlu0 %v1590, 44
    %v1627 = vpop.permute.xlu0 %1626
    %1628 = vrot.lane.b32.xlu0 %v1591, 44
    %v1629 = vpop.permute.xlu0 %1628
    %1630 = vrot.lane.b32.xlu0 %v1592, 44
    %v1631 = vpop.permute.xlu0 %1630
    %1632 = vrot.lane.b32.xlu0 %v1593, 44
    %v1633 = vpop.permute.xlu0 %1632
    %v1634 = vsel %vm1347, %v1631, %v1633
    %v1635 = vsel %vm1347, %v1629, %v1631
    %v1636 = vsel %vm1347, %v1627, %v1629
    %v1637 = vsel %vm1347, %v1633, %v1627
    %s1638 = sld [smem:[#allocation4 + $0x52]]
    %v1639 = vstv %s1638
    %v1640 = vmul.f32 %v1637, %v1639
    %v1641 = vmul.f32 %v1636, %v1639
    %v1642 = vmul.f32 %v1635, %v1639
    %v1643 = vmul.f32 %v1634, %v1639
    %v1644 = vadd.f32 %v1612, %v1640
    %v1645 = vadd.f32 %v1613, %v1641
    %v1646 = vadd.f32 %v1614, %v1642
    %v1647 = vadd.f32 %v1615, %v1643
    %s1648 = sld [smem:[#allocation4 + $0x64]]
    %v1649 = vstv %s1648
    %v1650 = vmul.f32 %v1637, %v1649
    %v1651 = vmul.f32 %v1636, %v1649
    %v1652 = vmul.f32 %v1635, %v1649
    %v1653 = vmul.f32 %v1634, %v1649
    %v1654 = vadd.f32 %v1622, %v1650
    %v1655 = vadd.f32 %v1623, %v1651
    %v1656 = vadd.f32 %v1624, %v1652
    %v1657 = vadd.f32 %v1625, %v1653
    %1658 = vrot.lane.b32.xlu0 %v1590, 42
    %v1659 = vpop.permute.xlu0 %1658
    %1660 = vrot.lane.b32.xlu0 %v1591, 42
    %v1661 = vpop.permute.xlu0 %1660
    %1662 = vrot.lane.b32.xlu0 %v1592, 42
    %v1663 = vpop.permute.xlu0 %1662
    %1664 = vrot.lane.b32.xlu0 %v1593, 42
    %v1665 = vpop.permute.xlu0 %1664
    %v1666 = vsel %vm1380, %v1663, %v1665
    %v1667 = vsel %vm1380, %v1661, %v1663
    %v1668 = vsel %vm1380, %v1659, %v1661
    %v1669 = vsel %vm1380, %v1665, %v1659
    %s1670 = sld [smem:[#allocation4 + $0x53]]
    %v1671 = vstv %s1670
    %v1672 = vmul.f32 %v1669, %v1671
    %v1673 = vmul.f32 %v1668, %v1671
    %v1674 = vmul.f32 %v1667, %v1671
    %v1675 = vmul.f32 %v1666, %v1671
    %v1676 = vadd.f32 %v1644, %v1672
    %v1677 = vadd.f32 %v1645, %v1673
    %v1678 = vadd.f32 %v1646, %v1674
    %v1679 = vadd.f32 %v1647, %v1675
    %s1680 = sld [smem:[#allocation4 + $0x65]]
    %v1681 = vstv %s1680
    %v1682 = vmul.f32 %v1669, %v1681
    %v1683 = vmul.f32 %v1668, %v1681
    %v1684 = vmul.f32 %v1667, %v1681
    %v1685 = vmul.f32 %v1666, %v1681
    %v1686 = vadd.f32 %v1654, %v1682
    %v1687 = vadd.f32 %v1655, %v1683
    %v1688 = vadd.f32 %v1656, %v1684
    %v1689 = vadd.f32 %v1657, %v1685
    %1690 = vrot.lane.b32.xlu0 %v1590, 2
    %v1691 = vpop.permute.xlu0 %1690
    %1692 = vrot.lane.b32.xlu0 %v1591, 2
    %v1693 = vpop.permute.xlu0 %1692
    %1694 = vrot.lane.b32.xlu0 %v1592, 2
    %v1695 = vpop.permute.xlu0 %1694
    %1696 = vrot.lane.b32.xlu0 %v1593, 2
    %v1697 = vpop.permute.xlu0 %1696
    %v1698 = vsel %vm1413, %v1695, %v1697
    %v1699 = vsel %vm1413, %v1693, %v1695
    %v1700 = vsel %vm1413, %v1691, %v1693
    %v1701 = vsel %vm1413, %v1697, %v1691
    %s1702 = sld [smem:[#allocation4 + $0x54]]
    %v1703 = vstv %s1702
    %v1704 = vmul.f32 %v1701, %v1703
    %v1705 = vmul.f32 %v1700, %v1703
    %v1706 = vmul.f32 %v1699, %v1703
    %v1707 = vmul.f32 %v1698, %v1703
    %v1708 = vadd.f32 %v1676, %v1704
    %v1709 = vadd.f32 %v1677, %v1705
    %v1710 = vadd.f32 %v1678, %v1706
    %v1711 = vadd.f32 %v1679, %v1707
    %s1712 = sld [smem:[#allocation4 + $0x66]]
    %v1713 = vstv %s1712
    %v1714 = vmul.f32 %v1701, %v1713
    %v1715 = vmul.f32 %v1700, %v1713
    %v1716 = vmul.f32 %v1699, %v1713
    %v1717 = vmul.f32 %v1698, %v1713
    %v1718 = vadd.f32 %v1686, %v1714
    %v1719 = vadd.f32 %v1687, %v1715
    %v1720 = vadd.f32 %v1688, %v1716
    %v1721 = vadd.f32 %v1689, %v1717
    %s1722 = sld [smem:[#allocation4 + $0x55]]
    %v1723 = vstv %s1722
    %v1724 = vmul.f32 %v1590, %v1723
    %v1725 = vmul.f32 %v1591, %v1723
    %v1726 = vmul.f32 %v1592, %v1723
    %v1727 = vmul.f32 %v1593, %v1723
    %v1728 = vadd.f32 %v1708, %v1724
    %v1729 = vadd.f32 %v1709, %v1725
    %v1730 = vadd.f32 %v1710, %v1726
    %v1731 = vadd.f32 %v1711, %v1727
    %s1732 = sld [smem:[#allocation4 + $0x67]]
    %v1733 = vstv %s1732
    %v1734 = vmul.f32 %v1590, %v1733
    %v1735 = vmul.f32 %v1591, %v1733
    %v1736 = vmul.f32 %v1592, %v1733
    %v1737 = vmul.f32 %v1593, %v1733
    %v1738 = vadd.f32 %v1718, %v1734
    %v1739 = vadd.f32 %v1719, %v1735
    %v1740 = vadd.f32 %v1720, %v1736
    %v1741 = vadd.f32 %v1721, %v1737
    %1742 = vrot.lane.b32.xlu0 %v1590, 126
    %v1743 = vpop.permute.xlu0 %1742
    %1744 = vrot.lane.b32.xlu0 %v1591, 126
    %v1745 = vpop.permute.xlu0 %1744
    %1746 = vrot.lane.b32.xlu0 %v1592, 126
    %v1747 = vpop.permute.xlu0 %1746
    %1748 = vrot.lane.b32.xlu0 %v1593, 126
    %v1749 = vpop.permute.xlu0 %1748
    %v1750 = vsel %vm1466, %v1747, %v1749
    %v1751 = vsel %vm1466, %v1745, %v1747
    %v1752 = vsel %vm1466, %v1743, %v1745
    %v1753 = vsel %vm1466, %v1749, %v1743
    %s1754 = sld [smem:[#allocation4 + $0x56]]
    %v1755 = vstv %s1754
    %v1756 = vmul.f32 %v1752, %v1755
    %v1757 = vmul.f32 %v1751, %v1755
    %v1758 = vmul.f32 %v1750, %v1755
    %v1759 = vmul.f32 %v1753, %v1755
    %v1760 = vadd.f32 %v1728, %v1756
    %v1761 = vadd.f32 %v1729, %v1757
    %v1762 = vadd.f32 %v1730, %v1758
    %v1763 = vadd.f32 %v1731, %v1759
    %s1764 = sld [smem:[#allocation4 + $0x68]]
    %v1765 = vstv %s1764
    %v1766 = vmul.f32 %v1752, %v1765
    %v1767 = vmul.f32 %v1751, %v1765
    %v1768 = vmul.f32 %v1750, %v1765
    %v1769 = vmul.f32 %v1753, %v1765
    %v1770 = vadd.f32 %v1738, %v1766
    %v1771 = vadd.f32 %v1739, %v1767
    %v1772 = vadd.f32 %v1740, %v1768
    %v1773 = vadd.f32 %v1741, %v1769
    %1774 = vrot.lane.b32.xlu0 %v1590, 86
    %v1775 = vpop.permute.xlu0 %1774
    %1776 = vrot.lane.b32.xlu0 %v1591, 86
    %v1777 = vpop.permute.xlu0 %1776
    %1778 = vrot.lane.b32.xlu0 %v1592, 86
    %v1779 = vpop.permute.xlu0 %1778
    %1780 = vrot.lane.b32.xlu0 %v1593, 86
    %v1781 = vpop.permute.xlu0 %1780
    %v1782 = vsel %vm1499, %v1779, %v1781
    %v1783 = vsel %vm1499, %v1777, %v1779
    %v1784 = vsel %vm1499, %v1775, %v1777
    %v1785 = vsel %vm1499, %v1781, %v1775
    %s1786 = sld [smem:[#allocation4 + $0x57]]
    %v1787 = vstv %s1786
    %v1788 = vmul.f32 %v1784, %v1787
    %v1789 = vmul.f32 %v1783, %v1787
    %v1790 = vmul.f32 %v1782, %v1787
    %v1791 = vmul.f32 %v1785, %v1787
    %v1792 = vadd.f32 %v1760, %v1788
    %v1793 = vadd.f32 %v1761, %v1789
    %v1794 = vadd.f32 %v1762, %v1790
    %v1795 = vadd.f32 %v1763, %v1791
    %s1796 = sld [smem:[#allocation4 + $0x69]]
    %v1797 = vstv %s1796
    %v1798 = vmul.f32 %v1784, %v1797
    %v1799 = vmul.f32 %v1783, %v1797
    %v1800 = vmul.f32 %v1782, %v1797
    %v1801 = vmul.f32 %v1785, %v1797
    %v1802 = vadd.f32 %v1770, %v1798
    %v1803 = vadd.f32 %v1771, %v1799
    %v1804 = vadd.f32 %v1772, %v1800
    %v1805 = vadd.f32 %v1773, %v1801
    %1806 = vrot.lane.b32.xlu0 %v1590, 84
    %v1807 = vpop.permute.xlu0 %1806
    %1808 = vrot.lane.b32.xlu0 %v1591, 84
    %v1809 = vpop.permute.xlu0 %1808
    %1810 = vrot.lane.b32.xlu0 %v1592, 84
    %v1811 = vpop.permute.xlu0 %1810
    %1812 = vrot.lane.b32.xlu0 %v1593, 84
    %v1813 = vpop.permute.xlu0 %1812
    %v1814 = vsel %vm1532, %v1811, %v1813
    %v1815 = vsel %vm1532, %v1809, %v1811
    %v1816 = vsel %vm1532, %v1807, %v1809
    %v1817 = vsel %vm1532, %v1813, %v1807
    %s1818 = sld [smem:[#allocation4 + $0x58]]
    %v1819 = vstv %s1818
    %v1820 = vmul.f32 %v1816, %v1819
    %v1821 = vmul.f32 %v1815, %v1819
    %v1822 = vmul.f32 %v1814, %v1819
    %v1823 = vmul.f32 %v1817, %v1819
    %v1824 = vadd.f32 %v1792, %v1820
    %v1825 = vadd.f32 %v1793, %v1821
    %v1826 = vadd.f32 %v1794, %v1822
    %v1827 = vadd.f32 %v1795, %v1823
    %s1828 = sld [smem:[#allocation4 + $0x6a]]
    %v1829 = vstv %s1828
    %v1830 = vmul.f32 %v1816, %v1829
    %v1831 = vmul.f32 %v1815, %v1829
    %v1832 = vmul.f32 %v1814, %v1829
    %v1833 = vmul.f32 %v1817, %v1829
    %v1834 = vadd.f32 %v1802, %v1830
    %v1835 = vadd.f32 %v1803, %v1831
    %v1836 = vadd.f32 %v1804, %v1832
    %v1837 = vadd.f32 %v1805, %v1833
    %1838 = vrot.lane.b32.xlu0 %v1590, 82
    %v1839 = vpop.permute.xlu0 %1838
    %1840 = vrot.lane.b32.xlu0 %v1591, 82
    %v1841 = vpop.permute.xlu0 %1840
    %1842 = vrot.lane.b32.xlu0 %v1592, 82
    %v1843 = vpop.permute.xlu0 %1842
    %1844 = vrot.lane.b32.xlu0 %v1593, 82
    %v1845 = vpop.permute.xlu0 %1844
    %v1846 = vsel %vm1565, %v1843, %v1845
    %v1847 = vsel %vm1565, %v1841, %v1843
    %v1848 = vsel %vm1565, %v1839, %v1841
    %v1849 = vsel %vm1565, %v1845, %v1839
    %s1850 = sld [smem:[#allocation4 + $0x59]]
    %v1851 = vstv %s1850
    %v1852 = vmul.f32 %v1848, %v1851
    %v1853 = vmul.f32 %v1847, %v1851
    %v1854 = vmul.f32 %v1846, %v1851
    %v1855 = vmul.f32 %v1849, %v1851
    %v1856 = vadd.f32 %v1824, %v1852
    %v1857 = vadd.f32 %v1825, %v1853
    %v1858 = vadd.f32 %v1826, %v1854
    %v1859 = vadd.f32 %v1827, %v1855
    %s1860 = sld [smem:[#allocation4 + $0x6b]]
    %v1861 = vstv %s1860
    %v1862 = vmul.f32 %v1848, %v1861
    %v1863 = vmul.f32 %v1847, %v1861
    %v1864 = vmul.f32 %v1846, %v1861
    %v1865 = vmul.f32 %v1849, %v1861
    %v1866 = vadd.f32 %v1834, %v1862
    %v1867 = vadd.f32 %v1835, %v1863
    %v1868 = vadd.f32 %v1836, %v1864
    %v1869 = vadd.f32 %v1837, %v1865
    %v1870 = vmul.f32 %v1856, %v42
    %v1871 = vmul.f32 %v1857, %v43
    %v1872 = vmul.f32 %v1858, %v44
    %v1873 = vmul.f32 %v1859, %v45
    %v1874 = vadd.f32 %v1870, %v1871
    %v1875 = vadd.f32 %v1874, %v1872
    %v1876 = vadd.f32 %v1875, %v1873
    %1877 = vadd.xlane.f32.xlu0 %v1876
    %v1878 = vpop.xlane.xlu0 %1877
    %v1879 = vrot.slane %v1878, 4
    %v1880 = vadd.f32 %v1878, %v1879
    %v1881 = vrot.slane %v1880, 2
    %v1882 = vadd.f32 %v1880, %v1881
    %v1883 = vrot.slane %v1882, 1
    %v1884 = vadd.f32 %v1882, %v1883
    %s1885 = vtos %v1884
    %v1886 = vstv %s1885
    %v1887 = vmul.f32 %v1886, 0.001953125
    %v1888 = vsub.f32 %v1856, %v1887
    %v1889 = vsub.f32 %v1857, %v1887
    %v1890 = vsub.f32 %v1858, %v1887
    %v1891 = vsub.f32 %v1859, %v1887
    %v1892 = vmul.f32 %v1888, %v42
    %v1893 = vmul.f32 %v1889, %v43
    %v1894 = vmul.f32 %v1890, %v44
    %v1895 = vmul.f32 %v1891, %v45
    %v1896 = vmul.f32 %v1892, %v1892
    %v1897 = vmul.f32 %v1893, %v1893
    %v1898 = vmul.f32 %v1894, %v1894
    %v1899 = vmul.f32 %v1895, %v1895
    %v1900 = vadd.f32 %v1896, %v1897
    %v1901 = vadd.f32 %v1900, %v1898
    %v1902 = vadd.f32 %v1901, %v1899
    %1903 = vadd.xlane.f32.xlu0 %v1902
    %v1904 = vpop.xlane.xlu0 %1903
    %v1905 = vrot.slane %v1904, 4
    %v1906 = vadd.f32 %v1904, %v1905
    %v1907 = vrot.slane %v1906, 2
    %v1908 = vadd.f32 %v1906, %v1907
    %v1909 = vrot.slane %v1908, 1
    %v1910 = vadd.f32 %v1908, %v1909
    %s1911 = vtos %v1910
    %v1912 = vstv %s1911
    %v1913 = vmul.f32 %v1912, 0.001953125
    %s1914 = sld [smem:[#allocation6 + $0x4]]
    %v1915 = vadd.f32 %v1913, 1e-05
    %v1916 = vrsqrt.pop %v1915
    %v1917 = vstv %s1914
    %v1918 = vmul.f32 %v1917, %v1916
    %v1919 = vmul.f32 %v1892, %v1918
    %v1920 = vmul.f32 %v1893, %v1918
    %v1921 = vmul.f32 %v1894, %v1918
    %v1922 = vmul.f32 %v1895, %v1918
    %s1923 = sld [smem:[#allocation6 + $0x6]]
    %v1924 = vstv %s1923
    %v1925 = vadd.f32 %v1919, %v1924
    %v1926 = vadd.f32 %v1920, %v1924
    %v1927 = vadd.f32 %v1921, %v1924
    %v1928 = vadd.f32 %v1922, %v1924
    %v1929 = vmax.f32 %v1925, 0.0
    %v1930 = vmax.f32 %v1926, 0.0
    %v1931 = vmax.f32 %v1927, 0.0
    %v1932 = vmax.f32 %v1928, 0.0
    %v1933 = vmul.f32 %v1929, %v42
    %v1934 = vmul.f32 %v1930, %v43
    %v1935 = vmul.f32 %v1931, %v44
    %v1936 = vmul.f32 %v1932, %v45
    %1937 = vst [vmem:[#allocation3] sm:$0xff] %v1933
    %1938 = vst [vmem:[#allocation3 + $0x8] sm:$0xff] %v1934
    %1939 = vst [vmem:[#allocation3 + $0x10] sm:$0xff] %v1935
    %1940 = vst [vmem:[#allocation3 + $0x18] sm:$0xff] %v1936
    %v1941 = vmul.f32 %v1866, %v42
    %v1942 = vmul.f32 %v1867, %v43
    %v1943 = vmul.f32 %v1868, %v44
    %v1944 = vmul.f32 %v1869, %v45
    %v1945 = vadd.f32 %v1941, %v1942
    %v1946 = vadd.f32 %v1945, %v1943
    %v1947 = vadd.f32 %v1946, %v1944
    %1948 = vadd.xlane.f32.xlu0 %v1947
    %v1949 = vpop.xlane.xlu0 %1948
    %v1950 = vrot.slane %v1949, 4
    %v1951 = vadd.f32 %v1949, %v1950
    %v1952 = vrot.slane %v1951, 2
    %v1953 = vadd.f32 %v1951, %v1952
    %v1954 = vrot.slane %v1953, 1
    %v1955 = vadd.f32 %v1953, %v1954
    %s1956 = vtos %v1955
    %v1957 = vstv %s1956
    %v1958 = vmul.f32 %v1957, 0.001953125
    %v1959 = vsub.f32 %v1866, %v1958
    %v1960 = vsub.f32 %v1867, %v1958
    %v1961 = vsub.f32 %v1868, %v1958
    %v1962 = vsub.f32 %v1869, %v1958
    %v1963 = vmul.f32 %v1959, %v42
    %v1964 = vmul.f32 %v1960, %v43
    %v1965 = vmul.f32 %v1961, %v44
    %v1966 = vmul.f32 %v1962, %v45
    %v1967 = vmul.f32 %v1963, %v1963
    %v1968 = vmul.f32 %v1964, %v1964
    %v1969 = vmul.f32 %v1965, %v1965
    %v1970 = vmul.f32 %v1966, %v1966
    %v1971 = vadd.f32 %v1967, %v1968
    %v1972 = vadd.f32 %v1971, %v1969
    %v1973 = vadd.f32 %v1972, %v1970
    %1974 = vadd.xlane.f32.xlu0 %v1973
    %v1975 = vpop.xlane.xlu0 %1974
    %v1976 = vrot.slane %v1975, 4
    %v1977 = vadd.f32 %v1975, %v1976
    %v1978 = vrot.slane %v1977, 2
    %v1979 = vadd.f32 %v1977, %v1978
    %v1980 = vrot.slane %v1979, 1
    %v1981 = vadd.f32 %v1979, %v1980
    %s1982 = vtos %v1981
    %v1983 = vstv %s1982
    %v1984 = vmul.f32 %v1983, 0.001953125
    %s1985 = sld [smem:[#allocation6 + $0x5]]
    %v1986 = vadd.f32 %v1984, 1e-05
    %v1987 = vrsqrt.pop %v1986
    %v1988 = vstv %s1985
    %v1989 = vmul.f32 %v1988, %v1987
    %v1990 = vmul.f32 %v1963, %v1989
    %v1991 = vmul.f32 %v1964, %v1989
    %v1992 = vmul.f32 %v1965, %v1989
    %v1993 = vmul.f32 %v1966, %v1989
    %s1994 = sld [smem:[#allocation6 + $0x7]]
    %v1995 = vstv %s1994
    %v1996 = vadd.f32 %v1990, %v1995
    %v1997 = vadd.f32 %v1991, %v1995
    %v1998 = vadd.f32 %v1992, %v1995
    %v1999 = vadd.f32 %v1993, %v1995
    %v2000 = vmax.f32 %v1996, 0.0
    %v2001 = vmax.f32 %v1997, 0.0
    %v2002 = vmax.f32 %v1998, 0.0
    %v2003 = vmax.f32 %v1999, 0.0
    %v2004 = vmul.f32 %v2000, %v42
    %v2005 = vmul.f32 %v2001, %v43
    %v2006 = vmul.f32 %v2002, %v44
    %v2007 = vmul.f32 %v2003, %v45
    %2008 = vst [vmem:[#allocation3 + $0x20] sm:$0xff] %v2004
    %2009 = vst [vmem:[#allocation3 + $0x28] sm:$0xff] %v2005
    %2010 = vst [vmem:[#allocation3 + $0x30] sm:$0xff] %v2006
    %2011 = vst [vmem:[#allocation3 + $0x38] sm:$0xff] %v2007
    %v2012 = vld [vmem:[#allocation3] sm:$0xff]
    %v2013 = vld [vmem:[#allocation3 + $0x8] sm:$0xff]
    %v2014 = vld [vmem:[#allocation3 + $0x10] sm:$0xff]
    %v2015 = vld [vmem:[#allocation3 + $0x18] sm:$0xff]
    %2016 = vrot.lane.b32.xlu0 %v2012, 69
    %v2017 = vpop.permute.xlu0 %2016
    %2018 = vrot.lane.b32.xlu0 %v2013, 69
    %v2019 = vpop.permute.xlu0 %2018
    %2020 = vrot.lane.b32.xlu0 %v2014, 69
    %v2021 = vpop.permute.xlu0 %2020
    %2022 = vrot.lane.b32.xlu0 %v2015, 69
    %v2023 = vpop.permute.xlu0 %2022
    %vm2024 = vcmp.lt.s32.totalorder %v59, 69
    %v2025 = vsel %vm2024, %v2021, %v2023
    %v2026 = vsel %vm2024, %v2019, %v2021
    %v2027 = vsel %vm2024, %v2017, %v2019
    %v2028 = vsel %vm2024, %v2023, %v2017
    %s2029 = sld [smem:[#allocation4 + $0x6c]]
    %v2030 = vstv %s2029
    %v2031 = vmul.f32 %v2028, %v2030
    %v2032 = vmul.f32 %v2027, %v2030
    %v2033 = vmul.f32 %v2026, %v2030
    %v2034 = vmul.f32 %v2025, %v2030
    %s2035 = sld [smem:[#allocation4 + $0x7e]]
    %v2036 = vstv %s2035
    %v2037 = vmul.f32 %v2028, %v2036
    %v2038 = vmul.f32 %v2027, %v2036
    %v2039 = vmul.f32 %v2026, %v2036
    %v2040 = vmul.f32 %v2025, %v2036
    %2041 = vrot.lane.b32.xlu0 %v2012, 66
    %v2042 = vpop.permute.xlu0 %2041
    %2043 = vrot.lane.b32.xlu0 %v2013, 66
    %v2044 = vpop.permute.xlu0 %2043
    %2045 = vrot.lane.b32.xlu0 %v2014, 66
    %v2046 = vpop.permute.xlu0 %2045
    %2047 = vrot.lane.b32.xlu0 %v2015, 66
    %v2048 = vpop.permute.xlu0 %2047
    %vm2049 = vcmp.lt.s32.totalorder %v59, 66
    %v2050 = vsel %vm2049, %v2046, %v2048
    %v2051 = vsel %vm2049, %v2044, %v2046
    %v2052 = vsel %vm2049, %v2042, %v2044
    %v2053 = vsel %vm2049, %v2048, %v2042
    %s2054 = sld [smem:[#allocation4 + $0x6d]]
    %v2055 = vstv %s2054
    %v2056 = vmul.f32 %v2053, %v2055
    %v2057 = vmul.f32 %v2052, %v2055
    %v2058 = vmul.f32 %v2051, %v2055
    %v2059 = vmul.f32 %v2050, %v2055
    %v2060 = vadd.f32 %v2031, %v2056
    %v2061 = vadd.f32 %v2032, %v2057
    %v2062 = vadd.f32 %v2033, %v2058
    %v2063 = vadd.f32 %v2034, %v2059
    %s2064 = sld [smem:[#allocation4 + $0x7f]]
    %v2065 = vstv %s2064
    %v2066 = vmul.f32 %v2053, %v2065
    %v2067 = vmul.f32 %v2052, %v2065
    %v2068 = vmul.f32 %v2051, %v2065
    %v2069 = vmul.f32 %v2050, %v2065
    %v2070 = vadd.f32 %v2037, %v2066
    %v2071 = vadd.f32 %v2038, %v2067
    %v2072 = vadd.f32 %v2039, %v2068
    %v2073 = vadd.f32 %v2040, %v2069
    %2074 = vrot.lane.b32.xlu0 %v2012, 63
    %v2075 = vpop.permute.xlu0 %2074
    %2076 = vrot.lane.b32.xlu0 %v2013, 63
    %v2077 = vpop.permute.xlu0 %2076
    %2078 = vrot.lane.b32.xlu0 %v2014, 63
    %v2079 = vpop.permute.xlu0 %2078
    %2080 = vrot.lane.b32.xlu0 %v2015, 63
    %v2081 = vpop.permute.xlu0 %2080
    %vm2082 = vcmp.lt.s32.totalorder %v59, 63
    %v2083 = vsel %vm2082, %v2079, %v2081
    %v2084 = vsel %vm2082, %v2077, %v2079
    %v2085 = vsel %vm2082, %v2075, %v2077
    %v2086 = vsel %vm2082, %v2081, %v2075
    %s2087 = sld [smem:[#allocation4 + $0x6e]]
    %v2088 = vstv %s2087
    %v2089 = vmul.f32 %v2086, %v2088
    %v2090 = vmul.f32 %v2085, %v2088
    %v2091 = vmul.f32 %v2084, %v2088
    %v2092 = vmul.f32 %v2083, %v2088
    %v2093 = vadd.f32 %v2060, %v2089
    %v2094 = vadd.f32 %v2061, %v2090
    %v2095 = vadd.f32 %v2062, %v2091
    %v2096 = vadd.f32 %v2063, %v2092
    %s2097 = sld [smem:[#allocation4 + $0x80]]
    %v2098 = vstv %s2097
    %v2099 = vmul.f32 %v2086, %v2098
    %v2100 = vmul.f32 %v2085, %v2098
    %v2101 = vmul.f32 %v2084, %v2098
    %v2102 = vmul.f32 %v2083, %v2098
    %v2103 = vadd.f32 %v2070, %v2099
    %v2104 = vadd.f32 %v2071, %v2100
    %v2105 = vadd.f32 %v2072, %v2101
    %v2106 = vadd.f32 %v2073, %v2102
    %2107 = vrot.lane.b32.xlu0 %v2012, 3
    %v2108 = vpop.permute.xlu0 %2107
    %2109 = vrot.lane.b32.xlu0 %v2013, 3
    %v2110 = vpop.permute.xlu0 %2109
    %2111 = vrot.lane.b32.xlu0 %v2014, 3
    %v2112 = vpop.permute.xlu0 %2111
    %2113 = vrot.lane.b32.xlu0 %v2015, 3
    %v2114 = vpop.permute.xlu0 %2113
    %vm2115 = vcmp.lt.s32.totalorder %v59, 3
    %v2116 = vsel %vm2115, %v2112, %v2114
    %v2117 = vsel %vm2115, %v2110, %v2112
    %v2118 = vsel %vm2115, %v2108, %v2110
    %v2119 = vsel %vm2115, %v2114, %v2108
    %s2120 = sld [smem:[#allocation4 + $0x6f]]
    %v2121 = vstv %s2120
    %v2122 = vmul.f32 %v2119, %v2121
    %v2123 = vmul.f32 %v2118, %v2121
    %v2124 = vmul.f32 %v2117, %v2121
    %v2125 = vmul.f32 %v2116, %v2121
    %v2126 = vadd.f32 %v2093, %v2122
    %v2127 = vadd.f32 %v2094, %v2123
    %v2128 = vadd.f32 %v2095, %v2124
    %v2129 = vadd.f32 %v2096, %v2125
    %s2130 = sld [smem:[#allocation4 + $0x81]]
    %v2131 = vstv %s2130
    %v2132 = vmul.f32 %v2119, %v2131
    %v2133 = vmul.f32 %v2118, %v2131
    %v2134 = vmul.f32 %v2117, %v2131
    %v2135 = vmul.f32 %v2116, %v2131
    %v2136 = vadd.f32 %v2103, %v2132
    %v2137 = vadd.f32 %v2104, %v2133
    %v2138 = vadd.f32 %v2105, %v2134
    %v2139 = vadd.f32 %v2106, %v2135
    %s2140 = sld [smem:[#allocation4 + $0x70]]
    %v2141 = vstv %s2140
    %v2142 = vmul.f32 %v2012, %v2141
    %v2143 = vmul.f32 %v2013, %v2141
    %v2144 = vmul.f32 %v2014, %v2141
    %v2145 = vmul.f32 %v2015, %v2141
    %v2146 = vadd.f32 %v2126, %v2142
    %v2147 = vadd.f32 %v2127, %v2143
    %v2148 = vadd.f32 %v2128, %v2144
    %v2149 = vadd.f32 %v2129, %v2145
    %s2150 = sld [smem:[#allocation4 + $0x82]]
    %v2151 = vstv %s2150
    %v2152 = vmul.f32 %v2012, %v2151
    %v2153 = vmul.f32 %v2013, %v2151
    %v2154 = vmul.f32 %v2014, %v2151
    %v2155 = vmul.f32 %v2015, %v2151
    %v2156 = vadd.f32 %v2136, %v2152
    %v2157 = vadd.f32 %v2137, %v2153
    %v2158 = vadd.f32 %v2138, %v2154
    %v2159 = vadd.f32 %v2139, %v2155
    %2160 = vrot.lane.b32.xlu0 %v2012, 125
    %v2161 = vpop.permute.xlu0 %2160
    %2162 = vrot.lane.b32.xlu0 %v2013, 125
    %v2163 = vpop.permute.xlu0 %2162
    %2164 = vrot.lane.b32.xlu0 %v2014, 125
    %v2165 = vpop.permute.xlu0 %2164
    %2166 = vrot.lane.b32.xlu0 %v2015, 125
    %v2167 = vpop.permute.xlu0 %2166
    %vm2168 = vcmp.lt.s32.totalorder %v59, 125
    %v2169 = vsel %vm2168, %v2165, %v2167
    %v2170 = vsel %vm2168, %v2163, %v2165
    %v2171 = vsel %vm2168, %v2161, %v2163
    %v2172 = vsel %vm2168, %v2167, %v2161
    %s2173 = sld [smem:[#allocation4 + $0x71]]
    %v2174 = vstv %s2173
    %v2175 = vmul.f32 %v2171, %v2174
    %v2176 = vmul.f32 %v2170, %v2174
    %v2177 = vmul.f32 %v2169, %v2174
    %v2178 = vmul.f32 %v2172, %v2174
    %v2179 = vadd.f32 %v2146, %v2175
    %v2180 = vadd.f32 %v2147, %v2176
    %v2181 = vadd.f32 %v2148, %v2177
    %v2182 = vadd.f32 %v2149, %v2178
    %s2183 = sld [smem:[#allocation4 + $0x83]]
    %v2184 = vstv %s2183
    %v2185 = vmul.f32 %v2171, %v2184
    %v2186 = vmul.f32 %v2170, %v2184
    %v2187 = vmul.f32 %v2169, %v2184
    %v2188 = vmul.f32 %v2172, %v2184
    %v2189 = vadd.f32 %v2156, %v2185
    %v2190 = vadd.f32 %v2157, %v2186
    %v2191 = vadd.f32 %v2158, %v2187
    %v2192 = vadd.f32 %v2159, %v2188
    %2193 = vrot.lane.b32.xlu0 %v2012, 65
    %v2194 = vpop.permute.xlu0 %2193
    %2195 = vrot.lane.b32.xlu0 %v2013, 65
    %v2196 = vpop.permute.xlu0 %2195
    %2197 = vrot.lane.b32.xlu0 %v2014, 65
    %v2198 = vpop.permute.xlu0 %2197
    %2199 = vrot.lane.b32.xlu0 %v2015, 65
    %v2200 = vpop.permute.xlu0 %2199
    %vm2201 = vcmp.lt.s32.totalorder %v59, 65
    %v2202 = vsel %vm2201, %v2198, %v2200
    %v2203 = vsel %vm2201, %v2196, %v2198
    %v2204 = vsel %vm2201, %v2194, %v2196
    %v2205 = vsel %vm2201, %v2200, %v2194
    %s2206 = sld [smem:[#allocation4 + $0x72]]
    %v2207 = vstv %s2206
    %v2208 = vmul.f32 %v2204, %v2207
    %v2209 = vmul.f32 %v2203, %v2207
    %v2210 = vmul.f32 %v2202, %v2207
    %v2211 = vmul.f32 %v2205, %v2207
    %v2212 = vadd.f32 %v2179, %v2208
    %v2213 = vadd.f32 %v2180, %v2209
    %v2214 = vadd.f32 %v2181, %v2210
    %v2215 = vadd.f32 %v2182, %v2211
    %s2216 = sld [smem:[#allocation4 + $0x84]]
    %v2217 = vstv %s2216
    %v2218 = vmul.f32 %v2204, %v2217
    %v2219 = vmul.f32 %v2203, %v2217
    %v2220 = vmul.f32 %v2202, %v2217
    %v2221 = vmul.f32 %v2205, %v2217
    %v2222 = vadd.f32 %v2189, %v2218
    %v2223 = vadd.f32 %v2190, %v2219
    %v2224 = vadd.f32 %v2191, %v2220
    %v2225 = vadd.f32 %v2192, %v2221
    %2226 = vrot.lane.b32.xlu0 %v2012, 62
    %v2227 = vpop.permute.xlu0 %2226
    %2228 = vrot.lane.b32.xlu0 %v2013, 62
    %v2229 = vpop.permute.xlu0 %2228
    %2230 = vrot.lane.b32.xlu0 %v2014, 62
    %v2231 = vpop.permute.xlu0 %2230
    %2232 = vrot.lane.b32.xlu0 %v2015, 62
    %v2233 = vpop.permute.xlu0 %2232
    %vm2234 = vcmp.lt.s32.totalorder %v59, 62
    %v2235 = vsel %vm2234, %v2231, %v2233
    %v2236 = vsel %vm2234, %v2229, %v2231
    %v2237 = vsel %vm2234, %v2227, %v2229
    %v2238 = vsel %vm2234, %v2233, %v2227
    %s2239 = sld [smem:[#allocation4 + $0x73]]
    %v2240 = vstv %s2239
    %v2241 = vmul.f32 %v2237, %v2240
    %v2242 = vmul.f32 %v2236, %v2240
    %v2243 = vmul.f32 %v2235, %v2240
    %v2244 = vmul.f32 %v2238, %v2240
    %v2245 = vadd.f32 %v2212, %v2241
    %v2246 = vadd.f32 %v2213, %v2242
    %v2247 = vadd.f32 %v2214, %v2243
    %v2248 = vadd.f32 %v2215, %v2244
    %s2249 = sld [smem:[#allocation4 + $0x85]]
    %v2250 = vstv %s2249
    %v2251 = vmul.f32 %v2237, %v2250
    %v2252 = vmul.f32 %v2236, %v2250
    %v2253 = vmul.f32 %v2235, %v2250
    %v2254 = vmul.f32 %v2238, %v2250
    %v2255 = vadd.f32 %v2222, %v2251
    %v2256 = vadd.f32 %v2223, %v2252
    %v2257 = vadd.f32 %v2224, %v2253
    %v2258 = vadd.f32 %v2225, %v2254
    %2259 = vrot.lane.b32.xlu0 %v2012, 59
    %v2260 = vpop.permute.xlu0 %2259
    %2261 = vrot.lane.b32.xlu0 %v2013, 59
    %v2262 = vpop.permute.xlu0 %2261
    %2263 = vrot.lane.b32.xlu0 %v2014, 59
    %v2264 = vpop.permute.xlu0 %2263
    %2265 = vrot.lane.b32.xlu0 %v2015, 59
    %v2266 = vpop.permute.xlu0 %2265
    %vm2267 = vcmp.lt.s32.totalorder %v59, 59
    %v2268 = vsel %vm2267, %v2264, %v2266
    %v2269 = vsel %vm2267, %v2262, %v2264
    %v2270 = vsel %vm2267, %v2260, %v2262
    %v2271 = vsel %vm2267, %v2266, %v2260
    %s2272 = sld [smem:[#allocation4 + $0x74]]
    %v2273 = vstv %s2272
    %v2274 = vmul.f32 %v2270, %v2273
    %v2275 = vmul.f32 %v2269, %v2273
    %v2276 = vmul.f32 %v2268, %v2273
    %v2277 = vmul.f32 %v2271, %v2273
    %v2278 = vadd.f32 %v2245, %v2274
    %v2279 = vadd.f32 %v2246, %v2275
    %v2280 = vadd.f32 %v2247, %v2276
    %v2281 = vadd.f32 %v2248, %v2277
    %s2282 = sld [smem:[#allocation4 + $0x86]]
    %v2283 = vstv %s2282
    %v2284 = vmul.f32 %v2270, %v2283
    %v2285 = vmul.f32 %v2269, %v2283
    %v2286 = vmul.f32 %v2268, %v2283
    %v2287 = vmul.f32 %v2271, %v2283
    %v2288 = vadd.f32 %v2255, %v2284
    %v2289 = vadd.f32 %v2256, %v2285
    %v2290 = vadd.f32 %v2257, %v2286
    %v2291 = vadd.f32 %v2258, %v2287
    %v2292 = vld [vmem:[#allocation3 + $0x20] sm:$0xff]
    %v2293 = vld [vmem:[#allocation3 + $0x28] sm:$0xff]
    %v2294 = vld [vmem:[#allocation3 + $0x30] sm:$0xff]
    %v2295 = vld [vmem:[#allocation3 + $0x38] sm:$0xff]
    %2296 = vrot.lane.b32.xlu0 %v2292, 69
    %v2297 = vpop.permute.xlu0 %2296
    %2298 = vrot.lane.b32.xlu0 %v2293, 69
    %v2299 = vpop.permute.xlu0 %2298
    %2300 = vrot.lane.b32.xlu0 %v2294, 69
    %v2301 = vpop.permute.xlu0 %2300
    %2302 = vrot.lane.b32.xlu0 %v2295, 69
    %v2303 = vpop.permute.xlu0 %2302
    %v2304 = vsel %vm2024, %v2301, %v2303
    %v2305 = vsel %vm2024, %v2299, %v2301
    %v2306 = vsel %vm2024, %v2297, %v2299
    %v2307 = vsel %vm2024, %v2303, %v2297
    %s2308 = sld [smem:[#allocation4 + $0x75]]
    %v2309 = vstv %s2308
    %v2310 = vmul.f32 %v2307, %v2309
    %v2311 = vmul.f32 %v2306, %v2309
    %v2312 = vmul.f32 %v2305, %v2309
    %v2313 = vmul.f32 %v2304, %v2309
    %v2314 = vadd.f32 %v2278, %v2310
    %v2315 = vadd.f32 %v2279, %v2311
    %v2316 = vadd.f32 %v2280, %v2312
    %v2317 = vadd.f32 %v2281, %v2313
    %s2318 = sld [smem:[#allocation4 + $0x87]]
    %v2319 = vstv %s2318
    %v2320 = vmul.f32 %v2307, %v2319
    %v2321 = vmul.f32 %v2306, %v2319
    %v2322 = vmul.f32 %v2305, %v2319
    %v2323 = vmul.f32 %v2304, %v2319
    %v2324 = vadd.f32 %v2288, %v2320
    %v2325 = vadd.f32 %v2289, %v2321
    %v2326 = vadd.f32 %v2290, %v2322
    %v2327 = vadd.f32 %v2291, %v2323
    %2328 = vrot.lane.b32.xlu0 %v2292, 66
    %v2329 = vpop.permute.xlu0 %2328
    %2330 = vrot.lane.b32.xlu0 %v2293, 66
    %v2331 = vpop.permute.xlu0 %2330
    %2332 = vrot.lane.b32.xlu0 %v2294, 66
    %v2333 = vpop.permute.xlu0 %2332
    %2334 = vrot.lane.b32.xlu0 %v2295, 66
    %v2335 = vpop.permute.xlu0 %2334
    %v2336 = vsel %vm2049, %v2333, %v2335
    %v2337 = vsel %vm2049, %v2331, %v2333
    %v2338 = vsel %vm2049, %v2329, %v2331
    %v2339 = vsel %vm2049, %v2335, %v2329
    %s2340 = sld [smem:[#allocation4 + $0x76]]
    %v2341 = vstv %s2340
    %v2342 = vmul.f32 %v2339, %v2341
    %v2343 = vmul.f32 %v2338, %v2341
    %v2344 = vmul.f32 %v2337, %v2341
    %v2345 = vmul.f32 %v2336, %v2341
    %v2346 = vadd.f32 %v2314, %v2342
    %v2347 = vadd.f32 %v2315, %v2343
    %v2348 = vadd.f32 %v2316, %v2344
    %v2349 = vadd.f32 %v2317, %v2345
    %s2350 = sld [smem:[#allocation4 + $0x88]]
    %v2351 = vstv %s2350
    %v2352 = vmul.f32 %v2339, %v2351
    %v2353 = vmul.f32 %v2338, %v2351
    %v2354 = vmul.f32 %v2337, %v2351
    %v2355 = vmul.f32 %v2336, %v2351
    %v2356 = vadd.f32 %v2324, %v2352
    %v2357 = vadd.f32 %v2325, %v2353
    %v2358 = vadd.f32 %v2326, %v2354
    %v2359 = vadd.f32 %v2327, %v2355
    %2360 = vrot.lane.b32.xlu0 %v2292, 63
    %v2361 = vpop.permute.xlu0 %2360
    %2362 = vrot.lane.b32.xlu0 %v2293, 63
    %v2363 = vpop.permute.xlu0 %2362
    %2364 = vrot.lane.b32.xlu0 %v2294, 63
    %v2365 = vpop.permute.xlu0 %2364
    %2366 = vrot.lane.b32.xlu0 %v2295, 63
    %v2367 = vpop.permute.xlu0 %2366
    %v2368 = vsel %vm2082, %v2365, %v2367
    %v2369 = vsel %vm2082, %v2363, %v2365
    %v2370 = vsel %vm2082, %v2361, %v2363
    %v2371 = vsel %vm2082, %v2367, %v2361
    %s2372 = sld [smem:[#allocation4 + $0x77]]
    %v2373 = vstv %s2372
    %v2374 = vmul.f32 %v2371, %v2373
    %v2375 = vmul.f32 %v2370, %v2373
    %v2376 = vmul.f32 %v2369, %v2373
    %v2377 = vmul.f32 %v2368, %v2373
    %v2378 = vadd.f32 %v2346, %v2374
    %v2379 = vadd.f32 %v2347, %v2375
    %v2380 = vadd.f32 %v2348, %v2376
    %v2381 = vadd.f32 %v2349, %v2377
    %s2382 = sld [smem:[#allocation4 + $0x89]]
    %v2383 = vstv %s2382
    %v2384 = vmul.f32 %v2371, %v2383
    %v2385 = vmul.f32 %v2370, %v2383
    %v2386 = vmul.f32 %v2369, %v2383
    %v2387 = vmul.f32 %v2368, %v2383
    %v2388 = vadd.f32 %v2356, %v2384
    %v2389 = vadd.f32 %v2357, %v2385
    %v2390 = vadd.f32 %v2358, %v2386
    %v2391 = vadd.f32 %v2359, %v2387
    %2392 = vrot.lane.b32.xlu0 %v2292, 3
    %v2393 = vpop.permute.xlu0 %2392
    %2394 = vrot.lane.b32.xlu0 %v2293, 3
    %v2395 = vpop.permute.xlu0 %2394
    %2396 = vrot.lane.b32.xlu0 %v2294, 3
    %v2397 = vpop.permute.xlu0 %2396
    %2398 = vrot.lane.b32.xlu0 %v2295, 3
    %v2399 = vpop.permute.xlu0 %2398
    %v2400 = vsel %vm2115, %v2397, %v2399
    %v2401 = vsel %vm2115, %v2395, %v2397
    %v2402 = vsel %vm2115, %v2393, %v2395
    %v2403 = vsel %vm2115, %v2399, %v2393
    %s2404 = sld [smem:[#allocation4 + $0x78]]
    %v2405 = vstv %s2404
    %v2406 = vmul.f32 %v2403, %v2405
    %v2407 = vmul.f32 %v2402, %v2405
    %v2408 = vmul.f32 %v2401, %v2405
    %v2409 = vmul.f32 %v2400, %v2405
    %v2410 = vadd.f32 %v2378, %v2406
    %v2411 = vadd.f32 %v2379, %v2407
    %v2412 = vadd.f32 %v2380, %v2408
    %v2413 = vadd.f32 %v2381, %v2409
    %s2414 = sld [smem:[#allocation4 + $0x8a]]
    %v2415 = vstv %s2414
    %v2416 = vmul.f32 %v2403, %v2415
    %v2417 = vmul.f32 %v2402, %v2415
    %v2418 = vmul.f32 %v2401, %v2415
    %v2419 = vmul.f32 %v2400, %v2415
    %v2420 = vadd.f32 %v2388, %v2416
    %v2421 = vadd.f32 %v2389, %v2417
    %v2422 = vadd.f32 %v2390, %v2418
    %v2423 = vadd.f32 %v2391, %v2419
    %s2424 = sld [smem:[#allocation4 + $0x79]]
    %v2425 = vstv %s2424
    %v2426 = vmul.f32 %v2292, %v2425
    %v2427 = vmul.f32 %v2293, %v2425
    %v2428 = vmul.f32 %v2294, %v2425
    %v2429 = vmul.f32 %v2295, %v2425
    %v2430 = vadd.f32 %v2410, %v2426
    %v2431 = vadd.f32 %v2411, %v2427
    %v2432 = vadd.f32 %v2412, %v2428
    %v2433 = vadd.f32 %v2413, %v2429
    %s2434 = sld [smem:[#allocation4 + $0x8b]]
    %v2435 = vstv %s2434
    %v2436 = vmul.f32 %v2292, %v2435
    %v2437 = vmul.f32 %v2293, %v2435
    %v2438 = vmul.f32 %v2294, %v2435
    %v2439 = vmul.f32 %v2295, %v2435
    %v2440 = vadd.f32 %v2420, %v2436
    %v2441 = vadd.f32 %v2421, %v2437
    %v2442 = vadd.f32 %v2422, %v2438
    %v2443 = vadd.f32 %v2423, %v2439
    %2444 = vrot.lane.b32.xlu0 %v2292, 125
    %v2445 = vpop.permute.xlu0 %2444
    %2446 = vrot.lane.b32.xlu0 %v2293, 125
    %v2447 = vpop.permute.xlu0 %2446
    %2448 = vrot.lane.b32.xlu0 %v2294, 125
    %v2449 = vpop.permute.xlu0 %2448
    %2450 = vrot.lane.b32.xlu0 %v2295, 125
    %v2451 = vpop.permute.xlu0 %2450
    %v2452 = vsel %vm2168, %v2449, %v2451
    %v2453 = vsel %vm2168, %v2447, %v2449
    %v2454 = vsel %vm2168, %v2445, %v2447
    %v2455 = vsel %vm2168, %v2451, %v2445
    %s2456 = sld [smem:[#allocation4 + $0x7a]]
    %v2457 = vstv %s2456
    %v2458 = vmul.f32 %v2454, %v2457
    %v2459 = vmul.f32 %v2453, %v2457
    %v2460 = vmul.f32 %v2452, %v2457
    %v2461 = vmul.f32 %v2455, %v2457
    %v2462 = vadd.f32 %v2430, %v2458
    %v2463 = vadd.f32 %v2431, %v2459
    %v2464 = vadd.f32 %v2432, %v2460
    %v2465 = vadd.f32 %v2433, %v2461
    %s2466 = sld [smem:[#allocation4 + $0x8c]]
    %v2467 = vstv %s2466
    %v2468 = vmul.f32 %v2454, %v2467
    %v2469 = vmul.f32 %v2453, %v2467
    %v2470 = vmul.f32 %v2452, %v2467
    %v2471 = vmul.f32 %v2455, %v2467
    %v2472 = vadd.f32 %v2440, %v2468
    %v2473 = vadd.f32 %v2441, %v2469
    %v2474 = vadd.f32 %v2442, %v2470
    %v2475 = vadd.f32 %v2443, %v2471
    %2476 = vrot.lane.b32.xlu0 %v2292, 65
    %v2477 = vpop.permute.xlu0 %2476
    %2478 = vrot.lane.b32.xlu0 %v2293, 65
    %v2479 = vpop.permute.xlu0 %2478
    %2480 = vrot.lane.b32.xlu0 %v2294, 65
    %v2481 = vpop.permute.xlu0 %2480
    %2482 = vrot.lane.b32.xlu0 %v2295, 65
    %v2483 = vpop.permute.xlu0 %2482
    %v2484 = vsel %vm2201, %v2481, %v2483
    %v2485 = vsel %vm2201, %v2479, %v2481
    %v2486 = vsel %vm2201, %v2477, %v2479
    %v2487 = vsel %vm2201, %v2483, %v2477
    %s2488 = sld [smem:[#allocation4 + $0x7b]]
    %v2489 = vstv %s2488
    %v2490 = vmul.f32 %v2486, %v2489
    %v2491 = vmul.f32 %v2485, %v2489
    %v2492 = vmul.f32 %v2484, %v2489
    %v2493 = vmul.f32 %v2487, %v2489
    %v2494 = vadd.f32 %v2462, %v2490
    %v2495 = vadd.f32 %v2463, %v2491
    %v2496 = vadd.f32 %v2464, %v2492
    %v2497 = vadd.f32 %v2465, %v2493
    %s2498 = sld [smem:[#allocation4 + $0x8d]]
    %v2499 = vstv %s2498
    %v2500 = vmul.f32 %v2486, %v2499
    %v2501 = vmul.f32 %v2485, %v2499
    %v2502 = vmul.f32 %v2484, %v2499
    %v2503 = vmul.f32 %v2487, %v2499
    %v2504 = vadd.f32 %v2472, %v2500
    %v2505 = vadd.f32 %v2473, %v2501
    %v2506 = vadd.f32 %v2474, %v2502
    %v2507 = vadd.f32 %v2475, %v2503
    %2508 = vrot.lane.b32.xlu0 %v2292, 62
    %v2509 = vpop.permute.xlu0 %2508
    %2510 = vrot.lane.b32.xlu0 %v2293, 62
    %v2511 = vpop.permute.xlu0 %2510
    %2512 = vrot.lane.b32.xlu0 %v2294, 62
    %v2513 = vpop.permute.xlu0 %2512
    %2514 = vrot.lane.b32.xlu0 %v2295, 62
    %v2515 = vpop.permute.xlu0 %2514
    %v2516 = vsel %vm2234, %v2513, %v2515
    %v2517 = vsel %vm2234, %v2511, %v2513
    %v2518 = vsel %vm2234, %v2509, %v2511
    %v2519 = vsel %vm2234, %v2515, %v2509
    %s2520 = sld [smem:[#allocation4 + $0x7c]]
    %v2521 = vstv %s2520
    %v2522 = vmul.f32 %v2518, %v2521
    %v2523 = vmul.f32 %v2517, %v2521
    %v2524 = vmul.f32 %v2516, %v2521
    %v2525 = vmul.f32 %v2519, %v2521
    %v2526 = vadd.f32 %v2494, %v2522
    %v2527 = vadd.f32 %v2495, %v2523
    %v2528 = vadd.f32 %v2496, %v2524
    %v2529 = vadd.f32 %v2497, %v2525
    %s2530 = sld [smem:[#allocation4 + $0x8e]]
    %v2531 = vstv %s2530
    %v2532 = vmul.f32 %v2518, %v2531
    %v2533 = vmul.f32 %v2517, %v2531
    %v2534 = vmul.f32 %v2516, %v2531
    %v2535 = vmul.f32 %v2519, %v2531
    %v2536 = vadd.f32 %v2504, %v2532
    %v2537 = vadd.f32 %v2505, %v2533
    %v2538 = vadd.f32 %v2506, %v2534
    %v2539 = vadd.f32 %v2507, %v2535
    %2540 = vrot.lane.b32.xlu0 %v2292, 59
    %v2541 = vpop.permute.xlu0 %2540
    %2542 = vrot.lane.b32.xlu0 %v2293, 59
    %v2543 = vpop.permute.xlu0 %2542
    %2544 = vrot.lane.b32.xlu0 %v2294, 59
    %v2545 = vpop.permute.xlu0 %2544
    %2546 = vrot.lane.b32.xlu0 %v2295, 59
    %v2547 = vpop.permute.xlu0 %2546
    %v2548 = vsel %vm2267, %v2545, %v2547
    %v2549 = vsel %vm2267, %v2543, %v2545
    %v2550 = vsel %vm2267, %v2541, %v2543
    %v2551 = vsel %vm2267, %v2547, %v2541
    %s2552 = sld [smem:[#allocation4 + $0x7d]]
    %v2553 = vstv %s2552
    %v2554 = vmul.f32 %v2550, %v2553
    %v2555 = vmul.f32 %v2549, %v2553
    %v2556 = vmul.f32 %v2548, %v2553
    %v2557 = vmul.f32 %v2551, %v2553
    %v2558 = vadd.f32 %v2526, %v2554
    %v2559 = vadd.f32 %v2527, %v2555
    %v2560 = vadd.f32 %v2528, %v2556
    %v2561 = vadd.f32 %v2529, %v2557
    %s2562 = sld [smem:[#allocation4 + $0x8f]]
    %v2563 = vstv %s2562
    %v2564 = vmul.f32 %v2550, %v2563
    %v2565 = vmul.f32 %v2549, %v2563
    %v2566 = vmul.f32 %v2548, %v2563
    %v2567 = vmul.f32 %v2551, %v2563
    %v2568 = vadd.f32 %v2536, %v2564
    %v2569 = vadd.f32 %v2537, %v2565
    %v2570 = vadd.f32 %v2538, %v2566
    %v2571 = vadd.f32 %v2539, %v2567
    %v2572 = vmul.f32 %v2558, %v42
    %v2573 = vmul.f32 %v2559, %v43
    %v2574 = vmul.f32 %v2560, %v44
    %v2575 = vmul.f32 %v2561, %v45
    %v2576 = vadd.f32 %v2572, %v2573
    %v2577 = vadd.f32 %v2576, %v2574
    %v2578 = vadd.f32 %v2577, %v2575
    %2579 = vadd.xlane.f32.xlu0 %v2578
    %v2580 = vpop.xlane.xlu0 %2579
    %v2581 = vrot.slane %v2580, 4
    %v2582 = vadd.f32 %v2580, %v2581
    %v2583 = vrot.slane %v2582, 2
    %v2584 = vadd.f32 %v2582, %v2583
    %v2585 = vrot.slane %v2584, 1
    %v2586 = vadd.f32 %v2584, %v2585
    %s2587 = vtos %v2586
    %v2588 = vstv %s2587
    %v2589 = vmul.f32 %v2588, 0.001953125
    %v2590 = vsub.f32 %v2558, %v2589
    %v2591 = vsub.f32 %v2559, %v2589
    %v2592 = vsub.f32 %v2560, %v2589
    %v2593 = vsub.f32 %v2561, %v2589
    %v2594 = vmul.f32 %v2590, %v42
    %v2595 = vmul.f32 %v2591, %v43
    %v2596 = vmul.f32 %v2592, %v44
    %v2597 = vmul.f32 %v2593, %v45
    %v2598 = vmul.f32 %v2594, %v2594
    %v2599 = vmul.f32 %v2595, %v2595
    %v2600 = vmul.f32 %v2596, %v2596
    %v2601 = vmul.f32 %v2597, %v2597
    %v2602 = vadd.f32 %v2598, %v2599
    %v2603 = vadd.f32 %v2602, %v2600
    %v2604 = vadd.f32 %v2603, %v2601
    %2605 = vadd.xlane.f32.xlu0 %v2604
    %v2606 = vpop.xlane.xlu0 %2605
    %v2607 = vrot.slane %v2606, 4
    %v2608 = vadd.f32 %v2606, %v2607
    %v2609 = vrot.slane %v2608, 2
    %v2610 = vadd.f32 %v2608, %v2609
    %v2611 = vrot.slane %v2610, 1
    %v2612 = vadd.f32 %v2610, %v2611
    %s2613 = vtos %v2612
    %v2614 = vstv %s2613
    %v2615 = vmul.f32 %v2614, 0.001953125
    %s2616 = sld [smem:[#allocation6 + $0x8]]
    %v2617 = vadd.f32 %v2615, 1e-05
    %v2618 = vrsqrt.pop %v2617
    %v2619 = vstv %s2616
    %v2620 = vmul.f32 %v2619, %v2618
    %v2621 = vmul.f32 %v2594, %v2620
    %v2622 = vmul.f32 %v2595, %v2620
    %v2623 = vmul.f32 %v2596, %v2620
    %v2624 = vmul.f32 %v2597, %v2620
    %s2625 = sld [smem:[#allocation6 + $0xa]]
    %v2626 = vstv %s2625
    %v2627 = vadd.f32 %v2621, %v2626
    %v2628 = vadd.f32 %v2622, %v2626
    %v2629 = vadd.f32 %v2623, %v2626
    %v2630 = vadd.f32 %v2624, %v2626
    %v2631 = vmax.f32 %v2627, 0.0
    %v2632 = vmax.f32 %v2628, 0.0
    %v2633 = vmax.f32 %v2629, 0.0
    %v2634 = vmax.f32 %v2630, 0.0
    %v2635 = vmul.f32 %v2631, %v42
    %v2636 = vmul.f32 %v2632, %v43
    %v2637 = vmul.f32 %v2633, %v44
    %v2638 = vmul.f32 %v2634, %v45
    %2639 = vst [vmem:[%s4] sm:$0xff] %v2635
    %2640 = vst [vmem:[%s4 + $0x8] sm:$0xff] %v2636
    %2641 = vst [vmem:[%s4 + $0x10] sm:$0xff] %v2637
    %2642 = vst [vmem:[%s4 + $0x18] sm:$0xff] %v2638
    %v2643 = vmul.f32 %v2568, %v42
    %v2644 = vmul.f32 %v2569, %v43
    %v2645 = vmul.f32 %v2570, %v44
    %v2646 = vmul.f32 %v2571, %v45
    %v2647 = vadd.f32 %v2643, %v2644
    %v2648 = vadd.f32 %v2647, %v2645
    %v2649 = vadd.f32 %v2648, %v2646
    %2650 = vadd.xlane.f32.xlu0 %v2649
    %v2651 = vpop.xlane.xlu0 %2650
    %v2652 = vrot.slane %v2651, 4
    %v2653 = vadd.f32 %v2651, %v2652
    %v2654 = vrot.slane %v2653, 2
    %v2655 = vadd.f32 %v2653, %v2654
    %v2656 = vrot.slane %v2655, 1
    %v2657 = vadd.f32 %v2655, %v2656
    %s2658 = vtos %v2657
    %v2659 = vstv %s2658
    %v2660 = vmul.f32 %v2659, 0.001953125
    %v2661 = vsub.f32 %v2568, %v2660
    %v2662 = vsub.f32 %v2569, %v2660
    %v2663 = vsub.f32 %v2570, %v2660
    %v2664 = vsub.f32 %v2571, %v2660
    %v2665 = vmul.f32 %v2661, %v42
    %v2666 = vmul.f32 %v2662, %v43
    %v2667 = vmul.f32 %v2663, %v44
    %v2668 = vmul.f32 %v2664, %v45
    %v2669 = vmul.f32 %v2665, %v2665
    %v2670 = vmul.f32 %v2666, %v2666
    %v2671 = vmul.f32 %v2667, %v2667
    %v2672 = vmul.f32 %v2668, %v2668
    %v2673 = vadd.f32 %v2669, %v2670
    %v2674 = vadd.f32 %v2673, %v2671
    %v2675 = vadd.f32 %v2674, %v2672
    %2676 = vadd.xlane.f32.xlu0 %v2675
    %v2677 = vpop.xlane.xlu0 %2676
    %v2678 = vrot.slane %v2677, 4
    %v2679 = vadd.f32 %v2677, %v2678
    %v2680 = vrot.slane %v2679, 2
    %v2681 = vadd.f32 %v2679, %v2680
    %v2682 = vrot.slane %v2681, 1
    %v2683 = vadd.f32 %v2681, %v2682
    %s2684 = vtos %v2683
    %v2685 = vstv %s2684
    %v2686 = vmul.f32 %v2685, 0.001953125
    %s2687 = sld [smem:[#allocation6 + $0x9]]
    %v2688 = vadd.f32 %v2686, 1e-05
    %v2689 = vrsqrt.pop %v2688
    %v2690 = vstv %s2687
    %v2691 = vmul.f32 %v2690, %v2689
    %v2692 = vmul.f32 %v2665, %v2691
    %v2693 = vmul.f32 %v2666, %v2691
    %v2694 = vmul.f32 %v2667, %v2691
    %v2695 = vmul.f32 %v2668, %v2691
    %s2696 = sld [smem:[#allocation6 + $0xb]]
    %v2697 = vstv %s2696
    %v2698 = vadd.f32 %v2692, %v2697
    %v2699 = vadd.f32 %v2693, %v2697
    %v2700 = vadd.f32 %v2694, %v2697
    %v2701 = vadd.f32 %v2695, %v2697
    %v2702 = vmax.f32 %v2698, 0.0
    %v2703 = vmax.f32 %v2699, 0.0
    %v2704 = vmax.f32 %v2700, 0.0
    %v2705 = vmax.f32 %v2701, 0.0
    %v2706 = vmul.f32 %v2702, %v42
    %v2707 = vmul.f32 %v2703, %v43
    %v2708 = vmul.f32 %v2704, %v44
    %v2709 = vmul.f32 %v2705, %v45
    %2710 = vst [vmem:[%s4 + $0x20] sm:$0xff] %v2706
    %2711 = vst [vmem:[%s4 + $0x28] sm:$0xff] %v2707
    %2712 = vst [vmem:[%s4 + $0x30] sm:$0xff] %v2708
    %2713 = vst [vmem:[%s4 + $0x38] sm:$0xff] %v2709
    // Predicated region
    $region26: #{widescope_conv2d_block.1} parent=1 // pred_check
      _
    $region27: #{widescope_conv2d_block.1} parent=1 // pred_check_branch
      %2715 = sbr.rel (0) target = $region29
    $region28: #{widescope_conv2d_block.1} parent=1 // pred_region
      _
    $region29: #{widescope_conv2d_block.1} parent=1 // pred_fallthru
      _
    // Predicated region
    $region30: #{widescope_conv2d_block.1} parent=1 // pred_check
      _
    $region31: #{widescope_conv2d_block.1} parent=1 // pred_check_branch
      %2717 = sbr.rel (0) target = $region33
    $region32: #{widescope_conv2d_block.1} parent=1 // pred_region
      _
    $region33: #{widescope_conv2d_block.1} parent=1 // pred_fallthru
      _
    %2718 = vsyncpa [#allocation5], 1
    %2719 = vsyncpa [#allocation7], 1

</llo_original>
